<compile_context>
chip_gen: v5e
topology: v5e:2x2
jax: 0.10.0
libtpu: 0.0.40
codegen_flags: <defaults>
</compile_context>

<pallas_src>
import functools

import jax
import jax.numpy as jnp
from jax import lax
from jax.experimental import pallas as pl
from jax.experimental.pallas import tpu as pltpu

EPS = 1e-5  # nn.LayerNorm default eps


def _layer_norm(x, gamma, beta):
    # One-pass variance: E[x^2] - mean^2 -> the two cross-lane reductions are
    # independent and overlap in the XLU (vs. the dependent (x-mean)^2 reduce).
    mean = jnp.mean(x, axis=-1, keepdims=True)
    msq = jnp.mean(x * x, axis=-1, keepdims=True)
    var = jnp.maximum(msq - mean * mean, 0.0)
    return (x - mean) * lax.rsqrt(var + EPS) * gamma + beta


def fused_lstm_kernel(
    x_ref,                  # (T*Bb, Din)   batch-block slab of the input
    wih0_ref,               # (Din, 4H)     layer-0 W_ih^T
    wih_ref,                # (1, H, 4H)    layer-l (l>=1) W_ih^T  (clamped l-1 index)
    bih_ref,                # (1, 1, 4H)
    gih_g_ref, gih_b_ref,   # (1, 1, 4H)    ln_ih gamma / beta
    whh_ref,                # (1, H, 4H)    W_hh^T
    bhh_ref,                # (1, 1, 4H)
    ghh_g_ref, ghh_b_ref,   # (1, 1, 4H)    ln_hh gamma / beta
    gho_g_ref, gho_b_ref,   # (1, 1, H)     ln_ho gamma / beta
    y_ref,                  # (T*Bb, H)     resident across layers (also next input)
    hN_ref, cN_ref,         # (Bb, H)       per-(layer, batch-block) final states
    gih_sc,                 # (T*Bb, 4H)    VMEM scratch: ln_ih(x W_ih + b), all t
    *, seq_len, batch, hidden_size, unroll,
):
    l = pl.program_id(1)                    # layer index (axis 0 = batch block)
    T, B, H = seq_len, batch, hidden_size
    G = 4 * H

    bih = bih_ref[0]
    gih_g, gih_b = gih_g_ref[0], gih_b_ref[0]

    # ---- hoisted input projection + ln_ih for this layer (all timesteps) ----
    @pl.when(l == 0)
    def _():
        g = jnp.dot(x_ref[...].astype(wih0_ref.dtype), wih0_ref[...],
                    preferred_element_type=jnp.float32) + bih
        gih_sc[...] = _layer_norm(g, gih_g, gih_b)

    @pl.when(l > 0)
    def _():
        # Previous layer's full output sequence is still resident in y_ref.
        g = jnp.dot(y_ref[...].astype(wih_ref.dtype), wih_ref[0],
                    preferred_element_type=jnp.float32) + bih
        gih_sc[...] = _layer_norm(g, gih_g, gih_b)

    # ---- loop-invariant recurrent parameters (hoisted out of the loop) ----
    whh = whh_ref[0]
    bhh = bhh_ref[0]
    ghh_g, ghh_b = ghh_g_ref[0], ghh_b_ref[0]
    gho_g, gho_b = gho_g_ref[0], gho_b_ref[0]

    # Hoisted lane mask (broadcast is not CSE'd by JAX -> build it once).
    lane = lax.broadcasted_iota(jnp.int32, (B, G), 1)
    c_lane = (lane >= 2 * H) & (lane < 3 * H)

    # ---- sequential recurrence over time, fully inside the kernel ----
    def step(t, carry):
        h, c = carry
        # B is padded to a multiple of 8 -> hint Mosaic so the per-step row slab
        # load/store are unmasked aligned vld/vst.
        row = pl.ds(pl.multiple_of(t * B, 8), B)

        g_hh = jnp.dot(h.astype(whh.dtype), whh,
                       preferred_element_type=jnp.float32) + bhh
        gates = gih_sc[row, :] + _layer_norm(g_hh, ghh_g, ghh_b)

        # Full-vreg nonlinearities, blended with a lane mask (no sub-vreg EUP ops).
        act = jnp.where(c_lane, jnp.tanh(gates), jax.nn.sigmoid(gates))
        i_g = act[:, 0 * H:1 * H]
        f_g = act[:, 1 * H:2 * H]
        c_g = act[:, 2 * H:3 * H]
        o_g = act[:, 3 * H:4 * H]

        cy = f_g * c + i_g * c_g
        hy = o_g * _layer_norm(jnp.tanh(cy), gho_g, gho_b)

        y_ref[row, :] = hy
        return hy, cy

    # hidden=None -> zero initial state for every layer (no h0/c0 inputs).
    h0 = jnp.zeros((B, H), jnp.float32)
    c0 = jnp.zeros((B, H), jnp.float32)
    hT, cT = lax.fori_loop(0, T, step, (h0, c0), unroll=unroll)

    hN_ref[...] = hT
    cN_ref[...] = cT


def layer_norm_lstm_forward(x, layer_params, hidden_size, num_layers, *,
                            weights_dtype=jnp.float32, batch_block=None):
    """Mirrors LayerNormLSTM.forward (eval, unidirectional, hidden=None, seq_lens=None).

    weights_dtype=jnp.bfloat16 halves weight VMEM / DMA and triples MXU throughput
    on v6e/v7x but will exceed a 1e-5 reference tolerance; default keeps f32.
    """
    T, B, Din = x.shape
    H = hidden_size
    L = num_layers
    G = 4 * H

    # Pad batch to the 8-sublane quantum so matmul rows / row slabs are aligned.
    Bp = max(8, ((B + 7) // 8) * 8)
    if Bp != B:
        x = jnp.pad(x, ((0, 0), (0, Bp - B), (0, 0)))

    # v7x megacore: split the independent batch rows into blocks handled by a
    # leading "parallel" grid axis (each block keeps an 8-row multiple).
    if batch_block is None:
        Bb = Bp // 2 if (Bp >= 16 and Bp % 16 == 0) else Bp
    else:
        Bb = batch_block
    nbb = Bp // Bb
    Rb = T * Bb

    # (T, Bp, Din) -> (nbb, T*Bb, Din): each batch block is one contiguous slab.
    x_blk = x.reshape(T, nbb, Bb, Din).transpose(1, 0, 2, 3).reshape(nbb, Rb, Din)

    # Stack per-layer parameters along a leading layer axis.
    def stack(idx, dtype=jnp.float32):
        return jnp.stack([layer_params[l][idx] for l in range(L)]).astype(dtype)

    wih0 = layer_params[0][0].astype(weights_dtype)                    # (Din, 4H)
    if L > 1:                                                          # (L-1, H, 4H)
        wih_rest = jnp.stack([layer_params[l][0] for l in range(1, L)]
                             ).astype(weights_dtype)
    else:
        wih_rest = jnp.zeros((1, H, G), weights_dtype)                 # unused dummy
    whh = stack(1, weights_dtype)                                      # (L, H, 4H)
    bih, bhh = stack(2), stack(3)                                      # (L, 1, 4H)
    gih_g, gih_b = stack(4), stack(5)                                  # (L, 1, 4H)
    ghh_g, ghh_b = stack(6), stack(7)                                  # (L, 1, 4H)
    gho_g, gho_b = stack(8), stack(9)                                  # (L, 1, H)

    # Partial unroll of the serial time loop (full unroll only for short T).
    unroll = max(1, min(T, 8))

    # ---- explicit VMEM budget for the resident working set ----
    wb = jnp.dtype(weights_dtype).itemsize
    est_vmem = (
        2 * Rb * Din * 4            # x batch-block (double-buffered when nbb > 1)
        + 2 * Rb * H * 4            # resident y block (+ writeback buffer)
        + Rb * G * 4                # gih scratch
        + Din * G * wb              # layer-0 W_ih (constant block)
        + 2 * 2 * H * G * wb        # W_ih(l>=1) + W_hh, double-buffered
        + 2 * 6 * 8 * G * 4         # per-layer 4H-wide vectors (sublane-padded, x2 buf)
        + 2 * 2 * 8 * H * 4         # ln_ho gamma/beta
        + 2 * 2 * Bb * H * 4        # hN / cN output blocks
    )
    vmem_limit = int(min(96 * 1024 * 1024, max(32 * 1024 * 1024, 2 * est_vmem)))

    def per_layer(shape):
        return pl.BlockSpec(shape, lambda bb, l: (l, 0, 0))

    kernel = functools.partial(fused_lstm_kernel, seq_len=T, batch=Bb,
                               hidden_size=H, unroll=unroll)

    y_blk, hN, cN = pl.pallas_call(
        kernel,
        out_shape=(
            jax.ShapeDtypeStruct((nbb, Rb, H), jnp.float32),
            jax.ShapeDtypeStruct((L, nbb, Bb, H), jnp.float32),
            jax.ShapeDtypeStruct((L, nbb, Bb, H), jnp.float32),
        ),
        grid_spec=pltpu.PrefetchScalarGridSpec(
            num_scalar_prefetch=0,
            grid=(nbb, L),
            in_specs=[
                pl.BlockSpec((None, Rb, Din), lambda bb, l: (bb, 0, 0)),   # x slab
                pl.BlockSpec((Din, G), lambda bb, l: (0, 0)),              # W_ih^T layer 0
                pl.BlockSpec((1, H, G),                                    # W_ih^T l>=1
                             lambda bb, l: (jnp.maximum(l - 1, 0), 0, 0)),
                per_layer((1, 1, G)),       # b_ih
                per_layer((1, 1, G)),       # ln_ih gamma
                per_layer((1, 1, G)),       # ln_ih beta
                per_layer((1, H, G)),       # W_hh^T
                per_layer((1, 1, G)),       # b_hh
                per_layer((1, 1, G)),       # ln_hh gamma
                per_layer((1, 1, G)),       # ln_hh beta
                per_layer((1, 1, H)),       # ln_ho gamma
                per_layer((1, 1, H)),       # ln_ho beta
            ],
            out_specs=[
                pl.BlockSpec((None, Rb, H), lambda bb, l: (bb, 0, 0)),      # y (resident)
                pl.BlockSpec((None, None, Bb, H), lambda bb, l: (l, bb, 0, 0)),  # h_N
                pl.BlockSpec((None, None, Bb, H), lambda bb, l: (l, bb, 0, 0)),  # c_N
            ],
            scratch_shapes=[pltpu.VMEM((Rb, G), jnp.float32)],
        ),
        compiler_params=pltpu.CompilerParams(
            dimension_semantics=("parallel", "arbitrary"),
            vmem_limit_bytes=vmem_limit),
    )(x_blk, wih0, wih_rest, bih, gih_g, gih_b, whh, bhh, ghh_g, ghh_b,
      gho_g, gho_b)

    y = (y_blk.reshape(nbb, T, Bb, H)
              .transpose(1, 0, 2, 3)
              .reshape(T, Bp, H)[:, :B, :])
    hN = hN.reshape(L, Bp, H)[:, :B, :]
    cN = cN.reshape(L, Bp, H)[:, :B, :]
    return y, (hN, cN)


def reference_forward(x, layer_params, hidden_size, num_layers):
    """Pure-JAX reference replicating the PyTorch semantics."""
    T, B, _ = x.shape
    H = hidden_size

    def ln(v, g, b):
        m = v.mean(-1, keepdims=True)
        var = ((v - m) ** 2).mean(-1, keepdims=True)
        return (v - m) / jnp.sqrt(var + EPS) * g + b

    hy_l, cy_l = [], []
    cur = x
    for layer in range(num_layers):
        (wih_t, whh_t, bih, bhh, g_ih, be_ih, g_hh, be_hh, g_ho, be_ho) = layer_params[layer]
        h = jnp.zeros((B, H), jnp.float32)
        c = jnp.zeros((B, H), jnp.float32)
        ys = []
        for t in range(T):
            xt = cur[t]
            gates = ln(xt @ wih_t + bih, g_ih, be_ih) + ln(h @ whh_t + bhh, g_hh, be_hh)
            i_ = jax.nn.sigmoid(gates[:, 0:H])
            f_ = jax.nn.sigmoid(gates[:, H:2 * H])
            g_ = jnp.tanh(gates[:, 2 * H:3 * H])
            o_ = jax.nn.sigmoid(gates[:, 3 * H:4 * H])
            c = f_ * c + i_ * g_
            h = o_ * ln(jnp.tanh(c), g_ho, be_ho)
            ys.append(h)
        cur = jnp.stack(ys)
        hy_l.append(h)
        cy_l.append(c)
    return cur, (jnp.stack(hy_l), jnp.stack(cy_l))


def init_params(key, input_size, hidden_size, num_layers):
    """Deterministic init.  LSTMCell weights ~ U(-1/sqrt(H), 1/sqrt(H)); LayerNorm
    gamma/beta get small random perturbations around (1, 0) to exercise the path."""
    H = hidden_size
    bound = 1.0 / jnp.sqrt(H)
    params = []
    for layer in range(num_layers):
        din = input_size if layer == 0 else hidden_size
        key, *ks = jax.random.split(key, 11)
        wih = jax.random.uniform(ks[0], (4 * H, din), jnp.float32, -bound, bound)
        whh = jax.random.uniform(ks[1], (4 * H, H), jnp.float32, -bound, bound)
        bih = jax.random.uniform(ks[2], (1, 4 * H), jnp.float32, -bound, bound)
        bhh = jax.random.uniform(ks[3], (1, 4 * H), jnp.float32, -bound, bound)
        g_ih = 1.0 + 0.1 * jax.random.normal(ks[4], (1, 4 * H), jnp.float32)
        be_ih = 0.1 * jax.random.normal(ks[5], (1, 4 * H), jnp.float32)
        g_hh = 1.0 + 0.1 * jax.random.normal(ks[6], (1, 4 * H), jnp.float32)
        be_hh = 0.1 * jax.random.normal(ks[7], (1, 4 * H), jnp.float32)
        g_ho = 1.0 + 0.1 * jax.random.normal(ks[8], (1, H), jnp.float32)
        be_ho = 0.1 * jax.random.normal(ks[9], (1, H), jnp.float32)
        # store matmul weights pre-transposed: (in, 4H)
        params.append((wih.T, whh.T, bih, bhh, g_ih, be_ih, g_hh, be_hh, g_ho, be_ho))
    return params


if __name__ == "__main__":
    SEQ, BATCH, INPUT, HIDDEN, LAYERS = 8, 2, 16, 32, 2

    key = jax.random.PRNGKey(0)
    kx, kp = jax.random.split(key)
    x = jax.random.normal(kx, (SEQ, BATCH, INPUT), jnp.float32)
    params = init_params(kp, INPUT, HIDDEN, LAYERS)

    y, (hy, cy) = layer_norm_lstm_forward(x, params, HIDDEN, LAYERS)
    jax.block_until_ready((y, hy, cy))

    y_ref, (hy_ref, cy_ref) = reference_forward(x, params, HIDDEN, LAYERS)
    assert y.shape == (SEQ, BATCH, HIDDEN)
    assert hy.shape == (LAYERS, BATCH, HIDDEN)
    assert cy.shape == (LAYERS, BATCH, HIDDEN)
    assert jnp.allclose(y, y_ref, atol=1e-5, rtol=1e-5)
    assert jnp.allclose(hy, hy_ref, atol=1e-5, rtol=1e-5)
    assert jnp.allclose(cy, cy_ref, atol=1e-5, rtol=1e-5)

    print("KERNEL_OK")
</pallas_src>

<mosaic_0001>
module attributes {stable_mosaic.version = 11 : i64} {
  func.func @fused_lstm_kernel(%arg0: i32, %arg1: i32, %arg2: memref<1x64x16xf32, #tpu.memory_space<vmem>>, %arg3: memref<16x128xf32, #tpu.memory_space<vmem>>, %arg4: memref<1x32x128xf32, #tpu.memory_space<vmem>>, %arg5: memref<1x1x128xf32, #tpu.memory_space<vmem>>, %arg6: memref<1x1x128xf32, #tpu.memory_space<vmem>>, %arg7: memref<1x1x128xf32, #tpu.memory_space<vmem>>, %arg8: memref<1x32x128xf32, #tpu.memory_space<vmem>>, %arg9: memref<1x1x128xf32, #tpu.memory_space<vmem>>, %arg10: memref<1x1x128xf32, #tpu.memory_space<vmem>>, %arg11: memref<1x1x128xf32, #tpu.memory_space<vmem>>, %arg12: memref<1x1x32xf32, #tpu.memory_space<vmem>>, %arg13: memref<1x1x32xf32, #tpu.memory_space<vmem>>, %arg14: memref<1x64x32xf32, #tpu.memory_space<vmem>>, %arg15: memref<1x1x8x32xf32, #tpu.memory_space<vmem>>, %arg16: memref<1x1x8x32xf32, #tpu.memory_space<vmem>>, %arg17: memref<64x128xf32, #tpu.memory_space<vmem>>) attributes {dimension_semantics = [#tpu.dimension_semantics<parallel>, #tpu.dimension_semantics<arbitrary>], iteration_bounds = array<i64: 1, 2>, scalar_prefetch = 0 : i64, scratch_operands = 1 : i64, tpu.core_type = #tpu.core_type<tc>, window_params = [{transform_indices = @transform_0, window_bounds = array<i64: 1, 64, 16>}, {pipeline_mode = #tpu.pipeline_mode<synchronous>, transform_indices = @transform_1, window_bounds = array<i64: 16, 128>}, {transform_indices = @transform_2, window_bounds = array<i64: 1, 32, 128>}, {transform_indices = @transform_3, window_bounds = array<i64: 1, 1, 128>}, {transform_indices = @transform_4, window_bounds = array<i64: 1, 1, 128>}, {transform_indices = @transform_5, window_bounds = array<i64: 1, 1, 128>}, {transform_indices = @transform_6, window_bounds = array<i64: 1, 32, 128>}, {transform_indices = @transform_7, window_bounds = array<i64: 1, 1, 128>}, {transform_indices = @transform_8, window_bounds = array<i64: 1, 1, 128>}, {transform_indices = @transform_9, window_bounds = array<i64: 1, 1, 128>}, {transform_indices = @transform_10, window_bounds = array<i64: 1, 1, 32>}, {transform_indices = @transform_11, window_bounds = array<i64: 1, 1, 32>}, {transform_indices = @transform_12, window_bounds = array<i64: 1, 64, 32>}, {transform_indices = @transform_13, window_bounds = array<i64: 1, 1, 8, 32>}, {transform_indices = @transform_14, window_bounds = array<i64: 1, 1, 8, 32>}]} {
    %c0 = arith.constant 0 : index
    %c0_0 = arith.constant 0 : index
    %c0_1 = arith.constant 0 : index
    %0 = vector.load %arg5[%c0, %c0_0, %c0_1] : memref<1x1x128xf32, #tpu.memory_space<vmem>>, vector<1x1x128xf32>
    %1 = vector.shape_cast %0 : vector<1x1x128xf32> to vector<1x128xf32>
    %c0_2 = arith.constant 0 : index
    %c0_3 = arith.constant 0 : index
    %c0_4 = arith.constant 0 : index
    %2 = vector.load %arg6[%c0_2, %c0_3, %c0_4] : memref<1x1x128xf32, #tpu.memory_space<vmem>>, vector<1x1x128xf32>
    %3 = vector.shape_cast %2 : vector<1x1x128xf32> to vector<1x128xf32>
    %c0_5 = arith.constant 0 : index
    %c0_6 = arith.constant 0 : index
    %c0_7 = arith.constant 0 : index
    %4 = vector.load %arg7[%c0_5, %c0_6, %c0_7] : memref<1x1x128xf32, #tpu.memory_space<vmem>>, vector<1x1x128xf32>
    %5 = vector.shape_cast %4 : vector<1x1x128xf32> to vector<1x128xf32>
    %c0_i32 = arith.constant 0 : i32
    %6 = arith.cmpi eq, %arg1, %c0_i32 : i32
    %7 = arith.extui %6 : i1 to i32
    %c0_i32_8 = arith.constant 0 : i32
    %8 = arith.cmpi ne, %7, %c0_i32_8 : i32
    scf.if %8 {
      %c0_183 = arith.constant 0 : index
      %c0_184 = arith.constant 0 : index
      %c0_185 = arith.constant 0 : index
      %646 = vector.load %arg2[%c0_183, %c0_184, %c0_185] : memref<1x64x16xf32, #tpu.memory_space<vmem>>, vector<1x64x16xf32>
      %647 = vector.shape_cast %646 : vector<1x64x16xf32> to vector<64x16xf32>
      %c0_186 = arith.constant 0 : index
      %c0_187 = arith.constant 0 : index
      %648 = vector.load %arg3[%c0_186, %c0_187] : memref<16x128xf32, #tpu.memory_space<vmem>>, vector<16x128xf32>
      %cst_188 = arith.constant dense<0.000000e+00> : vector<64x128xf32>
      %649 = tpu.matmul %647, %648, %cst_188 {dimension_numbers = #tpu.dot_dimension_numbers<[1], [0], [0], [1], [0, 0, 1, 1], [], []>} : vector<64x16xf32>, vector<16x128xf32>, vector<64x128xf32> -> vector<64x128xf32>
      %650 = vector.broadcast %1 : vector<1x128xf32> to vector<64x128xf32>
      %651 = arith.addf %649, %650 : vector<64x128xf32>
      %cst_189 = arith.constant dense<0.000000e+00> : vector<64xf32>
      %652 = vector.multi_reduction <add>, %651, %cst_189 [1] : vector<64x128xf32> to vector<64xf32>
      %653 = vector.shape_cast %652 : vector<64xf32> to vector<64x1xf32>
      %cst_190 = arith.constant 1.280000e+02 : f32
      %654 = vector.broadcast %cst_190 : f32 to vector<64x1xf32>
      %655 = arith.divf %653, %654 : vector<64x1xf32>
      %656 = arith.mulf %651, %651 : vector<64x128xf32>
      %cst_191 = arith.constant dense<0.000000e+00> : vector<64xf32>
      %657 = vector.multi_reduction <add>, %656, %cst_191 [1] : vector<64x128xf32> to vector<64xf32>
      %658 = vector.shape_cast %657 : vector<64xf32> to vector<64x1xf32>
      %cst_192 = arith.constant 1.280000e+02 : f32
      %659 = vector.broadcast %cst_192 : f32 to vector<64x1xf32>
      %660 = arith.divf %658, %659 : vector<64x1xf32>
      %661 = arith.mulf %655, %655 : vector<64x1xf32>
      %662 = arith.subf %660, %661 : vector<64x1xf32>
      %cst_193 = arith.constant 0.000000e+00 : f32
      %663 = vector.broadcast %cst_193 : f32 to vector<64x1xf32>
      %664 = arith.maximumf %662, %663 : vector<64x1xf32>
      %665 = vector.broadcast %655 : vector<64x1xf32> to vector<64x128xf32>
      %666 = arith.subf %651, %665 : vector<64x128xf32>
      %cst_194 = arith.constant 9.99999974E-6 : f32
      %667 = vector.broadcast %cst_194 : f32 to vector<64x1xf32>
      %668 = arith.addf %664, %667 : vector<64x1xf32>
      %669 = math.rsqrt %668 : vector<64x1xf32>
      %670 = vector.broadcast %669 : vector<64x1xf32> to vector<64x128xf32>
      %671 = arith.mulf %666, %670 : vector<64x128xf32>
      %672 = vector.broadcast %3 : vector<1x128xf32> to vector<64x128xf32>
      %673 = arith.mulf %671, %672 : vector<64x128xf32>
      %674 = vector.broadcast %5 : vector<1x128xf32> to vector<64x128xf32>
      %675 = arith.addf %673, %674 : vector<64x128xf32>
      %c0_195 = arith.constant 0 : index
      %c0_196 = arith.constant 0 : index
      %676 = vector.load %arg17[%c0_195, %c0_196] : memref<64x128xf32, #tpu.memory_space<vmem>>, vector<64x128xf32>
      tpu.vector_store %arg17[%c0_195, %c0_196], %675 {strides = array<i32>} : memref<64x128xf32, #tpu.memory_space<vmem>>, vector<64x128xf32>,
    } else {
    }
    %c0_i32_9 = arith.constant 0 : i32
    %9 = arith.cmpi sgt, %arg1, %c0_i32_9 : i32
    %10 = arith.extui %9 : i1 to i32
    %c0_i32_10 = arith.constant 0 : i32
    %11 = arith.cmpi ne, %10, %c0_i32_10 : i32
    scf.if %11 {
      %c0_183 = arith.constant 0 : index
      %c0_184 = arith.constant 0 : index
      %c0_185 = arith.constant 0 : index
      %646 = vector.load %arg14[%c0_183, %c0_184, %c0_185] : memref<1x64x32xf32, #tpu.memory_space<vmem>>, vector<1x64x32xf32>
      %647 = vector.shape_cast %646 : vector<1x64x32xf32> to vector<64x32xf32>
      %c0_186 = arith.constant 0 : index
      %c0_187 = arith.constant 0 : index
      %c0_188 = arith.constant 0 : index
      %648 = vector.load %arg4[%c0_186, %c0_187, %c0_188] : memref<1x32x128xf32, #tpu.memory_space<vmem>>, vector<1x32x128xf32>
      %649 = vector.shape_cast %648 : vector<1x32x128xf32> to vector<32x128xf32>
      %cst_189 = arith.constant dense<0.000000e+00> : vector<64x128xf32>
      %650 = tpu.matmul %647, %649, %cst_189 {dimension_numbers = #tpu.dot_dimension_numbers<[1], [0], [0], [1], [0, 0, 1, 1], [], []>} : vector<64x32xf32>, vector<32x128xf32>, vector<64x128xf32> -> vector<64x128xf32>
      %651 = vector.broadcast %1 : vector<1x128xf32> to vector<64x128xf32>
      %652 = arith.addf %650, %651 : vector<64x128xf32>
      %cst_190 = arith.constant dense<0.000000e+00> : vector<64xf32>
      %653 = vector.multi_reduction <add>, %652, %cst_190 [1] : vector<64x128xf32> to vector<64xf32>
      %654 = vector.shape_cast %653 : vector<64xf32> to vector<64x1xf32>
      %cst_191 = arith.constant 1.280000e+02 : f32
      %655 = vector.broadcast %cst_191 : f32 to vector<64x1xf32>
      %656 = arith.divf %654, %655 : vector<64x1xf32>
      %657 = arith.mulf %652, %652 : vector<64x128xf32>
      %cst_192 = arith.constant dense<0.000000e+00> : vector<64xf32>
      %658 = vector.multi_reduction <add>, %657, %cst_192 [1] : vector<64x128xf32> to vector<64xf32>
      %659 = vector.shape_cast %658 : vector<64xf32> to vector<64x1xf32>
      %cst_193 = arith.constant 1.280000e+02 : f32
      %660 = vector.broadcast %cst_193 : f32 to vector<64x1xf32>
      %661 = arith.divf %659, %660 : vector<64x1xf32>
      %662 = arith.mulf %656, %656 : vector<64x1xf32>
      %663 = arith.subf %661, %662 : vector<64x1xf32>
      %cst_194 = arith.constant 0.000000e+00 : f32
      %664 = vector.broadcast %cst_194 : f32 to vector<64x1xf32>
      %665 = arith.maximumf %663, %664 : vector<64x1xf32>
      %666 = vector.broadcast %656 : vector<64x1xf32> to vector<64x128xf32>
      %667 = arith.subf %652, %666 : vector<64x128xf32>
      %cst_195 = arith.constant 9.99999974E-6 : f32
      %668 = vector.broadcast %cst_195 : f32 to vector<64x1xf32>
      %669 = arith.addf %665, %668 : vector<64x1xf32>
      %670 = math.rsqrt %669 : vector<64x1xf32>
      %671 = vector.broadcast %670 : vector<64x1xf32> to vector<64x128xf32>
      %672 = arith.mulf %667, %671 : vector<64x128xf32>
      %673 = vector.broadcast %3 : vector<1x128xf32> to vector<64x128xf32>
      %674 = arith.mulf %672, %673 : vector<64x128xf32>
      %675 = vector.broadcast %5 : vector<1x128xf32> to vector<64x128xf32>
      %676 = arith.addf %674, %675 : vector<64x128xf32>
      %c0_196 = arith.constant 0 : index
      %c0_197 = arith.constant 0 : index
      %677 = vector.load %arg17[%c0_196, %c0_197] : memref<64x128xf32, #tpu.memory_space<vmem>>, vector<64x128xf32>
      tpu.vector_store %arg17[%c0_196, %c0_197], %676 {strides = array<i32>} : memref<64x128xf32, #tpu.memory_space<vmem>>, vector<64x128xf32>,
    } else {
    }
    %c0_11 = arith.constant 0 : index
    %c0_12 = arith.constant 0 : index
    %c0_13 = arith.constant 0 : index
    %12 = vector.load %arg8[%c0_11, %c0_12, %c0_13] : memref<1x32x128xf32, #tpu.memory_space<vmem>>, vector<1x32x128xf32>
    %13 = vector.shape_cast %12 : vector<1x32x128xf32> to vector<32x128xf32>
    %c0_14 = arith.constant 0 : index
    %c0_15 = arith.constant 0 : index
    %c0_16 = arith.constant 0 : index
    %14 = vector.load %arg9[%c0_14, %c0_15, %c0_16] : memref<1x1x128xf32, #tpu.memory_space<vmem>>, vector<1x1x128xf32>
    %15 = vector.shape_cast %14 : vector<1x1x128xf32> to vector<1x128xf32>
    %c0_17 = arith.constant 0 : index
    %c0_18 = arith.constant 0 : index
    %c0_19 = arith.constant 0 : index
    %16 = vector.load %arg10[%c0_17, %c0_18, %c0_19] : memref<1x1x128xf32, #tpu.memory_space<vmem>>, vector<1x1x128xf32>
    %17 = vector.shape_cast %16 : vector<1x1x128xf32> to vector<1x128xf32>
    %c0_20 = arith.constant 0 : index
    %c0_21 = arith.constant 0 : index
    %c0_22 = arith.constant 0 : index
    %18 = vector.load %arg11[%c0_20, %c0_21, %c0_22] : memref<1x1x128xf32, #tpu.memory_space<vmem>>, vector<1x1x128xf32>
    %19 = vector.shape_cast %18 : vector<1x1x128xf32> to vector<1x128xf32>
    %c0_23 = arith.constant 0 : index
    %c0_24 = arith.constant 0 : index
    %c0_25 = arith.constant 0 : index
    %20 = vector.load %arg12[%c0_23, %c0_24, %c0_25] : memref<1x1x32xf32, #tpu.memory_space<vmem>>, vector<1x1x32xf32>
    %21 = vector.shape_cast %20 : vector<1x1x32xf32> to vector<1x32xf32>
    %c0_26 = arith.constant 0 : index
    %c0_27 = arith.constant 0 : index
    %c0_28 = arith.constant 0 : index
    %22 = vector.load %arg13[%c0_26, %c0_27, %c0_28] : memref<1x1x32xf32, #tpu.memory_space<vmem>>, vector<1x1x32xf32>
    %23 = vector.shape_cast %22 : vector<1x1x32xf32> to vector<1x32xf32>
    %24 = tpu.iota {dimensions = array<i32: 1>} : vector<8x128xi32>
    %c64_i32 = arith.constant 64 : i32
    %25 = vector.broadcast %c64_i32 : i32 to vector<8x128xi32>
    %26 = arith.cmpi sge, %24, %25 : vector<8x128xi32>
    %c96_i32 = arith.constant 96 : i32
    %27 = vector.broadcast %c96_i32 : i32 to vector<8x128xi32>
    %28 = arith.cmpi slt, %24, %27 : vector<8x128xi32>
    %29 = arith.andi %26, %28 : vector<8x128xi1>
    %cst = arith.constant 0.000000e+00 : f32
    %30 = vector.broadcast %cst : f32 to vector<8x32xf32>
    %cst_29 = arith.constant 0.000000e+00 : f32
    %31 = vector.broadcast %cst_29 : f32 to vector<8x32xf32>
    %c0_i32_30 = arith.constant 0 : i32
    %c8_i32 = arith.constant 8 : i32
    %32 = arith.muli %c0_i32_30, %c8_i32 : i32
    %33 = tpu.assume_multiple %32, 8 : i32
    %cst_31 = arith.constant dense<0.000000e+00> : vector<8x128xf32>
    %34 = tpu.matmul %30, %13, %cst_31 {dimension_numbers = #tpu.dot_dimension_numbers<[1], [0], [0], [1], [0, 0, 1, 1], [], []>} : vector<8x32xf32>, vector<32x128xf32>, vector<8x128xf32> -> vector<8x128xf32>
    %35 = vector.broadcast %15 : vector<1x128xf32> to vector<8x128xf32>
    %36 = arith.addf %34, %35 : vector<8x128xf32>
    %37 = arith.index_cast %33 : i32 to index
    %c0_32 = arith.constant 0 : index
    %38 = vector.load %arg17[%37, %c0_32] : memref<64x128xf32, #tpu.memory_space<vmem>>, vector<8x128xf32>
    %cst_33 = arith.constant dense<0.000000e+00> : vector<8xf32>
    %39 = vector.multi_reduction <add>, %36, %cst_33 [1] : vector<8x128xf32> to vector<8xf32>
    %40 = vector.shape_cast %39 : vector<8xf32> to vector<8x1xf32>
    %cst_34 = arith.constant 1.280000e+02 : f32
    %41 = vector.broadcast %cst_34 : f32 to vector<8x1xf32>
    %42 = arith.divf %40, %41 : vector<8x1xf32>
    %43 = arith.mulf %36, %36 : vector<8x128xf32>
    %cst_35 = arith.constant dense<0.000000e+00> : vector<8xf32>
    %44 = vector.multi_reduction <add>, %43, %cst_35 [1] : vector<8x128xf32> to vector<8xf32>
    %45 = vector.shape_cast %44 : vector<8xf32> to vector<8x1xf32>
    %cst_36 = arith.constant 1.280000e+02 : f32
    %46 = vector.broadcast %cst_36 : f32 to vector<8x1xf32>
    %47 = arith.divf %45, %46 : vector<8x1xf32>
    %48 = arith.mulf %42, %42 : vector<8x1xf32>
    %49 = arith.subf %47, %48 : vector<8x1xf32>
    %cst_37 = arith.constant 0.000000e+00 : f32
    %50 = vector.broadcast %cst_37 : f32 to vector<8x1xf32>
    %51 = arith.maximumf %49, %50 : vector<8x1xf32>
    %52 = vector.broadcast %42 : vector<8x1xf32> to vector<8x128xf32>
    %53 = arith.subf %36, %52 : vector<8x128xf32>
    %cst_38 = arith.constant 9.99999974E-6 : f32
    %54 = vector.broadcast %cst_38 : f32 to vector<8x1xf32>
    %55 = arith.addf %51, %54 : vector<8x1xf32>
    %56 = math.rsqrt %55 : vector<8x1xf32>
    %57 = vector.broadcast %56 : vector<8x1xf32> to vector<8x128xf32>
    %58 = arith.mulf %53, %57 : vector<8x128xf32>
    %59 = vector.broadcast %17 : vector<1x128xf32> to vector<8x128xf32>
    %60 = arith.mulf %58, %59 : vector<8x128xf32>
    %61 = vector.broadcast %19 : vector<1x128xf32> to vector<8x128xf32>
    %62 = arith.addf %60, %61 : vector<8x128xf32>
    %63 = arith.addf %38, %62 : vector<8x128xf32>
    %64 = math.tanh %63 : vector<8x128xf32>
    %65 = arith.negf %63 : vector<8x128xf32>
    %66 = math.exp %65 : vector<8x128xf32>
    %cst_39 = arith.constant 1.000000e+00 : f32
    %67 = vector.broadcast %cst_39 : f32 to vector<8x128xf32>
    %68 = arith.addf %67, %66 : vector<8x128xf32>
    %69 = arith.divf %67, %68 : vector<8x128xf32>
    %70 = arith.select %29, %64, %69 : vector<8x128xi1>, vector<8x128xf32>
    %71 = vector.extract_strided_slice %70 {offsets = [0, 0], sizes = [8, 32], strides = [1, 1]} : vector<8x128xf32> to vector<8x32xf32>
    %72 = vector.extract_strided_slice %70 {offsets = [0, 32], sizes = [8, 32], strides = [1, 1]} : vector<8x128xf32> to vector<8x32xf32>
    %73 = vector.extract_strided_slice %70 {offsets = [0, 64], sizes = [8, 32], strides = [1, 1]} : vector<8x128xf32> to vector<8x32xf32>
    %74 = vector.extract_strided_slice %70 {offsets = [0, 96], sizes = [8, 32], strides = [1, 1]} : vector<8x128xf32> to vector<8x32xf32>
    %75 = arith.mulf %72, %31 : vector<8x32xf32>
    %76 = arith.mulf %71, %73 : vector<8x32xf32>
    %77 = arith.addf %75, %76 : vector<8x32xf32>
    %78 = math.tanh %77 : vector<8x32xf32>
    %cst_40 = arith.constant dense<0.000000e+00> : vector<8xf32>
    %79 = vector.multi_reduction <add>, %78, %cst_40 [1] : vector<8x32xf32> to vector<8xf32>
    %80 = vector.shape_cast %79 : vector<8xf32> to vector<8x1xf32>
    %cst_41 = arith.constant 3.200000e+01 : f32
    %81 = vector.broadcast %cst_41 : f32 to vector<8x1xf32>
    %82 = arith.divf %80, %81 : vector<8x1xf32>
    %83 = arith.mulf %78, %78 : vector<8x32xf32>
    %cst_42 = arith.constant dense<0.000000e+00> : vector<8xf32>
    %84 = vector.multi_reduction <add>, %83, %cst_42 [1] : vector<8x32xf32> to vector<8xf32>
    %85 = vector.shape_cast %84 : vector<8xf32> to vector<8x1xf32>
    %cst_43 = arith.constant 3.200000e+01 : f32
    %86 = vector.broadcast %cst_43 : f32 to vector<8x1xf32>
    %87 = arith.divf %85, %86 : vector<8x1xf32>
    %88 = arith.mulf %82, %82 : vector<8x1xf32>
    %89 = arith.subf %87, %88 : vector<8x1xf32>
    %cst_44 = arith.constant 0.000000e+00 : f32
    %90 = vector.broadcast %cst_44 : f32 to vector<8x1xf32>
    %91 = arith.maximumf %89, %90 : vector<8x1xf32>
    %92 = vector.broadcast %82 : vector<8x1xf32> to vector<8x32xf32>
    %93 = arith.subf %78, %92 : vector<8x32xf32>
    %cst_45 = arith.constant 9.99999974E-6 : f32
    %94 = vector.broadcast %cst_45 : f32 to vector<8x1xf32>
    %95 = arith.addf %91, %94 : vector<8x1xf32>
    %96 = math.rsqrt %95 : vector<8x1xf32>
    %97 = vector.broadcast %96 : vector<8x1xf32> to vector<8x32xf32>
    %98 = arith.mulf %93, %97 : vector<8x32xf32>
    %99 = vector.broadcast %21 : vector<1x32xf32> to vector<8x32xf32>
    %100 = arith.mulf %98, %99 : vector<8x32xf32>
    %101 = vector.broadcast %23 : vector<1x32xf32> to vector<8x32xf32>
    %102 = arith.addf %100, %101 : vector<8x32xf32>
    %103 = arith.mulf %74, %102 : vector<8x32xf32>
    %c0_46 = arith.constant 0 : index
    %104 = arith.index_cast %33 : i32 to index
    %c0_47 = arith.constant 0 : index
    %105 = vector.load %arg14[%c0_46, %104, %c0_47] : memref<1x64x32xf32, #tpu.memory_space<vmem>>, vector<1x8x32xf32>
    %106 = vector.shape_cast %105 : vector<1x8x32xf32> to vector<8x32xf32>
    %107 = vector.shape_cast %103 : vector<8x32xf32> to vector<1x8x32xf32>
    tpu.vector_store %arg14[%c0_46, %104, %c0_47], %107 {strides = array<i32>} : memref<1x64x32xf32, #tpu.memory_space<vmem>>, vector<1x8x32xf32>,
    %c1_i32 = arith.constant 1 : i32
    %c8_i32_48 = arith.constant 8 : i32
    %108 = arith.muli %c1_i32, %c8_i32_48 : i32
    %109 = tpu.assume_multiple %108, 8 : i32
    %cst_49 = arith.constant dense<0.000000e+00> : vector<8x128xf32>
    %110 = tpu.matmul %103, %13, %cst_49 {dimension_numbers = #tpu.dot_dimension_numbers<[1], [0], [0], [1], [0, 0, 1, 1], [], []>} : vector<8x32xf32>, vector<32x128xf32>, vector<8x128xf32> -> vector<8x128xf32>
    %111 = vector.broadcast %15 : vector<1x128xf32> to vector<8x128xf32>
    %112 = arith.addf %110, %111 : vector<8x128xf32>
    %113 = arith.index_cast %109 : i32 to index
    %c0_50 = arith.constant 0 : index
    %114 = vector.load %arg17[%113, %c0_50] : memref<64x128xf32, #tpu.memory_space<vmem>>, vector<8x128xf32>
    %cst_51 = arith.constant dense<0.000000e+00> : vector<8xf32>
    %115 = vector.multi_reduction <add>, %112, %cst_51 [1] : vector<8x128xf32> to vector<8xf32>
    %116 = vector.shape_cast %115 : vector<8xf32> to vector<8x1xf32>
    %cst_52 = arith.constant 1.280000e+02 : f32
    %117 = vector.broadcast %cst_52 : f32 to vector<8x1xf32>
    %118 = arith.divf %116, %117 : vector<8x1xf32>
    %119 = arith.mulf %112, %112 : vector<8x128xf32>
    %cst_53 = arith.constant dense<0.000000e+00> : vector<8xf32>
    %120 = vector.multi_reduction <add>, %119, %cst_53 [1] : vector<8x128xf32> to vector<8xf32>
    %121 = vector.shape_cast %120 : vector<8xf32> to vector<8x1xf32>
    %cst_54 = arith.constant 1.280000e+02 : f32
    %122 = vector.broadcast %cst_54 : f32 to vector<8x1xf32>
    %123 = arith.divf %121, %122 : vector<8x1xf32>
    %124 = arith.mulf %118, %118 : vector<8x1xf32>
    %125 = arith.subf %123, %124 : vector<8x1xf32>
    %cst_55 = arith.constant 0.000000e+00 : f32
    %126 = vector.broadcast %cst_55 : f32 to vector<8x1xf32>
    %127 = arith.maximumf %125, %126 : vector<8x1xf32>
    %128 = vector.broadcast %118 : vector<8x1xf32> to vector<8x128xf32>
    %129 = arith.subf %112, %128 : vector<8x128xf32>
    %cst_56 = arith.constant 9.99999974E-6 : f32
    %130 = vector.broadcast %cst_56 : f32 to vector<8x1xf32>
    %131 = arith.addf %127, %130 : vector<8x1xf32>
    %132 = math.rsqrt %131 : vector<8x1xf32>
    %133 = vector.broadcast %132 : vector<8x1xf32> to vector<8x128xf32>
    %134 = arith.mulf %129, %133 : vector<8x128xf32>
    %135 = vector.broadcast %17 : vector<1x128xf32> to vector<8x128xf32>
    %136 = arith.mulf %134, %135 : vector<8x128xf32>
    %137 = vector.broadcast %19 : vector<1x128xf32> to vector<8x128xf32>
    %138 = arith.addf %136, %137 : vector<8x128xf32>
    %139 = arith.addf %114, %138 : vector<8x128xf32>
    %140 = math.tanh %139 : vector<8x128xf32>
    %141 = arith.negf %139 : vector<8x128xf32>
    %142 = math.exp %141 : vector<8x128xf32>
    %cst_57 = arith.constant 1.000000e+00 : f32
    %143 = vector.broadcast %cst_57 : f32 to vector<8x128xf32>
    %144 = arith.addf %143, %142 : vector<8x128xf32>
    %145 = arith.divf %143, %144 : vector<8x128xf32>
    %146 = arith.select %29, %140, %145 : vector<8x128xi1>, vector<8x128xf32>
    %147 = vector.extract_strided_slice %146 {offsets = [0, 0], sizes = [8, 32], strides = [1, 1]} : vector<8x128xf32> to vector<8x32xf32>
    %148 = vector.extract_strided_slice %146 {offsets = [0, 32], sizes = [8, 32], strides = [1, 1]} : vector<8x128xf32> to vector<8x32xf32>
    %149 = vector.extract_strided_slice %146 {offsets = [0, 64], sizes = [8, 32], strides = [1, 1]} : vector<8x128xf32> to vector<8x32xf32>
    %150 = vector.extract_strided_slice %146 {offsets = [0, 96], sizes = [8, 32], strides = [1, 1]} : vector<8x128xf32> to vector<8x32xf32>
    %151 = arith.mulf %148, %77 : vector<8x32xf32>
    %152 = arith.mulf %147, %149 : vector<8x32xf32>
    %153 = arith.addf %151, %152 : vector<8x32xf32>
    %154 = math.tanh %153 : vector<8x32xf32>
    %cst_58 = arith.constant dense<0.000000e+00> : vector<8xf32>
    %155 = vector.multi_reduction <add>, %154, %cst_58 [1] : vector<8x32xf32> to vector<8xf32>
    %156 = vector.shape_cast %155 : vector<8xf32> to vector<8x1xf32>
    %cst_59 = arith.constant 3.200000e+01 : f32
    %157 = vector.broadcast %cst_59 : f32 to vector<8x1xf32>
    %158 = arith.divf %156, %157 : vector<8x1xf32>
    %159 = arith.mulf %154, %154 : vector<8x32xf32>
    %cst_60 = arith.constant dense<0.000000e+00> : vector<8xf32>
    %160 = vector.multi_reduction <add>, %159, %cst_60 [1] : vector<8x32xf32> to vector<8xf32>
    %161 = vector.shape_cast %160 : vector<8xf32> to vector<8x1xf32>
    %cst_61 = arith.constant 3.200000e+01 : f32
    %162 = vector.broadcast %cst_61 : f32 to vector<8x1xf32>
    %163 = arith.divf %161, %162 : vector<8x1xf32>
    %164 = arith.mulf %158, %158 : vector<8x1xf32>
    %165 = arith.subf %163, %164 : vector<8x1xf32>
    %cst_62 = arith.constant 0.000000e+00 : f32
    %166 = vector.broadcast %cst_62 : f32 to vector<8x1xf32>
    %167 = arith.maximumf %165, %166 : vector<8x1xf32>
    %168 = vector.broadcast %158 : vector<8x1xf32> to vector<8x32xf32>
    %169 = arith.subf %154, %168 : vector<8x32xf32>
    %cst_63 = arith.constant 9.99999974E-6 : f32
    %170 = vector.broadcast %cst_63 : f32 to vector<8x1xf32>
    %171 = arith.addf %167, %170 : vector<8x1xf32>
    %172 = math.rsqrt %171 : vector<8x1xf32>
    %173 = vector.broadcast %172 : vector<8x1xf32> to vector<8x32xf32>
    %174 = arith.mulf %169, %173 : vector<8x32xf32>
    %175 = vector.broadcast %21 : vector<1x32xf32> to vector<8x32xf32>
    %176 = arith.mulf %174, %175 : vector<8x32xf32>
    %177 = vector.broadcast %23 : vector<1x32xf32> to vector<8x32xf32>
    %178 = arith.addf %176, %177 : vector<8x32xf32>
    %179 = arith.mulf %150, %178 : vector<8x32xf32>
    %c0_64 = arith.constant 0 : index
    %180 = arith.index_cast %109 : i32 to index
    %c0_65 = arith.constant 0 : index
    %181 = vector.load %arg14[%c0_64, %180, %c0_65] : memref<1x64x32xf32, #tpu.memory_space<vmem>>, vector<1x8x32xf32>
    %182 = vector.shape_cast %181 : vector<1x8x32xf32> to vector<8x32xf32>
    %183 = vector.shape_cast %179 : vector<8x32xf32> to vector<1x8x32xf32>
    tpu.vector_store %arg14[%c0_64, %180, %c0_65], %183 {strides = array<i32>} : memref<1x64x32xf32, #tpu.memory_space<vmem>>, vector<1x8x32xf32>,
    %c2_i32 = arith.constant 2 : i32
    %c8_i32_66 = arith.constant 8 : i32
    %184 = arith.muli %c2_i32, %c8_i32_66 : i32
    %185 = tpu.assume_multiple %184, 8 : i32
    %cst_67 = arith.constant dense<0.000000e+00> : vector<8x128xf32>
    %186 = tpu.matmul %179, %13, %cst_67 {dimension_numbers = #tpu.dot_dimension_numbers<[1], [0], [0], [1], [0, 0, 1, 1], [], []>} : vector<8x32xf32>, vector<32x128xf32>, vector<8x128xf32> -> vector<8x128xf32>
    %187 = vector.broadcast %15 : vector<1x128xf32> to vector<8x128xf32>
    %188 = arith.addf %186, %187 : vector<8x128xf32>
    %189 = arith.index_cast %185 : i32 to index
    %c0_68 = arith.constant 0 : index
    %190 = vector.load %arg17[%189, %c0_68] : memref<64x128xf32, #tpu.memory_space<vmem>>, vector<8x128xf32>
    %cst_69 = arith.constant dense<0.000000e+00> : vector<8xf32>
    %191 = vector.multi_reduction <add>, %188, %cst_69 [1] : vector<8x128xf32> to vector<8xf32>
    %192 = vector.shape_cast %191 : vector<8xf32> to vector<8x1xf32>
    %cst_70 = arith.constant 1.280000e+02 : f32
    %193 = vector.broadcast %cst_70 : f32 to vector<8x1xf32>
    %194 = arith.divf %192, %193 : vector<8x1xf32>
    %195 = arith.mulf %188, %188 : vector<8x128xf32>
    %cst_71 = arith.constant dense<0.000000e+00> : vector<8xf32>
    %196 = vector.multi_reduction <add>, %195, %cst_71 [1] : vector<8x128xf32> to vector<8xf32>
    %197 = vector.shape_cast %196 : vector<8xf32> to vector<8x1xf32>
    %cst_72 = arith.constant 1.280000e+02 : f32
    %198 = vector.broadcast %cst_72 : f32 to vector<8x1xf32>
    %199 = arith.divf %197, %198 : vector<8x1xf32>
    %200 = arith.mulf %194, %194 : vector<8x1xf32>
    %201 = arith.subf %199, %200 : vector<8x1xf32>
    %cst_73 = arith.constant 0.000000e+00 : f32
    %202 = vector.broadcast %cst_73 : f32 to vector<8x1xf32>
    %203 = arith.maximumf %201, %202 : vector<8x1xf32>
    %204 = vector.broadcast %194 : vector<8x1xf32> to vector<8x128xf32>
    %205 = arith.subf %188, %204 : vector<8x128xf32>
    %cst_74 = arith.constant 9.99999974E-6 : f32
    %206 = vector.broadcast %cst_74 : f32 to vector<8x1xf32>
    %207 = arith.addf %203, %206 : vector<8x1xf32>
    %208 = math.rsqrt %207 : vector<8x1xf32>
    %209 = vector.broadcast %208 : vector<8x1xf32> to vector<8x128xf32>
    %210 = arith.mulf %205, %209 : vector<8x128xf32>
    %211 = vector.broadcast %17 : vector<1x128xf32> to vector<8x128xf32>
    %212 = arith.mulf %210, %211 : vector<8x128xf32>
    %213 = vector.broadcast %19 : vector<1x128xf32> to vector<8x128xf32>
    %214 = arith.addf %212, %213 : vector<8x128xf32>
    %215 = arith.addf %190, %214 : vector<8x128xf32>
    %216 = math.tanh %215 : vector<8x128xf32>
    %217 = arith.negf %215 : vector<8x128xf32>
    %218 = math.exp %217 : vector<8x128xf32>
    %cst_75 = arith.constant 1.000000e+00 : f32
    %219 = vector.broadcast %cst_75 : f32 to vector<8x128xf32>
    %220 = arith.addf %219, %218 : vector<8x128xf32>
    %221 = arith.divf %219, %220 : vector<8x128xf32>
    %222 = arith.select %29, %216, %221 : vector<8x128xi1>, vector<8x128xf32>
    %223 = vector.extract_strided_slice %222 {offsets = [0, 0], sizes = [8, 32], strides = [1, 1]} : vector<8x128xf32> to vector<8x32xf32>
    %224 = vector.extract_strided_slice %222 {offsets = [0, 32], sizes = [8, 32], strides = [1, 1]} : vector<8x128xf32> to vector<8x32xf32>
    %225 = vector.extract_strided_slice %222 {offsets = [0, 64], sizes = [8, 32], strides = [1, 1]} : vector<8x128xf32> to vector<8x32xf32>
    %226 = vector.extract_strided_slice %222 {offsets = [0, 96], sizes = [8, 32], strides = [1, 1]} : vector<8x128xf32> to vector<8x32xf32>
    %227 = arith.mulf %224, %153 : vector<8x32xf32>
    %228 = arith.mulf %223, %225 : vector<8x32xf32>
    %229 = arith.addf %227, %228 : vector<8x32xf32>
    %230 = math.tanh %229 : vector<8x32xf32>
    %cst_76 = arith.constant dense<0.000000e+00> : vector<8xf32>
    %231 = vector.multi_reduction <add>, %230, %cst_76 [1] : vector<8x32xf32> to vector<8xf32>
    %232 = vector.shape_cast %231 : vector<8xf32> to vector<8x1xf32>
    %cst_77 = arith.constant 3.200000e+01 : f32
    %233 = vector.broadcast %cst_77 : f32 to vector<8x1xf32>
    %234 = arith.divf %232, %233 : vector<8x1xf32>
    %235 = arith.mulf %230, %230 : vector<8x32xf32>
    %cst_78 = arith.constant dense<0.000000e+00> : vector<8xf32>
    %236 = vector.multi_reduction <add>, %235, %cst_78 [1] : vector<8x32xf32> to vector<8xf32>
    %237 = vector.shape_cast %236 : vector<8xf32> to vector<8x1xf32>
    %cst_79 = arith.constant 3.200000e+01 : f32
    %238 = vector.broadcast %cst_79 : f32 to vector<8x1xf32>
    %239 = arith.divf %237, %238 : vector<8x1xf32>
    %240 = arith.mulf %234, %234 : vector<8x1xf32>
    %241 = arith.subf %239, %240 : vector<8x1xf32>
    %cst_80 = arith.constant 0.000000e+00 : f32
    %242 = vector.broadcast %cst_80 : f32 to vector<8x1xf32>
    %243 = arith.maximumf %241, %242 : vector<8x1xf32>
    %244 = vector.broadcast %234 : vector<8x1xf32> to vector<8x32xf32>
    %245 = arith.subf %230, %244 : vector<8x32xf32>
    %cst_81 = arith.constant 9.99999974E-6 : f32
    %246 = vector.broadcast %cst_81 : f32 to vector<8x1xf32>
    %247 = arith.addf %243, %246 : vector<8x1xf32>
    %248 = math.rsqrt %247 : vector<8x1xf32>
    %249 = vector.broadcast %248 : vector<8x1xf32> to vector<8x32xf32>
    %250 = arith.mulf %245, %249 : vector<8x32xf32>
    %251 = vector.broadcast %21 : vector<1x32xf32> to vector<8x32xf32>
    %252 = arith.mulf %250, %251 : vector<8x32xf32>
    %253 = vector.broadcast %23 : vector<1x32xf32> to vector<8x32xf32>
    %254 = arith.addf %252, %253 : vector<8x32xf32>
    %255 = arith.mulf %226, %254 : vector<8x32xf32>
    %c0_82 = arith.constant 0 : index
    %256 = arith.index_cast %185 : i32 to index
    %c0_83 = arith.constant 0 : index
    %257 = vector.load %arg14[%c0_82, %256, %c0_83] : memref<1x64x32xf32, #tpu.memory_space<vmem>>, vector<1x8x32xf32>
    %258 = vector.shape_cast %257 : vector<1x8x32xf32> to vector<8x32xf32>
    %259 = vector.shape_cast %255 : vector<8x32xf32> to vector<1x8x32xf32>
    tpu.vector_store %arg14[%c0_82, %256, %c0_83], %259 {strides = array<i32>} : memref<1x64x32xf32, #tpu.memory_space<vmem>>, vector<1x8x32xf32>,
    %c3_i32 = arith.constant 3 : i32
    %c8_i32_84 = arith.constant 8 : i32
    %260 = arith.muli %c3_i32, %c8_i32_84 : i32
    %261 = tpu.assume_multiple %260, 8 : i32
    %cst_85 = arith.constant dense<0.000000e+00> : vector<8x128xf32>
    %262 = tpu.matmul %255, %13, %cst_85 {dimension_numbers = #tpu.dot_dimension_numbers<[1], [0], [0], [1], [0, 0, 1, 1], [], []>} : vector<8x32xf32>, vector<32x128xf32>, vector<8x128xf32> -> vector<8x128xf32>
    %263 = vector.broadcast %15 : vector<1x128xf32> to vector<8x128xf32>
    %264 = arith.addf %262, %263 : vector<8x128xf32>
    %265 = arith.index_cast %261 : i32 to index
    %c0_86 = arith.constant 0 : index
    %266 = vector.load %arg17[%265, %c0_86] : memref<64x128xf32, #tpu.memory_space<vmem>>, vector<8x128xf32>
    %cst_87 = arith.constant dense<0.000000e+00> : vector<8xf32>
    %267 = vector.multi_reduction <add>, %264, %cst_87 [1] : vector<8x128xf32> to vector<8xf32>
    %268 = vector.shape_cast %267 : vector<8xf32> to vector<8x1xf32>
    %cst_88 = arith.constant 1.280000e+02 : f32
    %269 = vector.broadcast %cst_88 : f32 to vector<8x1xf32>
    %270 = arith.divf %268, %269 : vector<8x1xf32>
    %271 = arith.mulf %264, %264 : vector<8x128xf32>
    %cst_89 = arith.constant dense<0.000000e+00> : vector<8xf32>
    %272 = vector.multi_reduction <add>, %271, %cst_89 [1] : vector<8x128xf32> to vector<8xf32>
    %273 = vector.shape_cast %272 : vector<8xf32> to vector<8x1xf32>
    %cst_90 = arith.constant 1.280000e+02 : f32
    %274 = vector.broadcast %cst_90 : f32 to vector<8x1xf32>
    %275 = arith.divf %273, %274 : vector<8x1xf32>
    %276 = arith.mulf %270, %270 : vector<8x1xf32>
    %277 = arith.subf %275, %276 : vector<8x1xf32>
    %cst_91 = arith.constant 0.000000e+00 : f32
    %278 = vector.broadcast %cst_91 : f32 to vector<8x1xf32>
    %279 = arith.maximumf %277, %278 : vector<8x1xf32>
    %280 = vector.broadcast %270 : vector<8x1xf32> to vector<8x128xf32>
    %281 = arith.subf %264, %280 : vector<8x128xf32>
    %cst_92 = arith.constant 9.99999974E-6 : f32
    %282 = vector.broadcast %cst_92 : f32 to vector<8x1xf32>
    %283 = arith.addf %279, %282 : vector<8x1xf32>
    %284 = math.rsqrt %283 : vector<8x1xf32>
    %285 = vector.broadcast %284 : vector<8x1xf32> to vector<8x128xf32>
    %286 = arith.mulf %281, %285 : vector<8x128xf32>
    %287 = vector.broadcast %17 : vector<1x128xf32> to vector<8x128xf32>
    %288 = arith.mulf %286, %287 : vector<8x128xf32>
    %289 = vector.broadcast %19 : vector<1x128xf32> to vector<8x128xf32>
    %290 = arith.addf %288, %289 : vector<8x128xf32>
    %291 = arith.addf %266, %290 : vector<8x128xf32>
    %292 = math.tanh %291 : vector<8x128xf32>
    %293 = arith.negf %291 : vector<8x128xf32>
    %294 = math.exp %293 : vector<8x128xf32>
    %cst_93 = arith.constant 1.000000e+00 : f32
    %295 = vector.broadcast %cst_93 : f32 to vector<8x128xf32>
    %296 = arith.addf %295, %294 : vector<8x128xf32>
    %297 = arith.divf %295, %296 : vector<8x128xf32>
    %298 = arith.select %29, %292, %297 : vector<8x128xi1>, vector<8x128xf32>
    %299 = vector.extract_strided_slice %298 {offsets = [0, 0], sizes = [8, 32], strides = [1, 1]} : vector<8x128xf32> to vector<8x32xf32>
    %300 = vector.extract_strided_slice %298 {offsets = [0, 32], sizes = [8, 32], strides = [1, 1]} : vector<8x128xf32> to vector<8x32xf32>
    %301 = vector.extract_strided_slice %298 {offsets = [0, 64], sizes = [8, 32], strides = [1, 1]} : vector<8x128xf32> to vector<8x32xf32>
    %302 = vector.extract_strided_slice %298 {offsets = [0, 96], sizes = [8, 32], strides = [1, 1]} : vector<8x128xf32> to vector<8x32xf32>
    %303 = arith.mulf %300, %229 : vector<8x32xf32>
    %304 = arith.mulf %299, %301 : vector<8x32xf32>
    %305 = arith.addf %303, %304 : vector<8x32xf32>
    %306 = math.tanh %305 : vector<8x32xf32>
    %cst_94 = arith.constant dense<0.000000e+00> : vector<8xf32>
    %307 = vector.multi_reduction <add>, %306, %cst_94 [1] : vector<8x32xf32> to vector<8xf32>
    %308 = vector.shape_cast %307 : vector<8xf32> to vector<8x1xf32>
    %cst_95 = arith.constant 3.200000e+01 : f32
    %309 = vector.broadcast %cst_95 : f32 to vector<8x1xf32>
    %310 = arith.divf %308, %309 : vector<8x1xf32>
    %311 = arith.mulf %306, %306 : vector<8x32xf32>
    %cst_96 = arith.constant dense<0.000000e+00> : vector<8xf32>
    %312 = vector.multi_reduction <add>, %311, %cst_96 [1] : vector<8x32xf32> to vector<8xf32>
    %313 = vector.shape_cast %312 : vector<8xf32> to vector<8x1xf32>
    %cst_97 = arith.constant 3.200000e+01 : f32
    %314 = vector.broadcast %cst_97 : f32 to vector<8x1xf32>
    %315 = arith.divf %313, %314 : vector<8x1xf32>
    %316 = arith.mulf %310, %310 : vector<8x1xf32>
    %317 = arith.subf %315, %316 : vector<8x1xf32>
    %cst_98 = arith.constant 0.000000e+00 : f32
    %318 = vector.broadcast %cst_98 : f32 to vector<8x1xf32>
    %319 = arith.maximumf %317, %318 : vector<8x1xf32>
    %320 = vector.broadcast %310 : vector<8x1xf32> to vector<8x32xf32>
    %321 = arith.subf %306, %320 : vector<8x32xf32>
    %cst_99 = arith.constant 9.99999974E-6 : f32
    %322 = vector.broadcast %cst_99 : f32 to vector<8x1xf32>
    %323 = arith.addf %319, %322 : vector<8x1xf32>
    %324 = math.rsqrt %323 : vector<8x1xf32>
    %325 = vector.broadcast %324 : vector<8x1xf32> to vector<8x32xf32>
    %326 = arith.mulf %321, %325 : vector<8x32xf32>
    %327 = vector.broadcast %21 : vector<1x32xf32> to vector<8x32xf32>
    %328 = arith.mulf %326, %327 : vector<8x32xf32>
    %329 = vector.broadcast %23 : vector<1x32xf32> to vector<8x32xf32>
    %330 = arith.addf %328, %329 : vector<8x32xf32>
    %331 = arith.mulf %302, %330 : vector<8x32xf32>
    %c0_100 = arith.constant 0 : index
    %332 = arith.index_cast %261 : i32 to index
    %c0_101 = arith.constant 0 : index
    %333 = vector.load %arg14[%c0_100, %332, %c0_101] : memref<1x64x32xf32, #tpu.memory_space<vmem>>, vector<1x8x32xf32>
    %334 = vector.shape_cast %333 : vector<1x8x32xf32> to vector<8x32xf32>
    %335 = vector.shape_cast %331 : vector<8x32xf32> to vector<1x8x32xf32>
    tpu.vector_store %arg14[%c0_100, %332, %c0_101], %335 {strides = array<i32>} : memref<1x64x32xf32, #tpu.memory_space<vmem>>, vector<1x8x32xf32>,
    %c4_i32 = arith.constant 4 : i32
    %c8_i32_102 = arith.constant 8 : i32
    %336 = arith.muli %c4_i32, %c8_i32_102 : i32
    %337 = tpu.assume_multiple %336, 8 : i32
    %cst_103 = arith.constant dense<0.000000e+00> : vector<8x128xf32>
    %338 = tpu.matmul %331, %13, %cst_103 {dimension_numbers = #tpu.dot_dimension_numbers<[1], [0], [0], [1], [0, 0, 1, 1], [], []>} : vector<8x32xf32>, vector<32x128xf32>, vector<8x128xf32> -> vector<8x128xf32>
    %339 = vector.broadcast %15 : vector<1x128xf32> to vector<8x128xf32>
    %340 = arith.addf %338, %339 : vector<8x128xf32>
    %341 = arith.index_cast %337 : i32 to index
    %c0_104 = arith.constant 0 : index
    %342 = vector.load %arg17[%341, %c0_104] : memref<64x128xf32, #tpu.memory_space<vmem>>, vector<8x128xf32>
    %cst_105 = arith.constant dense<0.000000e+00> : vector<8xf32>
    %343 = vector.multi_reduction <add>, %340, %cst_105 [1] : vector<8x128xf32> to vector<8xf32>
    %344 = vector.shape_cast %343 : vector<8xf32> to vector<8x1xf32>
    %cst_106 = arith.constant 1.280000e+02 : f32
    %345 = vector.broadcast %cst_106 : f32 to vector<8x1xf32>
    %346 = arith.divf %344, %345 : vector<8x1xf32>
    %347 = arith.mulf %340, %340 : vector<8x128xf32>
    %cst_107 = arith.constant dense<0.000000e+00> : vector<8xf32>
    %348 = vector.multi_reduction <add>, %347, %cst_107 [1] : vector<8x128xf32> to vector<8xf32>
    %349 = vector.shape_cast %348 : vector<8xf32> to vector<8x1xf32>
    %cst_108 = arith.constant 1.280000e+02 : f32
    %350 = vector.broadcast %cst_108 : f32 to vector<8x1xf32>
    %351 = arith.divf %349, %350 : vector<8x1xf32>
    %352 = arith.mulf %346, %346 : vector<8x1xf32>
    %353 = arith.subf %351, %352 : vector<8x1xf32>
    %cst_109 = arith.constant 0.000000e+00 : f32
    %354 = vector.broadcast %cst_109 : f32 to vector<8x1xf32>
    %355 = arith.maximumf %353, %354 : vector<8x1xf32>
    %356 = vector.broadcast %346 : vector<8x1xf32> to vector<8x128xf32>
    %357 = arith.subf %340, %356 : vector<8x128xf32>
    %cst_110 = arith.constant 9.99999974E-6 : f32
    %358 = vector.broadcast %cst_110 : f32 to vector<8x1xf32>
    %359 = arith.addf %355, %358 : vector<8x1xf32>
    %360 = math.rsqrt %359 : vector<8x1xf32>
    %361 = vector.broadcast %360 : vector<8x1xf32> to vector<8x128xf32>
    %362 = arith.mulf %357, %361 : vector<8x128xf32>
    %363 = vector.broadcast %17 : vector<1x128xf32> to vector<8x128xf32>
    %364 = arith.mulf %362, %363 : vector<8x128xf32>
    %365 = vector.broadcast %19 : vector<1x128xf32> to vector<8x128xf32>
    %366 = arith.addf %364, %365 : vector<8x128xf32>
    %367 = arith.addf %342, %366 : vector<8x128xf32>
    %368 = math.tanh %367 : vector<8x128xf32>
    %369 = arith.negf %367 : vector<8x128xf32>
    %370 = math.exp %369 : vector<8x128xf32>
    %cst_111 = arith.constant 1.000000e+00 : f32
    %371 = vector.broadcast %cst_111 : f32 to vector<8x128xf32>
    %372 = arith.addf %371, %370 : vector<8x128xf32>
    %373 = arith.divf %371, %372 : vector<8x128xf32>
    %374 = arith.select %29, %368, %373 : vector<8x128xi1>, vector<8x128xf32>
    %375 = vector.extract_strided_slice %374 {offsets = [0, 0], sizes = [8, 32], strides = [1, 1]} : vector<8x128xf32> to vector<8x32xf32>
    %376 = vector.extract_strided_slice %374 {offsets = [0, 32], sizes = [8, 32], strides = [1, 1]} : vector<8x128xf32> to vector<8x32xf32>
    %377 = vector.extract_strided_slice %374 {offsets = [0, 64], sizes = [8, 32], strides = [1, 1]} : vector<8x128xf32> to vector<8x32xf32>
    %378 = vector.extract_strided_slice %374 {offsets = [0, 96], sizes = [8, 32], strides = [1, 1]} : vector<8x128xf32> to vector<8x32xf32>
    %379 = arith.mulf %376, %305 : vector<8x32xf32>
    %380 = arith.mulf %375, %377 : vector<8x32xf32>
    %381 = arith.addf %379, %380 : vector<8x32xf32>
    %382 = math.tanh %381 : vector<8x32xf32>
    %cst_112 = arith.constant dense<0.000000e+00> : vector<8xf32>
    %383 = vector.multi_reduction <add>, %382, %cst_112 [1] : vector<8x32xf32> to vector<8xf32>
    %384 = vector.shape_cast %383 : vector<8xf32> to vector<8x1xf32>
    %cst_113 = arith.constant 3.200000e+01 : f32
    %385 = vector.broadcast %cst_113 : f32 to vector<8x1xf32>
    %386 = arith.divf %384, %385 : vector<8x1xf32>
    %387 = arith.mulf %382, %382 : vector<8x32xf32>
    %cst_114 = arith.constant dense<0.000000e+00> : vector<8xf32>
    %388 = vector.multi_reduction <add>, %387, %cst_114 [1] : vector<8x32xf32> to vector<8xf32>
    %389 = vector.shape_cast %388 : vector<8xf32> to vector<8x1xf32>
    %cst_115 = arith.constant 3.200000e+01 : f32
    %390 = vector.broadcast %cst_115 : f32 to vector<8x1xf32>
    %391 = arith.divf %389, %390 : vector<8x1xf32>
    %392 = arith.mulf %386, %386 : vector<8x1xf32>
    %393 = arith.subf %391, %392 : vector<8x1xf32>
    %cst_116 = arith.constant 0.000000e+00 : f32
    %394 = vector.broadcast %cst_116 : f32 to vector<8x1xf32>
    %395 = arith.maximumf %393, %394 : vector<8x1xf32>
    %396 = vector.broadcast %386 : vector<8x1xf32> to vector<8x32xf32>
    %397 = arith.subf %382, %396 : vector<8x32xf32>
    %cst_117 = arith.constant 9.99999974E-6 : f32
    %398 = vector.broadcast %cst_117 : f32 to vector<8x1xf32>
    %399 = arith.addf %395, %398 : vector<8x1xf32>
    %400 = math.rsqrt %399 : vector<8x1xf32>
    %401 = vector.broadcast %400 : vector<8x1xf32> to vector<8x32xf32>
    %402 = arith.mulf %397, %401 : vector<8x32xf32>
    %403 = vector.broadcast %21 : vector<1x32xf32> to vector<8x32xf32>
    %404 = arith.mulf %402, %403 : vector<8x32xf32>
    %405 = vector.broadcast %23 : vector<1x32xf32> to vector<8x32xf32>
    %406 = arith.addf %404, %405 : vector<8x32xf32>
    %407 = arith.mulf %378, %406 : vector<8x32xf32>
    %c0_118 = arith.constant 0 : index
    %408 = arith.index_cast %337 : i32 to index
    %c0_119 = arith.constant 0 : index
    %409 = vector.load %arg14[%c0_118, %408, %c0_119] : memref<1x64x32xf32, #tpu.memory_space<vmem>>, vector<1x8x32xf32>
    %410 = vector.shape_cast %409 : vector<1x8x32xf32> to vector<8x32xf32>
    %411 = vector.shape_cast %407 : vector<8x32xf32> to vector<1x8x32xf32>
    tpu.vector_store %arg14[%c0_118, %408, %c0_119], %411 {strides = array<i32>} : memref<1x64x32xf32, #tpu.memory_space<vmem>>, vector<1x8x32xf32>,
    %c5_i32 = arith.constant 5 : i32
    %c8_i32_120 = arith.constant 8 : i32
    %412 = arith.muli %c5_i32, %c8_i32_120 : i32
    %413 = tpu.assume_multiple %412, 8 : i32
    %cst_121 = arith.constant dense<0.000000e+00> : vector<8x128xf32>
    %414 = tpu.matmul %407, %13, %cst_121 {dimension_numbers = #tpu.dot_dimension_numbers<[1], [0], [0], [1], [0, 0, 1, 1], [], []>} : vector<8x32xf32>, vector<32x128xf32>, vector<8x128xf32> -> vector<8x128xf32>
    %415 = vector.broadcast %15 : vector<1x128xf32> to vector<8x128xf32>
    %416 = arith.addf %414, %415 : vector<8x128xf32>
    %417 = arith.index_cast %413 : i32 to index
    %c0_122 = arith.constant 0 : index
    %418 = vector.load %arg17[%417, %c0_122] : memref<64x128xf32, #tpu.memory_space<vmem>>, vector<8x128xf32>
    %cst_123 = arith.constant dense<0.000000e+00> : vector<8xf32>
    %419 = vector.multi_reduction <add>, %416, %cst_123 [1] : vector<8x128xf32> to vector<8xf32>
    %420 = vector.shape_cast %419 : vector<8xf32> to vector<8x1xf32>
    %cst_124 = arith.constant 1.280000e+02 : f32
    %421 = vector.broadcast %cst_124 : f32 to vector<8x1xf32>
    %422 = arith.divf %420, %421 : vector<8x1xf32>
    %423 = arith.mulf %416, %416 : vector<8x128xf32>
    %cst_125 = arith.constant dense<0.000000e+00> : vector<8xf32>
    %424 = vector.multi_reduction <add>, %423, %cst_125 [1] : vector<8x128xf32> to vector<8xf32>
    %425 = vector.shape_cast %424 : vector<8xf32> to vector<8x1xf32>
    %cst_126 = arith.constant 1.280000e+02 : f32
    %426 = vector.broadcast %cst_126 : f32 to vector<8x1xf32>
    %427 = arith.divf %425, %426 : vector<8x1xf32>
    %428 = arith.mulf %422, %422 : vector<8x1xf32>
    %429 = arith.subf %427, %428 : vector<8x1xf32>
    %cst_127 = arith.constant 0.000000e+00 : f32
    %430 = vector.broadcast %cst_127 : f32 to vector<8x1xf32>
    %431 = arith.maximumf %429, %430 : vector<8x1xf32>
    %432 = vector.broadcast %422 : vector<8x1xf32> to vector<8x128xf32>
    %433 = arith.subf %416, %432 : vector<8x128xf32>
    %cst_128 = arith.constant 9.99999974E-6 : f32
    %434 = vector.broadcast %cst_128 : f32 to vector<8x1xf32>
    %435 = arith.addf %431, %434 : vector<8x1xf32>
    %436 = math.rsqrt %435 : vector<8x1xf32>
    %437 = vector.broadcast %436 : vector<8x1xf32> to vector<8x128xf32>
    %438 = arith.mulf %433, %437 : vector<8x128xf32>
    %439 = vector.broadcast %17 : vector<1x128xf32> to vector<8x128xf32>
    %440 = arith.mulf %438, %439 : vector<8x128xf32>
    %441 = vector.broadcast %19 : vector<1x128xf32> to vector<8x128xf32>
    %442 = arith.addf %440, %441 : vector<8x128xf32>
    %443 = arith.addf %418, %442 : vector<8x128xf32>
    %444 = math.tanh %443 : vector<8x128xf32>
    %445 = arith.negf %443 : vector<8x128xf32>
    %446 = math.exp %445 : vector<8x128xf32>
    %cst_129 = arith.constant 1.000000e+00 : f32
    %447 = vector.broadcast %cst_129 : f32 to vector<8x128xf32>
    %448 = arith.addf %447, %446 : vector<8x128xf32>
    %449 = arith.divf %447, %448 : vector<8x128xf32>
    %450 = arith.select %29, %444, %449 : vector<8x128xi1>, vector<8x128xf32>
    %451 = vector.extract_strided_slice %450 {offsets = [0, 0], sizes = [8, 32], strides = [1, 1]} : vector<8x128xf32> to vector<8x32xf32>
    %452 = vector.extract_strided_slice %450 {offsets = [0, 32], sizes = [8, 32], strides = [1, 1]} : vector<8x128xf32> to vector<8x32xf32>
    %453 = vector.extract_strided_slice %450 {offsets = [0, 64], sizes = [8, 32], strides = [1, 1]} : vector<8x128xf32> to vector<8x32xf32>
    %454 = vector.extract_strided_slice %450 {offsets = [0, 96], sizes = [8, 32], strides = [1, 1]} : vector<8x128xf32> to vector<8x32xf32>
    %455 = arith.mulf %452, %381 : vector<8x32xf32>
    %456 = arith.mulf %451, %453 : vector<8x32xf32>
    %457 = arith.addf %455, %456 : vector<8x32xf32>
    %458 = math.tanh %457 : vector<8x32xf32>
    %cst_130 = arith.constant dense<0.000000e+00> : vector<8xf32>
    %459 = vector.multi_reduction <add>, %458, %cst_130 [1] : vector<8x32xf32> to vector<8xf32>
    %460 = vector.shape_cast %459 : vector<8xf32> to vector<8x1xf32>
    %cst_131 = arith.constant 3.200000e+01 : f32
    %461 = vector.broadcast %cst_131 : f32 to vector<8x1xf32>
    %462 = arith.divf %460, %461 : vector<8x1xf32>
    %463 = arith.mulf %458, %458 : vector<8x32xf32>
    %cst_132 = arith.constant dense<0.000000e+00> : vector<8xf32>
    %464 = vector.multi_reduction <add>, %463, %cst_132 [1] : vector<8x32xf32> to vector<8xf32>
    %465 = vector.shape_cast %464 : vector<8xf32> to vector<8x1xf32>
    %cst_133 = arith.constant 3.200000e+01 : f32
    %466 = vector.broadcast %cst_133 : f32 to vector<8x1xf32>
    %467 = arith.divf %465, %466 : vector<8x1xf32>
    %468 = arith.mulf %462, %462 : vector<8x1xf32>
    %469 = arith.subf %467, %468 : vector<8x1xf32>
    %cst_134 = arith.constant 0.000000e+00 : f32
    %470 = vector.broadcast %cst_134 : f32 to vector<8x1xf32>
    %471 = arith.maximumf %469, %470 : vector<8x1xf32>
    %472 = vector.broadcast %462 : vector<8x1xf32> to vector<8x32xf32>
    %473 = arith.subf %458, %472 : vector<8x32xf32>
    %cst_135 = arith.constant 9.99999974E-6 : f32
    %474 = vector.broadcast %cst_135 : f32 to vector<8x1xf32>
    %475 = arith.addf %471, %474 : vector<8x1xf32>
    %476 = math.rsqrt %475 : vector<8x1xf32>
    %477 = vector.broadcast %476 : vector<8x1xf32> to vector<8x32xf32>
    %478 = arith.mulf %473, %477 : vector<8x32xf32>
    %479 = vector.broadcast %21 : vector<1x32xf32> to vector<8x32xf32>
    %480 = arith.mulf %478, %479 : vector<8x32xf32>
    %481 = vector.broadcast %23 : vector<1x32xf32> to vector<8x32xf32>
    %482 = arith.addf %480, %481 : vector<8x32xf32>
    %483 = arith.mulf %454, %482 : vector<8x32xf32>
    %c0_136 = arith.constant 0 : index
    %484 = arith.index_cast %413 : i32 to index
    %c0_137 = arith.constant 0 : index
    %485 = vector.load %arg14[%c0_136, %484, %c0_137] : memref<1x64x32xf32, #tpu.memory_space<vmem>>, vector<1x8x32xf32>
    %486 = vector.shape_cast %485 : vector<1x8x32xf32> to vector<8x32xf32>
    %487 = vector.shape_cast %483 : vector<8x32xf32> to vector<1x8x32xf32>
    tpu.vector_store %arg14[%c0_136, %484, %c0_137], %487 {strides = array<i32>} : memref<1x64x32xf32, #tpu.memory_space<vmem>>, vector<1x8x32xf32>,
    %c6_i32 = arith.constant 6 : i32
    %c8_i32_138 = arith.constant 8 : i32
    %488 = arith.muli %c6_i32, %c8_i32_138 : i32
    %489 = tpu.assume_multiple %488, 8 : i32
    %cst_139 = arith.constant dense<0.000000e+00> : vector<8x128xf32>
    %490 = tpu.matmul %483, %13, %cst_139 {dimension_numbers = #tpu.dot_dimension_numbers<[1], [0], [0], [1], [0, 0, 1, 1], [], []>} : vector<8x32xf32>, vector<32x128xf32>, vector<8x128xf32> -> vector<8x128xf32>
    %491 = vector.broadcast %15 : vector<1x128xf32> to vector<8x128xf32>
    %492 = arith.addf %490, %491 : vector<8x128xf32>
    %493 = arith.index_cast %489 : i32 to index
    %c0_140 = arith.constant 0 : index
    %494 = vector.load %arg17[%493, %c0_140] : memref<64x128xf32, #tpu.memory_space<vmem>>, vector<8x128xf32>
    %cst_141 = arith.constant dense<0.000000e+00> : vector<8xf32>
    %495 = vector.multi_reduction <add>, %492, %cst_141 [1] : vector<8x128xf32> to vector<8xf32>
    %496 = vector.shape_cast %495 : vector<8xf32> to vector<8x1xf32>
    %cst_142 = arith.constant 1.280000e+02 : f32
    %497 = vector.broadcast %cst_142 : f32 to vector<8x1xf32>
    %498 = arith.divf %496, %497 : vector<8x1xf32>
    %499 = arith.mulf %492, %492 : vector<8x128xf32>
    %cst_143 = arith.constant dense<0.000000e+00> : vector<8xf32>
    %500 = vector.multi_reduction <add>, %499, %cst_143 [1] : vector<8x128xf32> to vector<8xf32>
    %501 = vector.shape_cast %500 : vector<8xf32> to vector<8x1xf32>
    %cst_144 = arith.constant 1.280000e+02 : f32
    %502 = vector.broadcast %cst_144 : f32 to vector<8x1xf32>
    %503 = arith.divf %501, %502 : vector<8x1xf32>
    %504 = arith.mulf %498, %498 : vector<8x1xf32>
    %505 = arith.subf %503, %504 : vector<8x1xf32>
    %cst_145 = arith.constant 0.000000e+00 : f32
    %506 = vector.broadcast %cst_145 : f32 to vector<8x1xf32>
    %507 = arith.maximumf %505, %506 : vector<8x1xf32>
    %508 = vector.broadcast %498 : vector<8x1xf32> to vector<8x128xf32>
    %509 = arith.subf %492, %508 : vector<8x128xf32>
    %cst_146 = arith.constant 9.99999974E-6 : f32
    %510 = vector.broadcast %cst_146 : f32 to vector<8x1xf32>
    %511 = arith.addf %507, %510 : vector<8x1xf32>
    %512 = math.rsqrt %511 : vector<8x1xf32>
    %513 = vector.broadcast %512 : vector<8x1xf32> to vector<8x128xf32>
    %514 = arith.mulf %509, %513 : vector<8x128xf32>
    %515 = vector.broadcast %17 : vector<1x128xf32> to vector<8x128xf32>
    %516 = arith.mulf %514, %515 : vector<8x128xf32>
    %517 = vector.broadcast %19 : vector<1x128xf32> to vector<8x128xf32>
    %518 = arith.addf %516, %517 : vector<8x128xf32>
    %519 = arith.addf %494, %518 : vector<8x128xf32>
    %520 = math.tanh %519 : vector<8x128xf32>
    %521 = arith.negf %519 : vector<8x128xf32>
    %522 = math.exp %521 : vector<8x128xf32>
    %cst_147 = arith.constant 1.000000e+00 : f32
    %523 = vector.broadcast %cst_147 : f32 to vector<8x128xf32>
    %524 = arith.addf %523, %522 : vector<8x128xf32>
    %525 = arith.divf %523, %524 : vector<8x128xf32>
    %526 = arith.select %29, %520, %525 : vector<8x128xi1>, vector<8x128xf32>
    %527 = vector.extract_strided_slice %526 {offsets = [0, 0], sizes = [8, 32], strides = [1, 1]} : vector<8x128xf32> to vector<8x32xf32>
    %528 = vector.extract_strided_slice %526 {offsets = [0, 32], sizes = [8, 32], strides = [1, 1]} : vector<8x128xf32> to vector<8x32xf32>
    %529 = vector.extract_strided_slice %526 {offsets = [0, 64], sizes = [8, 32], strides = [1, 1]} : vector<8x128xf32> to vector<8x32xf32>
    %530 = vector.extract_strided_slice %526 {offsets = [0, 96], sizes = [8, 32], strides = [1, 1]} : vector<8x128xf32> to vector<8x32xf32>
    %531 = arith.mulf %528, %457 : vector<8x32xf32>
    %532 = arith.mulf %527, %529 : vector<8x32xf32>
    %533 = arith.addf %531, %532 : vector<8x32xf32>
    %534 = math.tanh %533 : vector<8x32xf32>
    %cst_148 = arith.constant dense<0.000000e+00> : vector<8xf32>
    %535 = vector.multi_reduction <add>, %534, %cst_148 [1] : vector<8x32xf32> to vector<8xf32>
    %536 = vector.shape_cast %535 : vector<8xf32> to vector<8x1xf32>
    %cst_149 = arith.constant 3.200000e+01 : f32
    %537 = vector.broadcast %cst_149 : f32 to vector<8x1xf32>
    %538 = arith.divf %536, %537 : vector<8x1xf32>
    %539 = arith.mulf %534, %534 : vector<8x32xf32>
    %cst_150 = arith.constant dense<0.000000e+00> : vector<8xf32>
    %540 = vector.multi_reduction <add>, %539, %cst_150 [1] : vector<8x32xf32> to vector<8xf32>
    %541 = vector.shape_cast %540 : vector<8xf32> to vector<8x1xf32>
    %cst_151 = arith.constant 3.200000e+01 : f32
    %542 = vector.broadcast %cst_151 : f32 to vector<8x1xf32>
    %543 = arith.divf %541, %542 : vector<8x1xf32>
    %544 = arith.mulf %538, %538 : vector<8x1xf32>
    %545 = arith.subf %543, %544 : vector<8x1xf32>
    %cst_152 = arith.constant 0.000000e+00 : f32
    %546 = vector.broadcast %cst_152 : f32 to vector<8x1xf32>
    %547 = arith.maximumf %545, %546 : vector<8x1xf32>
    %548 = vector.broadcast %538 : vector<8x1xf32> to vector<8x32xf32>
    %549 = arith.subf %534, %548 : vector<8x32xf32>
    %cst_153 = arith.constant 9.99999974E-6 : f32
    %550 = vector.broadcast %cst_153 : f32 to vector<8x1xf32>
    %551 = arith.addf %547, %550 : vector<8x1xf32>
    %552 = math.rsqrt %551 : vector<8x1xf32>
    %553 = vector.broadcast %552 : vector<8x1xf32> to vector<8x32xf32>
    %554 = arith.mulf %549, %553 : vector<8x32xf32>
    %555 = vector.broadcast %21 : vector<1x32xf32> to vector<8x32xf32>
    %556 = arith.mulf %554, %555 : vector<8x32xf32>
    %557 = vector.broadcast %23 : vector<1x32xf32> to vector<8x32xf32>
    %558 = arith.addf %556, %557 : vector<8x32xf32>
    %559 = arith.mulf %530, %558 : vector<8x32xf32>
    %c0_154 = arith.constant 0 : index
    %560 = arith.index_cast %489 : i32 to index
    %c0_155 = arith.constant 0 : index
    %561 = vector.load %arg14[%c0_154, %560, %c0_155] : memref<1x64x32xf32, #tpu.memory_space<vmem>>, vector<1x8x32xf32>
    %562 = vector.shape_cast %561 : vector<1x8x32xf32> to vector<8x32xf32>
    %563 = vector.shape_cast %559 : vector<8x32xf32> to vector<1x8x32xf32>
    tpu.vector_store %arg14[%c0_154, %560, %c0_155], %563 {strides = array<i32>} : memref<1x64x32xf32, #tpu.memory_space<vmem>>, vector<1x8x32xf32>,
    %c7_i32 = arith.constant 7 : i32
    %c8_i32_156 = arith.constant 8 : i32
    %564 = arith.muli %c7_i32, %c8_i32_156 : i32
    %565 = tpu.assume_multiple %564, 8 : i32
    %cst_157 = arith.constant dense<0.000000e+00> : vector<8x128xf32>
    %566 = tpu.matmul %559, %13, %cst_157 {dimension_numbers = #tpu.dot_dimension_numbers<[1], [0], [0], [1], [0, 0, 1, 1], [], []>} : vector<8x32xf32>, vector<32x128xf32>, vector<8x128xf32> -> vector<8x128xf32>
    %567 = vector.broadcast %15 : vector<1x128xf32> to vector<8x128xf32>
    %568 = arith.addf %566, %567 : vector<8x128xf32>
    %569 = arith.index_cast %565 : i32 to index
    %c0_158 = arith.constant 0 : index
    %570 = vector.load %arg17[%569, %c0_158] : memref<64x128xf32, #tpu.memory_space<vmem>>, vector<8x128xf32>
    %cst_159 = arith.constant dense<0.000000e+00> : vector<8xf32>
    %571 = vector.multi_reduction <add>, %568, %cst_159 [1] : vector<8x128xf32> to vector<8xf32>
    %572 = vector.shape_cast %571 : vector<8xf32> to vector<8x1xf32>
    %cst_160 = arith.constant 1.280000e+02 : f32
    %573 = vector.broadcast %cst_160 : f32 to vector<8x1xf32>
    %574 = arith.divf %572, %573 : vector<8x1xf32>
    %575 = arith.mulf %568, %568 : vector<8x128xf32>
    %cst_161 = arith.constant dense<0.000000e+00> : vector<8xf32>
    %576 = vector.multi_reduction <add>, %575, %cst_161 [1] : vector<8x128xf32> to vector<8xf32>
    %577 = vector.shape_cast %576 : vector<8xf32> to vector<8x1xf32>
    %cst_162 = arith.constant 1.280000e+02 : f32
    %578 = vector.broadcast %cst_162 : f32 to vector<8x1xf32>
    %579 = arith.divf %577, %578 : vector<8x1xf32>
    %580 = arith.mulf %574, %574 : vector<8x1xf32>
    %581 = arith.subf %579, %580 : vector<8x1xf32>
    %cst_163 = arith.constant 0.000000e+00 : f32
    %582 = vector.broadcast %cst_163 : f32 to vector<8x1xf32>
    %583 = arith.maximumf %581, %582 : vector<8x1xf32>
    %584 = vector.broadcast %574 : vector<8x1xf32> to vector<8x128xf32>
    %585 = arith.subf %568, %584 : vector<8x128xf32>
    %cst_164 = arith.constant 9.99999974E-6 : f32
    %586 = vector.broadcast %cst_164 : f32 to vector<8x1xf32>
    %587 = arith.addf %583, %586 : vector<8x1xf32>
    %588 = math.rsqrt %587 : vector<8x1xf32>
    %589 = vector.broadcast %588 : vector<8x1xf32> to vector<8x128xf32>
    %590 = arith.mulf %585, %589 : vector<8x128xf32>
    %591 = vector.broadcast %17 : vector<1x128xf32> to vector<8x128xf32>
    %592 = arith.mulf %590, %591 : vector<8x128xf32>
    %593 = vector.broadcast %19 : vector<1x128xf32> to vector<8x128xf32>
    %594 = arith.addf %592, %593 : vector<8x128xf32>
    %595 = arith.addf %570, %594 : vector<8x128xf32>
    %596 = math.tanh %595 : vector<8x128xf32>
    %597 = arith.negf %595 : vector<8x128xf32>
    %598 = math.exp %597 : vector<8x128xf32>
    %cst_165 = arith.constant 1.000000e+00 : f32
    %599 = vector.broadcast %cst_165 : f32 to vector<8x128xf32>
    %600 = arith.addf %599, %598 : vector<8x128xf32>
    %601 = arith.divf %599, %600 : vector<8x128xf32>
    %602 = arith.select %29, %596, %601 : vector<8x128xi1>, vector<8x128xf32>
    %603 = vector.extract_strided_slice %602 {offsets = [0, 0], sizes = [8, 32], strides = [1, 1]} : vector<8x128xf32> to vector<8x32xf32>
    %604 = vector.extract_strided_slice %602 {offsets = [0, 32], sizes = [8, 32], strides = [1, 1]} : vector<8x128xf32> to vector<8x32xf32>
    %605 = vector.extract_strided_slice %602 {offsets = [0, 64], sizes = [8, 32], strides = [1, 1]} : vector<8x128xf32> to vector<8x32xf32>
    %606 = vector.extract_strided_slice %602 {offsets = [0, 96], sizes = [8, 32], strides = [1, 1]} : vector<8x128xf32> to vector<8x32xf32>
    %607 = arith.mulf %604, %533 : vector<8x32xf32>
    %608 = arith.mulf %603, %605 : vector<8x32xf32>
    %609 = arith.addf %607, %608 : vector<8x32xf32>
    %610 = math.tanh %609 : vector<8x32xf32>
    %cst_166 = arith.constant dense<0.000000e+00> : vector<8xf32>
    %611 = vector.multi_reduction <add>, %610, %cst_166 [1] : vector<8x32xf32> to vector<8xf32>
    %612 = vector.shape_cast %611 : vector<8xf32> to vector<8x1xf32>
    %cst_167 = arith.constant 3.200000e+01 : f32
    %613 = vector.broadcast %cst_167 : f32 to vector<8x1xf32>
    %614 = arith.divf %612, %613 : vector<8x1xf32>
    %615 = arith.mulf %610, %610 : vector<8x32xf32>
    %cst_168 = arith.constant dense<0.000000e+00> : vector<8xf32>
    %616 = vector.multi_reduction <add>, %615, %cst_168 [1] : vector<8x32xf32> to vector<8xf32>
    %617 = vector.shape_cast %616 : vector<8xf32> to vector<8x1xf32>
    %cst_169 = arith.constant 3.200000e+01 : f32
    %618 = vector.broadcast %cst_169 : f32 to vector<8x1xf32>
    %619 = arith.divf %617, %618 : vector<8x1xf32>
    %620 = arith.mulf %614, %614 : vector<8x1xf32>
    %621 = arith.subf %619, %620 : vector<8x1xf32>
    %cst_170 = arith.constant 0.000000e+00 : f32
    %622 = vector.broadcast %cst_170 : f32 to vector<8x1xf32>
    %623 = arith.maximumf %621, %622 : vector<8x1xf32>
    %624 = vector.broadcast %614 : vector<8x1xf32> to vector<8x32xf32>
    %625 = arith.subf %610, %624 : vector<8x32xf32>
    %cst_171 = arith.constant 9.99999974E-6 : f32
    %626 = vector.broadcast %cst_171 : f32 to vector<8x1xf32>
    %627 = arith.addf %623, %626 : vector<8x1xf32>
    %628 = math.rsqrt %627 : vector<8x1xf32>
    %629 = vector.broadcast %628 : vector<8x1xf32> to vector<8x32xf32>
    %630 = arith.mulf %625, %629 : vector<8x32xf32>
    %631 = vector.broadcast %21 : vector<1x32xf32> to vector<8x32xf32>
    %632 = arith.mulf %630, %631 : vector<8x32xf32>
    %633 = vector.broadcast %23 : vector<1x32xf32> to vector<8x32xf32>
    %634 = arith.addf %632, %633 : vector<8x32xf32>
    %635 = arith.mulf %606, %634 : vector<8x32xf32>
    %c0_172 = arith.constant 0 : index
    %636 = arith.index_cast %565 : i32 to index
    %c0_173 = arith.constant 0 : index
    %637 = vector.load %arg14[%c0_172, %636, %c0_173] : memref<1x64x32xf32, #tpu.memory_space<vmem>>, vector<1x8x32xf32>
    %638 = vector.shape_cast %637 : vector<1x8x32xf32> to vector<8x32xf32>
    %639 = vector.shape_cast %635 : vector<8x32xf32> to vector<1x8x32xf32>
    tpu.vector_store %arg14[%c0_172, %636, %c0_173], %639 {strides = array<i32>} : memref<1x64x32xf32, #tpu.memory_space<vmem>>, vector<1x8x32xf32>,
    %c8_i32_174 = arith.constant 8 : i32
    %c0_175 = arith.constant 0 : index
    %c0_176 = arith.constant 0 : index
    %c0_177 = arith.constant 0 : index
    %c0_178 = arith.constant 0 : index
    %640 = vector.load %arg15[%c0_175, %c0_176, %c0_177, %c0_178] : memref<1x1x8x32xf32, #tpu.memory_space<vmem>>, vector<1x1x8x32xf32>
    %641 = vector.shape_cast %640 : vector<1x1x8x32xf32> to vector<8x32xf32>
    %642 = vector.shape_cast %635 : vector<8x32xf32> to vector<1x1x8x32xf32>
    tpu.vector_store %arg15[%c0_175, %c0_176, %c0_177, %c0_178], %642 {strides = array<i32>} : memref<1x1x8x32xf32, #tpu.memory_space<vmem>>, vector<1x1x8x32xf32>,
    %c0_179 = arith.constant 0 : index
    %c0_180 = arith.constant 0 : index
    %c0_181 = arith.constant 0 : index
    %c0_182 = arith.constant 0 : index
    %643 = vector.load %arg16[%c0_179, %c0_180, %c0_181, %c0_182] : memref<1x1x8x32xf32, #tpu.memory_space<vmem>>, vector<1x1x8x32xf32>
    %644 = vector.shape_cast %643 : vector<1x1x8x32xf32> to vector<8x32xf32>
    %645 = vector.shape_cast %609 : vector<8x32xf32> to vector<1x1x8x32xf32>
    tpu.vector_store %arg16[%c0_179, %c0_180, %c0_181, %c0_182], %645 {strides = array<i32>} : memref<1x1x8x32xf32, #tpu.memory_space<vmem>>, vector<1x1x8x32xf32>,
    return
  }
  func.func @transform_0(%arg0: i32, %arg1: i32) -> (i32, i32, i32) {
    %c0_i32 = arith.constant 0 : i32
    %c0_i32_0 = arith.constant 0 : i32
    %c0_i32_1 = arith.constant 0 : i32
    return %arg0, %c0_i32, %c0_i32_0 : i32, i32, i32
  }
  func.func @transform_1(%arg0: i32, %arg1: i32) -> (i32, i32) {
    %c0_i32 = arith.constant 0 : i32
    %c0_i32_0 = arith.constant 0 : i32
    %c0_i32_1 = arith.constant 0 : i32
    return %c0_i32, %c0_i32_0 : i32, i32
  }
  func.func @transform_2(%arg0: i32, %arg1: i32) -> (i32, i32, i32) {
    %c1_i32 = arith.constant 1 : i32
    %0 = arith.subi %arg1, %c1_i32 : i32
    %c0_i32 = arith.constant 0 : i32
    %1 = arith.maxsi %0, %c0_i32 : i32
    %c0_i32_0 = arith.constant 0 : i32
    %c0_i32_1 = arith.constant 0 : i32
    %c0_i32_2 = arith.constant 0 : i32
    return %1, %c0_i32_0, %c0_i32_1 : i32, i32, i32
  }
  func.func @transform_3(%arg0: i32, %arg1: i32) -> (i32, i32, i32) {
    %c0_i32 = arith.constant 0 : i32
    %c0_i32_0 = arith.constant 0 : i32
    %c0_i32_1 = arith.constant 0 : i32
    return %arg1, %c0_i32, %c0_i32_0 : i32, i32, i32
  }
  func.func @transform_4(%arg0: i32, %arg1: i32) -> (i32, i32, i32) {
    %c0_i32 = arith.constant 0 : i32
    %c0_i32_0 = arith.constant 0 : i32
    %c0_i32_1 = arith.constant 0 : i32
    return %arg1, %c0_i32, %c0_i32_0 : i32, i32, i32
  }
  func.func @transform_5(%arg0: i32, %arg1: i32) -> (i32, i32, i32) {
    %c0_i32 = arith.constant 0 : i32
    %c0_i32_0 = arith.constant 0 : i32
    %c0_i32_1 = arith.constant 0 : i32
    return %arg1, %c0_i32, %c0_i32_0 : i32, i32, i32
  }
  func.func @transform_6(%arg0: i32, %arg1: i32) -> (i32, i32, i32) {
    %c0_i32 = arith.constant 0 : i32
    %c0_i32_0 = arith.constant 0 : i32
    %c0_i32_1 = arith.constant 0 : i32
    return %arg1, %c0_i32, %c0_i32_0 : i32, i32, i32
  }
  func.func @transform_7(%arg0: i32, %arg1: i32) -> (i32, i32, i32) {
    %c0_i32 = arith.constant 0 : i32
    %c0_i32_0 = arith.constant 0 : i32
    %c0_i32_1 = arith.constant 0 : i32
    return %arg1, %c0_i32, %c0_i32_0 : i32, i32, i32
  }
  func.func @transform_8(%arg0: i32, %arg1: i32) -> (i32, i32, i32) {
    %c0_i32 = arith.constant 0 : i32
    %c0_i32_0 = arith.constant 0 : i32
    %c0_i32_1 = arith.constant 0 : i32
    return %arg1, %c0_i32, %c0_i32_0 : i32, i32, i32
  }
  func.func @transform_9(%arg0: i32, %arg1: i32) -> (i32, i32, i32) {
    %c0_i32 = arith.constant 0 : i32
    %c0_i32_0 = arith.constant 0 : i32
    %c0_i32_1 = arith.constant 0 : i32
    return %arg1, %c0_i32, %c0_i32_0 : i32, i32, i32
  }
  func.func @transform_10(%arg0: i32, %arg1: i32) -> (i32, i32, i32) {
    %c0_i32 = arith.constant 0 : i32
    %c0_i32_0 = arith.constant 0 : i32
    %c0_i32_1 = arith.constant 0 : i32
    return %arg1, %c0_i32, %c0_i32_0 : i32, i32, i32
  }
  func.func @transform_11(%arg0: i32, %arg1: i32) -> (i32, i32, i32) {
    %c0_i32 = arith.constant 0 : i32
    %c0_i32_0 = arith.constant 0 : i32
    %c0_i32_1 = arith.constant 0 : i32
    return %arg1, %c0_i32, %c0_i32_0 : i32, i32, i32
  }
  func.func @transform_12(%arg0: i32, %arg1: i32) -> (i32, i32, i32) {
    %c0_i32 = arith.constant 0 : i32
    %c0_i32_0 = arith.constant 0 : i32
    %c0_i32_1 = arith.constant 0 : i32
    return %arg0, %c0_i32, %c0_i32_0 : i32, i32, i32
  }
  func.func @transform_13(%arg0: i32, %arg1: i32) -> (i32, i32, i32, i32) {
    %c0_i32 = arith.constant 0 : i32
    %c0_i32_0 = arith.constant 0 : i32
    %c0_i32_1 = arith.constant 0 : i32
    return %arg1, %arg0, %c0_i32, %c0_i32_0 : i32, i32, i32, i32
  }
  func.func @transform_14(%arg0: i32, %arg1: i32) -> (i32, i32, i32, i32) {
    %c0_i32 = arith.constant 0 : i32
    %c0_i32_0 = arith.constant 0 : i32
    %c0_i32_1 = arith.constant 0 : i32
    return %arg1, %arg0, %c0_i32, %c0_i32_0 : i32, i32, i32, i32
  }
}

</mosaic_0001>

<llo_original>
// kernel: tpu_custom_call.1
$region0: #{tpu_custom_call.1}
  #allocation0 [shape = 'u32[]', space=smem, size = 0x4, offset = 0x4, fixed_abs, tag = 'smem constant byte address 0x4 - core index']
  #allocation1 [shape = 'u32[72,128]{1,0:T(1,128)}', space=vmem, size = 0x9000, scoped, tag = 'internal scratch']
  #allocation2 [shape = 'f32[64,128]{1,0:T(8,128)}', space=vmem, size = 0x8000, scoped, tag = 'scratch operand']
  %s0 = inlined_call_operand.vmem [shape: f32[1,64,16], index: 0, kind: input, shape index: {}]
  %s1 = inlined_call_operand.vmem [shape: f32[16,128], index: 1, kind: input, shape index: {}]
  %s2 = inlined_call_operand.hbm [shape: f32[1,32,128], index: 2, kind: input, shape index: {}]
  %s3 = inlined_call_operand.vmem [shape: f32[2,1,128], index: 3, kind: input, shape index: {}]
  %s4 = inlined_call_operand.vmem [shape: f32[2,1,128], index: 4, kind: input, shape index: {}]
  %s5 = inlined_call_operand.hbm [shape: f32[2,1,128], index: 5, kind: input, shape index: {}]
  %s6 = inlined_call_operand.vmem [shape: f32[2,32,128], index: 6, kind: input, shape index: {}]
  %s7 = inlined_call_operand.vmem [shape: f32[2,1,128], index: 7, kind: input, shape index: {}]
  %s8 = inlined_call_operand.hbm [shape: f32[2,1,128], index: 8, kind: input, shape index: {}]
  %s9 = inlined_call_operand.vmem [shape: f32[2,1,128], index: 9, kind: input, shape index: {}]
  %s10 = inlined_call_operand.hbm [shape: f32[2,1,32], index: 10, kind: input, shape index: {}]
  %s11 = inlined_call_operand.vmem [shape: f32[2,1,32], index: 11, kind: input, shape index: {}]
  %s12 = inlined_call_operand.vmem [shape: f32[1,64,32], index: 12, kind: output, shape index: {0}]
  %s13 = inlined_call_operand.hbm [shape: f32[2,1,8,32], index: 13, kind: output, shape index: {1}]
  %s14 = inlined_call_operand.hbm [shape: f32[2,1,8,32], index: 14, kind: output, shape index: {2}]
  %15 = xla_tuple %s12, %s13, %s14
  %s16 = sld [smem:[#allocation0]]
  $region121: #{tpu_custom_call.1} parent=0
    _
  %s18 = ssub.s32 1, %s16
  %s19 = scalar_select 0, %s18, %s16
  $region1: #{tpu_custom_call.1} parent=0
    #allocation3 [shape = 'u8[32768]{0}', space=vmem, size = 0x8000, scoped, tag = 'input window, operand 2']
    #allocation4 [shape = 's32[2]{0}', space=sflag, size = 0x8, scoped, tag = 'scoped memory for tpu_custom_call.1']
    #allocation5 [shape = 's32[2]{0}', space=sflag, size = 0x8, scoped, tag = 'scoped memory for tpu_custom_call.1']
    #allocation6 [shape = 'u8[1024]{0}', space=vmem, size = 0x400, scoped, tag = 'input window, operand 5']
    #allocation7 [shape = 's32[2]{0}', space=sflag, size = 0x8, scoped, tag = 'scoped memory for tpu_custom_call.1']
    #allocation8 [shape = 'u8[1024]{0}', space=vmem, size = 0x400, scoped, tag = 'input window, operand 8']
    #allocation9 [shape = 'u8[1024]{0}', space=vmem, size = 0x400, scoped, tag = 'input window, operand 10']
    #allocation10 [shape = 's32[2]{0}', space=sflag, size = 0x8, scoped, tag = 'scoped memory for tpu_custom_call.1']
    #allocation11 [shape = 'u8[8192]{0}', space=vmem, size = 0x2000, scoped, tag = 'output window, operand 1']
    #allocation12 [shape = 'u8[8192]{0}', space=vmem, size = 0x2000, scoped, tag = 'output window, operand 2']
    #allocation13 [shape = 's32[2]{0}', space=sflag, size = 0x8, scoped, tag = 'scoped memory for tpu_custom_call.1']
    %20 = vsyncpa [#allocation4], 0
    %s21 = scalar_lea.sflag [#allocation4], 1
    %22 = vsyncpa %s21, 0
    %23 = vsyncpa [#allocation7], 0
    %s24 = scalar_lea.sflag [#allocation7], 1
    %25 = vsyncpa %s24, 0
    %26 = vsyncpa [#allocation10], 0
    %s27 = scalar_lea.sflag [#allocation10], 1
    %28 = vsyncpa %s27, 0
    %29 = vsyncpa [#allocation5], 0
    %s30 = scalar_lea.sflag [#allocation5], 1
    %31 = vsyncpa %s30, 0
    %32 = vsyncpa [#allocation13], 0
    %s33 = scalar_lea.sflag [#allocation13], 1
    %34 = vsyncpa %s33, 0
    loop: start=0, step=1, limit=4
    $region2: #{tpu_custom_call.1} parent=1 // loop_pre_header
      _
    $region3: #{tpu_custom_call.1} parent=1 // loop_header
      %s36 = sphi 0, %s40
      %p37 = scmp.ge.s32.totalorder %s36, 4
      %s43 = sphi 0, %s55
      %s44 = sphi 0, %s51
      %s45 = sphi 0, %s43
      %s46 = sphi 0, %s44
      %s47 = sphi 0, %s45
      %s48 = sphi 0, %s46
      %s58 = sphi 0, %s60
      %s61 = sphi 0, %s58
      %s62 = sphi 0, %s61
      %s78 = sphi 0, %s62
      %s82 = sphi 0, %s82
      %s84 = sphi 0, %s82
      %s85 = sphi 0, %s84
      %s99 = sphi 0, %s85
      %s111 = sphi 0, %s113
      %s114 = sphi 0, %s111
      %s115 = sphi 0, %s114
      %s131 = sphi 0, %s115
      %s137 = sphi 0, %s139
      %s140 = sphi 0, %s137
      %s141 = sphi 0, %s140
      %s157 = sphi 0, %s141
      %s163 = sphi 0, %s165
      %s166 = sphi 0, %s163
      %s167 = sphi 0, %s166
      %s183 = sphi 0, %s167
      %s189 = sphi 0, %s191
      %s192 = sphi 0, %s189
      %s193 = sphi 0, %s192
      %s209 = sphi 0, %s193
      %s215 = sphi 0, %s217
      %s218 = sphi 0, %s215
      %s219 = sphi 0, %s218
      %s235 = sphi 0, %s219
      %s241 = sphi 0, %s243
      %s244 = sphi 0, %s241
      %s245 = sphi 0, %s244
      %s261 = sphi 0, %s245
      %s267 = sphi 0, %s269
      %s270 = sphi 0, %s267
      %s271 = sphi 0, %s270
      %s287 = sphi 0, %s271
      %s293 = sphi 0, %s295
      %s296 = sphi 0, %s293
      %s297 = sphi 0, %s296
      %s313 = sphi 0, %s297
      %s319 = sphi 0, %s321
      %s322 = sphi 0, %s319
      %s323 = sphi 0, %s322
      %s339 = sphi 0, %s323
      %s345 = sphi 0, %s347
      %s348 = sphi 0, %s345
      %s349 = sphi 0, %s348
      %s365 = sphi 0, %s349
      %s371 = sphi 0, %s373
      %s374 = sphi 0, %s371
      %s375 = sphi 0, %s374
      %s391 = sphi 0, %s375
      %s399 = sphi 0, %s401
      %s402 = sphi 0, %s399
      %s403 = sphi 0, %s402
      %s419 = sphi 0, %s403
      %s427 = sphi 0, %s429
      %s430 = sphi 0, %s427
      %s431 = sphi 0, %s430
      %s447 = sphi 0, %s431
    $region4: #{tpu_custom_call.1} parent=1 // loop_header_branch
      %39 = sbr.rel (%p37) target = $region8
    $region5: #{tpu_custom_call.1} parent=1 // loop_body
      %s41 = ssub.s32 %s36, 1
      %s42 = ssub.s32 %s36, 2
      %s49 = sadd.s32 1, %s44
      %p50 = scmp.ge.s32.totalorder %s49, 2
      %s51 = scalar_select %p50, 0, %s49
      %s52 = sadd.s32 1, %s43
      %s53 = scalar_select %p50, %s52, %s43
      %p54 = scmp.ge.s32.totalorder %s53, 1
      %s55 = scalar_select %p54, 0, %s53
      %s56 = ssub.s32 %s43, %s55
      %p57 = scmp.eq.s32.totalorder %s56, 0
      %s59 = sadd.s32 %s58, 1
      %s60 = scalar_select %p57, %s58, %s59
      %p63 = pneg %p57
      %p64 = scmp.eq.s32.totalorder %s36, 1
      %p65 = por %p63, %p64
      %p66 = scmp.ne.s32.totalorder %s58, %s61
      %p67 = scmp.eq.s32.totalorder %s36, 0
      %p68 = por %p66, %p67
      %p69 = scmp.ne.s32.totalorder %s58, %s61
      %p70 = scmp.eq.s32.totalorder %s41, 1
      %p71 = por %p69, %p70
      %p72 = scmp.ne.s32.totalorder %s61, %s62
      %p73 = scmp.eq.s32.totalorder %s41, 0
      %p74 = por %p72, %p73
      %p75 = scmp.ne.s32.totalorder %s61, %s62
      %p76 = scmp.eq.s32.totalorder %s42, 1
      %p77 = por %p75, %p76
      %p79 = scmp.ne.s32.totalorder %s62, %s78
      %p80 = scmp.eq.s32.totalorder %s42, 0
      %p81 = por %p79, %p80
      %s83 = sadd.s32 %s82, 1
      %p86 = scmp.eq.s32.totalorder %s36, 1
      %p87 = scmp.ne.s32.totalorder %s82, %s84
      %p88 = scmp.eq.s32.totalorder %s36, 0
      %p89 = por %p87, %p88
      %p90 = scmp.ne.s32.totalorder %s82, %s84
      %p91 = scmp.eq.s32.totalorder %s41, 1
      %p92 = por %p90, %p91
      %p93 = scmp.ne.s32.totalorder %s84, %s85
      %p94 = scmp.eq.s32.totalorder %s41, 0
      %p95 = por %p93, %p94
      %p96 = scmp.ne.s32.totalorder %s84, %s85
      %p97 = scmp.eq.s32.totalorder %s42, 1
      %p98 = por %p96, %p97
      %p100 = scmp.ne.s32.totalorder %s85, %s99
      %p101 = scmp.eq.s32.totalorder %s42, 0
      %p102 = por %p100, %p101
      %s103 = ssub.s32 %s44, 1
      %p104 = scmp.gt.s32.totalorder %s103, 0
      %s105 = scalar_select %p104, %s103, 0
      %s106 = ssub.s32 %s51, 1
      %p107 = scmp.gt.s32.totalorder %s106, 0
      %s108 = scalar_select %p107, %s106, 0
      %s109 = ssub.s32 %s105, %s108
      %p110 = scmp.eq.s32.totalorder %s109, 0
      %s112 = sadd.s32 %s111, 1
      %s113 = scalar_select %p110, %s111, %s112
      %p116 = pneg %p110
      %p117 = scmp.eq.s32.totalorder %s36, 1
      %p118 = por %p116, %p117
      %p119 = scmp.ne.s32.totalorder %s111, %s114
      %p120 = scmp.eq.s32.totalorder %s36, 0
      %p121 = por %p119, %p120
      %p122 = scmp.ne.s32.totalorder %s111, %s114
      %p123 = scmp.eq.s32.totalorder %s41, 1
      %p124 = por %p122, %p123
      %p125 = scmp.ne.s32.totalorder %s114, %s115
      %p126 = scmp.eq.s32.totalorder %s41, 0
      %p127 = por %p125, %p126
      %p128 = scmp.ne.s32.totalorder %s114, %s115
      %p129 = scmp.eq.s32.totalorder %s42, 1
      %p130 = por %p128, %p129
      %p132 = scmp.ne.s32.totalorder %s115, %s131
      %p133 = scmp.eq.s32.totalorder %s42, 0
      %p134 = por %p132, %p133
      %s135 = ssub.s32 %s44, %s51
      %p136 = scmp.eq.s32.totalorder %s135, 0
      %s138 = sadd.s32 %s137, 1
      %s139 = scalar_select %p136, %s137, %s138
      %p142 = pneg %p136
      %p143 = scmp.eq.s32.totalorder %s36, 1
      %p144 = por %p142, %p143
      %p145 = scmp.ne.s32.totalorder %s137, %s140
      %p146 = scmp.eq.s32.totalorder %s36, 0
      %p147 = por %p145, %p146
      %p148 = scmp.ne.s32.totalorder %s137, %s140
      %p149 = scmp.eq.s32.totalorder %s41, 1
      %p150 = por %p148, %p149
      %p151 = scmp.ne.s32.totalorder %s140, %s141
      %p152 = scmp.eq.s32.totalorder %s41, 0
      %p153 = por %p151, %p152
      %p154 = scmp.ne.s32.totalorder %s140, %s141
      %p155 = scmp.eq.s32.totalorder %s42, 1
      %p156 = por %p154, %p155
      %p158 = scmp.ne.s32.totalorder %s141, %s157
      %p159 = scmp.eq.s32.totalorder %s42, 0
      %p160 = por %p158, %p159
      %s161 = ssub.s32 %s44, %s51
      %p162 = scmp.eq.s32.totalorder %s161, 0
      %s164 = sadd.s32 %s163, 1
      %s165 = scalar_select %p162, %s163, %s164
      %p168 = pneg %p162
      %p169 = scmp.eq.s32.totalorder %s36, 1
      %p170 = por %p168, %p169
      %p171 = scmp.ne.s32.totalorder %s163, %s166
      %p172 = scmp.eq.s32.totalorder %s36, 0
      %p173 = por %p171, %p172
      %p174 = scmp.ne.s32.totalorder %s163, %s166
      %p175 = scmp.eq.s32.totalorder %s41, 1
      %p176 = por %p174, %p175
      %p177 = scmp.ne.s32.totalorder %s166, %s167
      %p178 = scmp.eq.s32.totalorder %s41, 0
      %p179 = por %p177, %p178
      %p180 = scmp.ne.s32.totalorder %s166, %s167
      %p181 = scmp.eq.s32.totalorder %s42, 1
      %p182 = por %p180, %p181
      %p184 = scmp.ne.s32.totalorder %s167, %s183
      %p185 = scmp.eq.s32.totalorder %s42, 0
      %p186 = por %p184, %p185
      %s187 = ssub.s32 %s44, %s51
      %p188 = scmp.eq.s32.totalorder %s187, 0
      %s190 = sadd.s32 %s189, 1
      %s191 = scalar_select %p188, %s189, %s190
      %p194 = pneg %p188
      %p195 = scmp.eq.s32.totalorder %s36, 1
      %p196 = por %p194, %p195
      %p197 = scmp.ne.s32.totalorder %s189, %s192
      %p198 = scmp.eq.s32.totalorder %s36, 0
      %p199 = por %p197, %p198
      %p200 = scmp.ne.s32.totalorder %s189, %s192
      %p201 = scmp.eq.s32.totalorder %s41, 1
      %p202 = por %p200, %p201
      %p203 = scmp.ne.s32.totalorder %s192, %s193
      %p204 = scmp.eq.s32.totalorder %s41, 0
      %p205 = por %p203, %p204
      %p206 = scmp.ne.s32.totalorder %s192, %s193
      %p207 = scmp.eq.s32.totalorder %s42, 1
      %p208 = por %p206, %p207
      %p210 = scmp.ne.s32.totalorder %s193, %s209
      %p211 = scmp.eq.s32.totalorder %s42, 0
      %p212 = por %p210, %p211
      %s213 = ssub.s32 %s44, %s51
      %p214 = scmp.eq.s32.totalorder %s213, 0
      %s216 = sadd.s32 %s215, 1
      %s217 = scalar_select %p214, %s215, %s216
      %p220 = pneg %p214
      %p221 = scmp.eq.s32.totalorder %s36, 1
      %p222 = por %p220, %p221
      %p223 = scmp.ne.s32.totalorder %s215, %s218
      %p224 = scmp.eq.s32.totalorder %s36, 0
      %p225 = por %p223, %p224
      %p226 = scmp.ne.s32.totalorder %s215, %s218
      %p227 = scmp.eq.s32.totalorder %s41, 1
      %p228 = por %p226, %p227
      %p229 = scmp.ne.s32.totalorder %s218, %s219
      %p230 = scmp.eq.s32.totalorder %s41, 0
      %p231 = por %p229, %p230
      %p232 = scmp.ne.s32.totalorder %s218, %s219
      %p233 = scmp.eq.s32.totalorder %s42, 1
      %p234 = por %p232, %p233
      %p236 = scmp.ne.s32.totalorder %s219, %s235
      %p237 = scmp.eq.s32.totalorder %s42, 0
      %p238 = por %p236, %p237
      %s239 = ssub.s32 %s44, %s51
      %p240 = scmp.eq.s32.totalorder %s239, 0
      %s242 = sadd.s32 %s241, 1
      %s243 = scalar_select %p240, %s241, %s242
      %p246 = pneg %p240
      %p247 = scmp.eq.s32.totalorder %s36, 1
      %p248 = por %p246, %p247
      %p249 = scmp.ne.s32.totalorder %s241, %s244
      %p250 = scmp.eq.s32.totalorder %s36, 0
      %p251 = por %p249, %p250
      %p252 = scmp.ne.s32.totalorder %s241, %s244
      %p253 = scmp.eq.s32.totalorder %s41, 1
      %p254 = por %p252, %p253
      %p255 = scmp.ne.s32.totalorder %s244, %s245
      %p256 = scmp.eq.s32.totalorder %s41, 0
      %p257 = por %p255, %p256
      %p258 = scmp.ne.s32.totalorder %s244, %s245
      %p259 = scmp.eq.s32.totalorder %s42, 1
      %p260 = por %p258, %p259
      %p262 = scmp.ne.s32.totalorder %s245, %s261
      %p263 = scmp.eq.s32.totalorder %s42, 0
      %p264 = por %p262, %p263
      %s265 = ssub.s32 %s44, %s51
      %p266 = scmp.eq.s32.totalorder %s265, 0
      %s268 = sadd.s32 %s267, 1
      %s269 = scalar_select %p266, %s267, %s268
      %p272 = pneg %p266
      %p273 = scmp.eq.s32.totalorder %s36, 1
      %p274 = por %p272, %p273
      %p275 = scmp.ne.s32.totalorder %s267, %s270
      %p276 = scmp.eq.s32.totalorder %s36, 0
      %p277 = por %p275, %p276
      %p278 = scmp.ne.s32.totalorder %s267, %s270
      %p279 = scmp.eq.s32.totalorder %s41, 1
      %p280 = por %p278, %p279
      %p281 = scmp.ne.s32.totalorder %s270, %s271
      %p282 = scmp.eq.s32.totalorder %s41, 0
      %p283 = por %p281, %p282
      %p284 = scmp.ne.s32.totalorder %s270, %s271
      %p285 = scmp.eq.s32.totalorder %s42, 1
      %p286 = por %p284, %p285
      %p288 = scmp.ne.s32.totalorder %s271, %s287
      %p289 = scmp.eq.s32.totalorder %s42, 0
      %p290 = por %p288, %p289
      %s291 = ssub.s32 %s44, %s51
      %p292 = scmp.eq.s32.totalorder %s291, 0
      %s294 = sadd.s32 %s293, 1
      %s295 = scalar_select %p292, %s293, %s294
      %p298 = pneg %p292
      %p299 = scmp.eq.s32.totalorder %s36, 1
      %p300 = por %p298, %p299
      %p301 = scmp.ne.s32.totalorder %s293, %s296
      %p302 = scmp.eq.s32.totalorder %s36, 0
      %p303 = por %p301, %p302
      %p304 = scmp.ne.s32.totalorder %s293, %s296
      %p305 = scmp.eq.s32.totalorder %s41, 1
      %p306 = por %p304, %p305
      %p307 = scmp.ne.s32.totalorder %s296, %s297
      %p308 = scmp.eq.s32.totalorder %s41, 0
      %p309 = por %p307, %p308
      %p310 = scmp.ne.s32.totalorder %s296, %s297
      %p311 = scmp.eq.s32.totalorder %s42, 1
      %p312 = por %p310, %p311
      %p314 = scmp.ne.s32.totalorder %s297, %s313
      %p315 = scmp.eq.s32.totalorder %s42, 0
      %p316 = por %p314, %p315
      %s317 = ssub.s32 %s44, %s51
      %p318 = scmp.eq.s32.totalorder %s317, 0
      %s320 = sadd.s32 %s319, 1
      %s321 = scalar_select %p318, %s319, %s320
      %p324 = pneg %p318
      %p325 = scmp.eq.s32.totalorder %s36, 1
      %p326 = por %p324, %p325
      %p327 = scmp.ne.s32.totalorder %s319, %s322
      %p328 = scmp.eq.s32.totalorder %s36, 0
      %p329 = por %p327, %p328
      %p330 = scmp.ne.s32.totalorder %s319, %s322
      %p331 = scmp.eq.s32.totalorder %s41, 1
      %p332 = por %p330, %p331
      %p333 = scmp.ne.s32.totalorder %s322, %s323
      %p334 = scmp.eq.s32.totalorder %s41, 0
      %p335 = por %p333, %p334
      %p336 = scmp.ne.s32.totalorder %s322, %s323
      %p337 = scmp.eq.s32.totalorder %s42, 1
      %p338 = por %p336, %p337
      %p340 = scmp.ne.s32.totalorder %s323, %s339
      %p341 = scmp.eq.s32.totalorder %s42, 0
      %p342 = por %p340, %p341
      %s343 = ssub.s32 %s44, %s51
      %p344 = scmp.eq.s32.totalorder %s343, 0
      %s346 = sadd.s32 %s345, 1
      %s347 = scalar_select %p344, %s345, %s346
      %p350 = pneg %p344
      %p351 = scmp.eq.s32.totalorder %s36, 1
      %p352 = por %p350, %p351
      %p353 = scmp.ne.s32.totalorder %s345, %s348
      %p354 = scmp.eq.s32.totalorder %s36, 0
      %p355 = por %p353, %p354
      %p356 = scmp.ne.s32.totalorder %s345, %s348
      %p357 = scmp.eq.s32.totalorder %s41, 1
      %p358 = por %p356, %p357
      %p359 = scmp.ne.s32.totalorder %s348, %s349
      %p360 = scmp.eq.s32.totalorder %s41, 0
      %p361 = por %p359, %p360
      %p362 = scmp.ne.s32.totalorder %s348, %s349
      %p363 = scmp.eq.s32.totalorder %s42, 1
      %p364 = por %p362, %p363
      %p366 = scmp.ne.s32.totalorder %s349, %s365
      %p367 = scmp.eq.s32.totalorder %s42, 0
      %p368 = por %p366, %p367
      %s369 = ssub.s32 %s43, %s55
      %p370 = scmp.eq.s32.totalorder %s369, 0
      %s372 = sadd.s32 %s371, 1
      %s373 = scalar_select %p370, %s371, %s372
      %p376 = pneg %p370
      %p377 = scmp.eq.s32.totalorder %s36, 1
      %p378 = por %p376, %p377
      %p379 = scmp.ne.s32.totalorder %s371, %s374
      %p380 = scmp.eq.s32.totalorder %s36, 0
      %p381 = por %p379, %p380
      %p382 = scmp.ne.s32.totalorder %s371, %s374
      %p383 = scmp.eq.s32.totalorder %s41, 1
      %p384 = por %p382, %p383
      %p385 = scmp.ne.s32.totalorder %s374, %s375
      %p386 = scmp.eq.s32.totalorder %s41, 0
      %p387 = por %p385, %p386
      %p388 = scmp.ne.s32.totalorder %s374, %s375
      %p389 = scmp.eq.s32.totalorder %s42, 1
      %p390 = por %p388, %p389
      %p392 = scmp.ne.s32.totalorder %s375, %s391
      %p393 = scmp.eq.s32.totalorder %s42, 0
      %p394 = por %p392, %p393
      %s395 = ssub.s32 %s44, %s51
      %s396 = ssub.s32 %s43, %s55
      %s397 = sor.u32 %s395, %s396
      %p398 = scmp.eq.s32.totalorder %s397, 0
      %s400 = sadd.s32 %s399, 1
      %s401 = scalar_select %p398, %s399, %s400
      %p404 = pneg %p398
      %p405 = scmp.eq.s32.totalorder %s36, 1
      %p406 = por %p404, %p405
      %p407 = scmp.ne.s32.totalorder %s399, %s402
      %p408 = scmp.eq.s32.totalorder %s36, 0
      %p409 = por %p407, %p408
      %p410 = scmp.ne.s32.totalorder %s399, %s402
      %p411 = scmp.eq.s32.totalorder %s41, 1
      %p412 = por %p410, %p411
      %p413 = scmp.ne.s32.totalorder %s402, %s403
      %p414 = scmp.eq.s32.totalorder %s41, 0
      %p415 = por %p413, %p414
      %p416 = scmp.ne.s32.totalorder %s402, %s403
      %p417 = scmp.eq.s32.totalorder %s42, 1
      %p418 = por %p416, %p417
      %p420 = scmp.ne.s32.totalorder %s403, %s419
      %p421 = scmp.eq.s32.totalorder %s42, 0
      %p422 = por %p420, %p421
      %s423 = ssub.s32 %s44, %s51
      %s424 = ssub.s32 %s43, %s55
      %s425 = sor.u32 %s423, %s424
      %p426 = scmp.eq.s32.totalorder %s425, 0
      %s428 = sadd.s32 %s427, 1
      %s429 = scalar_select %p426, %s427, %s428
      %p432 = pneg %p426
      %p433 = scmp.eq.s32.totalorder %s36, 1
      %p434 = por %p432, %p433
      %p435 = scmp.ne.s32.totalorder %s427, %s430
      %p436 = scmp.eq.s32.totalorder %s36, 0
      %p437 = por %p435, %p436
      %p438 = scmp.ne.s32.totalorder %s427, %s430
      %p439 = scmp.eq.s32.totalorder %s41, 1
      %p440 = por %p438, %p439
      %p441 = scmp.ne.s32.totalorder %s430, %s431
      %p442 = scmp.eq.s32.totalorder %s41, 0
      %p443 = por %p441, %p442
      %p444 = scmp.ne.s32.totalorder %s430, %s431
      %p445 = scmp.eq.s32.totalorder %s42, 1
      %p446 = por %p444, %p445
      %p448 = scmp.ne.s32.totalorder %s431, %s447
      %p449 = scmp.eq.s32.totalorder %s42, 0
      %p450 = por %p448, %p449
      %p451 = scmp.le.s32.totalorder 1, %s36
      %p452 = scmp.lt.s32.totalorder %s36, 3
      %p453 = pnand %p451, %p452
      %p454 = pneg %p453
      // Predicated region
      $region9: #{tpu_custom_call.1} parent=5 // pred_check
        _
      $region10: #{tpu_custom_call.1} parent=5 // pred_check_branch
        %456 = sbr.rel (%p453) target = $region12
      $region11: #{tpu_custom_call.1} parent=5 // pred_region
        %s457 = ssub.s32 %s36, 1
        // Predicated region
        $region13: #{tpu_custom_call.1} parent=11 // pred_check
          %p458 = pneg %p74
        $region14: #{tpu_custom_call.1} parent=11 // pred_check_branch
          %460 = sbr.rel (%p458) target = $region16
        $region15: #{tpu_custom_call.1} parent=11 // pred_region
          %p461 = scmp.lt.s32.totalorder %s45, 0
          %s462 = scalar_select %p461, %s45, 0
          %s463 = smul.addr %s462, 8
          %s464 = smul.addr %s463, 8
          %s465 = scalar_lea.vmem %s0, %s464
        $region16: #{tpu_custom_call.1} parent=11 // pred_fallthru
          _
        // Predicated region
        $region17: #{tpu_custom_call.1} parent=11 // pred_check
          %p466 = pneg %p95
        $region18: #{tpu_custom_call.1} parent=11 // pred_check_branch
          %468 = sbr.rel (%p466) target = $region20
        $region19: #{tpu_custom_call.1} parent=11 // pred_region
          _
        $region20: #{tpu_custom_call.1} parent=11 // pred_fallthru
          _
      $region12: #{tpu_custom_call.1} parent=5 // pred_fallthru
        _
      %p469 = scmp.lt.s32.totalorder %s36, 2
      // Predicated region
      $region21: #{tpu_custom_call.1} parent=5 // pred_check
        %p470 = pneg %p469
      $region22: #{tpu_custom_call.1} parent=5 // pred_check_branch
        %472 = sbr.rel (%p470) target = $region24
      $region23: #{tpu_custom_call.1} parent=5 // pred_region
        // Predicated region
        $region25: #{tpu_custom_call.1} parent=23 // pred_check
          %p473 = pneg %p121
        $region26: #{tpu_custom_call.1} parent=23 // pred_check_branch
          %475 = sbr.rel (%p473) target = $region28
        $region27: #{tpu_custom_call.1} parent=23 // pred_region
          %s476 = sand.u32 %s111, 1
          %s477 = scalar_lea.sflag [#allocation4], %s476
          %s478 = sand.u32 %s111, 1
          %s479 = smul.addr %s478, 32
          %s480 = scalar_lea.vmem [#allocation3], %s479
          %s481 = ssub.s32 %s44, 1
          %p482 = scmp.gt.s32.totalorder %s481, 0
          %s483 = scalar_select %p482, %s481, 0
          %485 = vsyncadd %s477, 0
          %s486 = smul.addr %s483, 4
          %s487 = smul.addr %s486, 8
          %s488 = scalar_lea.hbm %s2, %s487
          %s489 = sshll.u32 %s488, 4
          %s490 = int_to_ptr.hbm [resolvable:$true] %s489
          %s491 = sshll.u32 %s480, 4
          %s492 = int_to_ptr.vmem [resolvable:$true] %s491
          %497 = dma.hbm_to_vmem [thread:$0]  %s490, 512, %s492, %s477, 128, 128, 8
        $region28: #{tpu_custom_call.1} parent=23 // pred_fallthru
          _
        // Predicated region
        $region29: #{tpu_custom_call.1} parent=23 // pred_check
          %p498 = pneg %p147
        $region30: #{tpu_custom_call.1} parent=23 // pred_check_branch
          %500 = sbr.rel (%p498) target = $region32
        $region31: #{tpu_custom_call.1} parent=23 // pred_region
          %p501 = scmp.lt.s32.totalorder %s44, 1
          %s502 = scalar_select %p501, %s44, 1
          %s503 = scalar_lea.vmem %s3, %s502
        $region32: #{tpu_custom_call.1} parent=23 // pred_fallthru
          _
        // Predicated region
        $region33: #{tpu_custom_call.1} parent=23 // pred_check
          %p504 = pneg %p173
        $region34: #{tpu_custom_call.1} parent=23 // pred_check_branch
          %506 = sbr.rel (%p504) target = $region36
        $region35: #{tpu_custom_call.1} parent=23 // pred_region
          %p507 = scmp.lt.s32.totalorder %s44, 1
          %s508 = scalar_select %p507, %s44, 1
          %s509 = scalar_lea.vmem %s4, %s508
        $region36: #{tpu_custom_call.1} parent=23 // pred_fallthru
          _
        // Predicated region
        $region37: #{tpu_custom_call.1} parent=23 // pred_check
          %p510 = pneg %p199
        $region38: #{tpu_custom_call.1} parent=23 // pred_check_branch
          %512 = sbr.rel (%p510) target = $region40
        $region39: #{tpu_custom_call.1} parent=23 // pred_region
          %s513 = sand.u32 %s36, 1
          %s514 = scalar_lea.sflag [#allocation7], %s513
          %s515 = sand.u32 %s189, 1
          %s516 = scalar_lea.vmem [#allocation6], %s515
          %518 = vsyncadd %s514, 0
          %s519 = scalar_lea.hbm %s5, %s44
          %s521 = sshll.u32 %s519, 4
          %s522 = int_to_ptr.hbm [resolvable:$true] %s521
          %s523 = sshll.u32 %s516, 4
          %s524 = int_to_ptr.vmem [resolvable:$true] %s523
          %526 = dma.hbm_to_vmem [thread:$0]  %s522, 16, %s524, %s514
        $region40: #{tpu_custom_call.1} parent=23 // pred_fallthru
          _
        // Predicated region
        $region41: #{tpu_custom_call.1} parent=23 // pred_check
          %p527 = pneg %p225
        $region42: #{tpu_custom_call.1} parent=23 // pred_check_branch
          %529 = sbr.rel (%p527) target = $region44
        $region43: #{tpu_custom_call.1} parent=23 // pred_region
          %p530 = scmp.lt.s32.totalorder %s44, 1
          %s531 = scalar_select %p530, %s44, 1
          %s532 = smul.addr %s531, 4
          %s533 = smul.addr %s532, 8
          %s534 = scalar_lea.vmem %s6, %s533
        $region44: #{tpu_custom_call.1} parent=23 // pred_fallthru
          _
        // Predicated region
        $region45: #{tpu_custom_call.1} parent=23 // pred_check
          %p535 = pneg %p251
        $region46: #{tpu_custom_call.1} parent=23 // pred_check_branch
          %537 = sbr.rel (%p535) target = $region48
        $region47: #{tpu_custom_call.1} parent=23 // pred_region
          %p538 = scmp.lt.s32.totalorder %s44, 1
          %s539 = scalar_select %p538, %s44, 1
          %s540 = scalar_lea.vmem %s7, %s539
        $region48: #{tpu_custom_call.1} parent=23 // pred_fallthru
          _
        // Predicated region
        $region49: #{tpu_custom_call.1} parent=23 // pred_check
          %p541 = pneg %p277
        $region50: #{tpu_custom_call.1} parent=23 // pred_check_branch
          %543 = sbr.rel (%p541) target = $region52
        $region51: #{tpu_custom_call.1} parent=23 // pred_region
          %s544 = sand.u32 %s36, 1
          %s545 = scalar_lea.sflag [#allocation7], %s544
          %s546 = sand.u32 %s267, 1
          %s547 = scalar_lea.vmem [#allocation8], %s546
          %549 = vsyncadd %s545, 0
          %s550 = scalar_lea.hbm %s8, %s44
          %s552 = sshll.u32 %s550, 4
          %s553 = int_to_ptr.hbm [resolvable:$true] %s552
          %s554 = sshll.u32 %s547, 4
          %s555 = int_to_ptr.vmem [resolvable:$true] %s554
          %557 = dma.hbm_to_vmem [thread:$0]  %s553, 16, %s555, %s545
        $region52: #{tpu_custom_call.1} parent=23 // pred_fallthru
          _
        // Predicated region
        $region53: #{tpu_custom_call.1} parent=23 // pred_check
          %p558 = pneg %p303
        $region54: #{tpu_custom_call.1} parent=23 // pred_check_branch
          %560 = sbr.rel (%p558) target = $region56
        $region55: #{tpu_custom_call.1} parent=23 // pred_region
          %p561 = scmp.lt.s32.totalorder %s44, 1
          %s562 = scalar_select %p561, %s44, 1
          %s563 = scalar_lea.vmem %s9, %s562
        $region56: #{tpu_custom_call.1} parent=23 // pred_fallthru
          _
        // Predicated region
        $region57: #{tpu_custom_call.1} parent=23 // pred_check
          %p564 = pneg %p329
        $region58: #{tpu_custom_call.1} parent=23 // pred_check_branch
          %566 = sbr.rel (%p564) target = $region60
        $region59: #{tpu_custom_call.1} parent=23 // pred_region
          %s567 = sand.u32 %s319, 1
          %s568 = scalar_lea.sflag [#allocation10], %s567
          %s569 = sand.u32 %s319, 1
          %s570 = scalar_lea.vmem [#allocation9], %s569
          %572 = vsyncadd %s568, 0
          %s573 = scalar_lea.hbm %s10, %s44
          %s575 = sshll.u32 %s573, 4
          %s576 = int_to_ptr.hbm [resolvable:$true] %s575
          %s577 = sshll.u32 %s570, 4
          %s578 = int_to_ptr.vmem [resolvable:$true] %s577
          %580 = dma.hbm_to_vmem [thread:$0]  %s576, 16, %s578, %s568
        $region60: #{tpu_custom_call.1} parent=23 // pred_fallthru
          _
        // Predicated region
        $region61: #{tpu_custom_call.1} parent=23 // pred_check
          %p581 = pneg %p355
        $region62: #{tpu_custom_call.1} parent=23 // pred_check_branch
          %583 = sbr.rel (%p581) target = $region64
        $region63: #{tpu_custom_call.1} parent=23 // pred_region
          %p584 = scmp.lt.s32.totalorder %s44, 1
          %s585 = scalar_select %p584, %s44, 1
          %s586 = scalar_lea.vmem %s11, %s585
        $region64: #{tpu_custom_call.1} parent=23 // pred_fallthru
          _
      $region24: #{tpu_custom_call.1} parent=5 // pred_fallthru
        _
      %p587 = scmp.le.s32.totalorder 1, %s36
      %p588 = scmp.lt.s32.totalorder %s36, 3
      %p589 = pnand %p587, %p588
      %p590 = pneg %p589
      // Predicated region
      $region65: #{tpu_custom_call.1} parent=5 // pred_check
        _
      $region66: #{tpu_custom_call.1} parent=5 // pred_check_branch
        %592 = sbr.rel (%p589) target = $region68
      $region67: #{tpu_custom_call.1} parent=5 // pred_region
        %s593 = ssub.s32 %s36, 1
        %s594 = sand.u32 %s114, 1
        %s595 = scalar_lea.sflag [#allocation4], %s594
        %s596 = sand.u32 %s114, 1
        %s597 = smul.addr %s596, 32
        %s598 = scalar_lea.vmem [#allocation3], %s597
        // Predicated region
        $region69: #{tpu_custom_call.1} parent=67 // pred_check
          %p599 = pneg %p127
        $region70: #{tpu_custom_call.1} parent=67 // pred_check_branch
          %601 = sbr.rel (%p599) target = $region72
        $region71: #{tpu_custom_call.1} parent=67 // pred_region
          %603 = dma.done %s595, 512
        $region72: #{tpu_custom_call.1} parent=67 // pred_fallthru
          _
        %s604 = sand.u32 %s41, 1
        %s605 = scalar_lea.sflag [#allocation7], %s604
        %s606 = sand.u32 %s192, 1
        %s607 = scalar_lea.vmem [#allocation6], %s606
        // Predicated region
        $region73: #{tpu_custom_call.1} parent=67 // pred_check
          %p608 = pneg %p205
        $region74: #{tpu_custom_call.1} parent=67 // pred_check_branch
          %610 = sbr.rel (%p608) target = $region76
        $region75: #{tpu_custom_call.1} parent=67 // pred_region
          %612 = dma.done %s605, 16
        $region76: #{tpu_custom_call.1} parent=67 // pred_fallthru
          _
        %s613 = sand.u32 %s41, 1
        %s614 = scalar_lea.sflag [#allocation7], %s613
        %s615 = sand.u32 %s270, 1
        %s616 = scalar_lea.vmem [#allocation8], %s615
        // Predicated region
        $region77: #{tpu_custom_call.1} parent=67 // pred_check
          %p617 = pneg %p283
        $region78: #{tpu_custom_call.1} parent=67 // pred_check_branch
          %619 = sbr.rel (%p617) target = $region80
        $region79: #{tpu_custom_call.1} parent=67 // pred_region
          %621 = dma.done %s614, 16
        $region80: #{tpu_custom_call.1} parent=67 // pred_fallthru
          _
        %s622 = sand.u32 %s322, 1
        %s623 = scalar_lea.sflag [#allocation10], %s622
        %s624 = sand.u32 %s322, 1
        %s625 = scalar_lea.vmem [#allocation9], %s624
        // Predicated region
        $region81: #{tpu_custom_call.1} parent=67 // pred_check
          %p626 = pneg %p335
        $region82: #{tpu_custom_call.1} parent=67 // pred_check_branch
          %628 = sbr.rel (%p626) target = $region84
        $region83: #{tpu_custom_call.1} parent=67 // pred_region
          %630 = dma.done %s623, 16
        $region84: #{tpu_custom_call.1} parent=67 // pred_fallthru
          _
        %p631 = scmp.lt.s32.totalorder %s45, 0
        %s632 = scalar_select %p631, %s45, 0
        %s633 = smul.addr %s632, 8
        %s634 = smul.addr %s633, 8
        %s635 = scalar_lea.vmem %s0, %s634
        %p636 = pneg %p74
        %p637 = pneg %p71
        %p638 = pneg %p95
        %p639 = pneg %p92
        %s640 = sand.u32 %s114, 1
        %s641 = scalar_lea.sflag [#allocation4], %s640
        %s642 = sand.u32 %s114, 1
        %s643 = smul.addr %s642, 32
        %s644 = scalar_lea.vmem [#allocation3], %s643
        %p645 = pneg %p127
        %p646 = pneg %p124
        %p647 = scmp.lt.s32.totalorder %s46, 1
        %s648 = scalar_select %p647, %s46, 1
        %s649 = scalar_lea.vmem %s3, %s648
        %p650 = pneg %p153
        %p651 = pneg %p150
        %p652 = scmp.lt.s32.totalorder %s46, 1
        %s653 = scalar_select %p652, %s46, 1
        %s654 = scalar_lea.vmem %s4, %s653
        %p655 = pneg %p179
        %p656 = pneg %p176
        %s657 = sand.u32 %s41, 1
        %s658 = scalar_lea.sflag [#allocation7], %s657
        %s659 = sand.u32 %s192, 1
        %s660 = scalar_lea.vmem [#allocation6], %s659
        %p661 = pneg %p205
        %p662 = pneg %p202
        %p663 = scmp.lt.s32.totalorder %s46, 1
        %s664 = scalar_select %p663, %s46, 1
        %s665 = smul.addr %s664, 4
        %s666 = smul.addr %s665, 8
        %s667 = scalar_lea.vmem %s6, %s666
        %p668 = pneg %p231
        %p669 = pneg %p228
        %p670 = scmp.lt.s32.totalorder %s46, 1
        %s671 = scalar_select %p670, %s46, 1
        %s672 = scalar_lea.vmem %s7, %s671
        %p673 = pneg %p257
        %p674 = pneg %p254
        %s675 = sand.u32 %s41, 1
        %s676 = scalar_lea.sflag [#allocation7], %s675
        %s677 = sand.u32 %s270, 1
        %s678 = scalar_lea.vmem [#allocation8], %s677
        %p679 = pneg %p283
        %p680 = pneg %p280
        %p681 = scmp.lt.s32.totalorder %s46, 1
        %s682 = scalar_select %p681, %s46, 1
        %s683 = scalar_lea.vmem %s9, %s682
        %p684 = pneg %p309
        %p685 = pneg %p306
        %s686 = sand.u32 %s322, 1
        %s687 = scalar_lea.sflag [#allocation10], %s686
        %s688 = sand.u32 %s322, 1
        %s689 = scalar_lea.vmem [#allocation9], %s688
        %p690 = pneg %p335
        %p691 = pneg %p332
        %p692 = scmp.lt.s32.totalorder %s46, 1
        %s693 = scalar_select %p692, %s46, 1
        %s694 = scalar_lea.vmem %s11, %s693
        %p695 = pneg %p361
        %p696 = pneg %p358
        %p697 = pneg %p387
        %p698 = pneg %p384
        %p699 = scmp.lt.s32.totalorder %s45, 0
        %s700 = scalar_select %p699, %s45, 0
        %s701 = smul.addr %s700, 8
        %s702 = smul.addr %s701, 8
        %s703 = scalar_lea.vmem %s12, %s702
        %p704 = pneg %p415
        %p705 = pneg %p412
        %s706 = sand.u32 %s402, 1
        %s707 = scalar_lea.sflag [#allocation5], %s706
        %s708 = sand.u32 %s402, 1
        %s709 = smul.addr %s708, 8
        %s710 = scalar_lea.vmem [#allocation11], %s709
        %p711 = pneg %p443
        %p712 = pneg %p440
        %s713 = sand.u32 %s430, 1
        %s714 = scalar_lea.sflag [#allocation13], %s713
        %s715 = sand.u32 %s430, 1
        %s716 = smul.addr %s715, 8
        %s717 = scalar_lea.vmem [#allocation12], %s716
        %p718 = scmp.lt.s32.totalorder %s45, 0
        %s719 = scalar_select %p718, %s45, 0
        %s720 = smul.addr %s719, 8
        %s721 = smul.addr %s720, 8
        %s722 = scalar_lea.vmem %s0, %s721
        %s723 = ssub.s32 %s46, 1
        %p724 = scmp.gt.s32.totalorder %s723, 0
        %s725 = scalar_select %p724, %s723, 0
        %p726 = scmp.lt.s32.totalorder %s46, 1
        %s727 = scalar_select %p726, %s46, 1
        %s728 = scalar_lea.vmem %s3, %s727
        %p729 = scmp.lt.s32.totalorder %s46, 1
        %s730 = scalar_select %p729, %s46, 1
        %s731 = scalar_lea.vmem %s4, %s730
        %p732 = scmp.lt.s32.totalorder %s46, 1
        %s733 = scalar_select %p732, %s46, 1
        %s734 = smul.addr %s733, 4
        %s735 = smul.addr %s734, 8
        %s736 = scalar_lea.vmem %s6, %s735
        %p737 = scmp.lt.s32.totalorder %s46, 1
        %s738 = scalar_select %p737, %s46, 1
        %s739 = scalar_lea.vmem %s7, %s738
        %p740 = scmp.lt.s32.totalorder %s46, 1
        %s741 = scalar_select %p740, %s46, 1
        %s742 = scalar_lea.vmem %s9, %s741
        %p743 = scmp.lt.s32.totalorder %s46, 1
        %s744 = scalar_select %p743, %s46, 1
        %s745 = scalar_lea.vmem %s11, %s744
        %p746 = scmp.lt.s32.totalorder %s45, 0
        %s747 = scalar_select %p746, %s45, 0
        %s748 = smul.addr %s747, 8
        %s749 = smul.addr %s748, 8
        %s750 = scalar_lea.vmem %s12, %s749
        %v751 = vld [vmem:[%s728] sm:$0x1]
        %v752 = vld [vmem:[%s731] sm:$0x1]
        %v753 = vld [vmem:[%s607] sm:$0x1]
        %p754 = scmp.eq.s32.totalorder %s46, 0
        // Predicated region
        $region85: #{tpu_custom_call.1} parent=67 // pred_check
          %p755 = pneg %p754
        $region86: #{tpu_custom_call.1} parent=67 // pred_check_branch
          %757 = sbr.rel (%p755) target = $region88
        $region87: #{tpu_custom_call.1} parent=67 // pred_region
          %v758 = vld [vmem:[%s722] sm:$0xff]
          %v759 = vld [vmem:[%s722 + $0x8] sm:$0xff]
          %v760 = vld [vmem:[%s722 + $0x10] sm:$0xff]
          %v761 = vld [vmem:[%s722 + $0x18] sm:$0xff]
          %v762 = vld [vmem:[%s722 + $0x20] sm:$0xff]
          %v763 = vld [vmem:[%s722 + $0x28] sm:$0xff]
          %v764 = vld [vmem:[%s722 + $0x30] sm:$0xff]
          %v765 = vld [vmem:[%s722 + $0x38] sm:$0xff]
          %v766 = vld [vmem:[%s1] sm:$0xff]
          %v767 = vld [vmem:[%s1 + $0x8] sm:$0xff]
          %v769 = vperm.slane %v751, 0
          %vm771 = vcmask 130048
          %v773 = vsel %vm771, %v758, 0
          %v776 = vsel %vm771, %v759, 0
          %v779 = vsel %vm771, %v760, 0
          %v782 = vsel %vm771, %v761, 0
          %v785 = vsel %vm771, %v762, 0
          %v788 = vsel %vm771, %v763, 0
          %v791 = vsel %vm771, %v764, 0
          %v794 = vsel %vm771, %v765, 0
          %796 = vmatpush.msra.mxu0 0.0
          %797 = vmatpush.msra.mxu0 0.0
          %798 = vmatpush.msra.mxu0 0.0
          %799 = vmatpush.msra.mxu0 0.0
          %800 = vmatpush.msra.mxu0 0.0
          %801 = vmatpush.msra.mxu0 0.0
          %802 = vmatpush.msra.mxu0 0.0
          %803 = vmatpush.msra.mxu0 0.0
          %804 = vmatpush.msra.mxu0 0.0
          %805 = vmatpush.msra.mxu0 0.0
          %806 = vmatpush.msra.mxu0 0.0
          %807 = vmatpush.msra.mxu0 0.0
          %808 = vmatpush.msra.mxu0 0.0
          %809 = vmatpush.msra.mxu0 0.0
          %810 = vmatpush.msra.mxu0 %v767
          %811 = vmatpush.msra.mxu0 %v766
          %812 = vmatmul.f32.gmra.mxu0 %v773
          %v813 = vpop.f32.mrf.mxu0
          %v814 = vadd.f32 %v769, %v813
          %815 = vmatmul.f32.gmra.mxu0 %v776
          %v816 = vpop.f32.mrf.mxu0
          %v817 = vadd.f32 %v769, %v816
          %818 = vmatmul.f32.gmra.mxu0 %v779
          %v819 = vpop.f32.mrf.mxu0
          %v820 = vadd.f32 %v769, %v819
          %821 = vmatmul.f32.gmra.mxu0 %v782
          %v822 = vpop.f32.mrf.mxu0
          %v823 = vadd.f32 %v769, %v822
          %824 = vmatmul.f32.gmra.mxu0 %v785
          %v825 = vpop.f32.mrf.mxu0
          %v826 = vadd.f32 %v769, %v825
          %827 = vmatmul.f32.gmra.mxu0 %v788
          %v828 = vpop.f32.mrf.mxu0
          %v829 = vadd.f32 %v769, %v828
          %830 = vmatmul.f32.gmra.mxu0 %v791
          %v831 = vpop.f32.mrf.mxu0
          %v832 = vadd.f32 %v769, %v831
          %833 = vmatmul.f32.gmra.mxu0 %v794
          %v834 = vpop.f32.mrf.mxu0
          %v835 = vadd.f32 %v769, %v834
          %836 = vdwg.mxu0
          %837 = vadd.xlane.f32.xlu0 %v814
          %v838 = vpop.xlane.xlu0 %837
          %839 = vadd.xlane.f32.xlu0 %v817
          %v840 = vpop.xlane.xlu0 %839
          %841 = vadd.xlane.f32.xlu0 %v820
          %v842 = vpop.xlane.xlu0 %841
          %843 = vadd.xlane.f32.xlu0 %v823
          %v844 = vpop.xlane.xlu0 %843
          %845 = vadd.xlane.f32.xlu0 %v826
          %v846 = vpop.xlane.xlu0 %845
          %847 = vadd.xlane.f32.xlu0 %v829
          %v848 = vpop.xlane.xlu0 %847
          %849 = vadd.xlane.f32.xlu0 %v832
          %v850 = vpop.xlane.xlu0 %849
          %851 = vadd.xlane.f32.xlu0 %v835
          %v852 = vpop.xlane.xlu0 %851
          %v853 = vrcp.pop 128.0
          %v854 = vmul.f32 128.0, %v853
          %v855 = vsub.f32 1.0, %v854
          %v856 = vmul.f32 %v853, %v855
          %v857 = vadd.f32 %v853, %v856
          %vm858 = vweird.f32 %v853
          %v859 = vsel %vm858, %v853, %v857
          %v860 = vmul.f32 %v838, %v859
          %v861 = vmul.f32 %v840, %v859
          %v862 = vmul.f32 %v842, %v859
          %v863 = vmul.f32 %v844, %v859
          %v864 = vmul.f32 %v846, %v859
          %v865 = vmul.f32 %v848, %v859
          %v866 = vmul.f32 %v850, %v859
          %v867 = vmul.f32 %v852, %v859
          %v868 = vmul.f32 %v814, %v814
          %v869 = vmul.f32 %v817, %v817
          %v870 = vmul.f32 %v820, %v820
          %v871 = vmul.f32 %v823, %v823
          %v872 = vmul.f32 %v826, %v826
          %v873 = vmul.f32 %v829, %v829
          %v874 = vmul.f32 %v832, %v832
          %v875 = vmul.f32 %v835, %v835
          %876 = vadd.xlane.f32.xlu0 %v868
          %v877 = vpop.xlane.xlu0 %876
          %878 = vadd.xlane.f32.xlu0 %v869
          %v879 = vpop.xlane.xlu0 %878
          %880 = vadd.xlane.f32.xlu0 %v870
          %v881 = vpop.xlane.xlu0 %880
          %882 = vadd.xlane.f32.xlu0 %v871
          %v883 = vpop.xlane.xlu0 %882
          %884 = vadd.xlane.f32.xlu0 %v872
          %v885 = vpop.xlane.xlu0 %884
          %886 = vadd.xlane.f32.xlu0 %v873
          %v887 = vpop.xlane.xlu0 %886
          %888 = vadd.xlane.f32.xlu0 %v874
          %v889 = vpop.xlane.xlu0 %888
          %890 = vadd.xlane.f32.xlu0 %v875
          %v891 = vpop.xlane.xlu0 %890
          %v892 = vmul.f32 %v877, %v859
          %v893 = vmul.f32 %v879, %v859
          %v894 = vmul.f32 %v881, %v859
          %v895 = vmul.f32 %v883, %v859
          %v896 = vmul.f32 %v885, %v859
          %v897 = vmul.f32 %v887, %v859
          %v898 = vmul.f32 %v889, %v859
          %v899 = vmul.f32 %v891, %v859
          %v900 = vmul.f32 %v860, %v860
          %v901 = vmul.f32 %v861, %v861
          %v902 = vmul.f32 %v862, %v862
          %v903 = vmul.f32 %v863, %v863
          %v904 = vmul.f32 %v864, %v864
          %v905 = vmul.f32 %v865, %v865
          %v906 = vmul.f32 %v866, %v866
          %v907 = vmul.f32 %v867, %v867
          %v908 = vsub.f32 %v892, %v900
          %v909 = vsub.f32 %v893, %v901
          %v910 = vsub.f32 %v894, %v902
          %v911 = vsub.f32 %v895, %v903
          %v912 = vsub.f32 %v896, %v904
          %v913 = vsub.f32 %v897, %v905
          %v914 = vsub.f32 %v898, %v906
          %v915 = vsub.f32 %v899, %v907
          %v916 = vmax.f32 %v908, 0.0
          %v917 = vmax.f32 %v909, 0.0
          %v918 = vmax.f32 %v910, 0.0
          %v919 = vmax.f32 %v911, 0.0
          %v920 = vmax.f32 %v912, 0.0
          %v921 = vmax.f32 %v913, 0.0
          %v922 = vmax.f32 %v914, 0.0
          %v923 = vmax.f32 %v915, 0.0
          %v924 = vsub.f32 %v814, %v860
          %v925 = vsub.f32 %v817, %v861
          %v926 = vsub.f32 %v820, %v862
          %v927 = vsub.f32 %v823, %v863
          %v928 = vsub.f32 %v826, %v864
          %v929 = vsub.f32 %v829, %v865
          %v930 = vsub.f32 %v832, %v866
          %v931 = vsub.f32 %v835, %v867
          %v932 = vadd.f32 %v916, 1e-05
          %v933 = vadd.f32 %v917, 1e-05
          %v934 = vadd.f32 %v918, 1e-05
          %v935 = vadd.f32 %v919, 1e-05
          %v936 = vadd.f32 %v920, 1e-05
          %v937 = vadd.f32 %v921, 1e-05
          %v938 = vadd.f32 %v922, 1e-05
          %v939 = vadd.f32 %v923, 1e-05
          %v940 = vrsqrt.pop %v932
          %v941 = vmul.f32 %v940, %v932
          %v942 = vmul.f32 %v941, %v940
          %v943 = vmul.f32 0.5, %v942
          %v944 = vsub.f32 1.5, %v943
          %v945 = vmul.f32 %v940, %v944
          %vm946 = vweird.f32 %v932
          %vm947 = vweird.f32 %v940
          %vm948 = vmor %vm946, %vm947
          %v949 = vsel %vm948, %v940, %v945
          %v950 = vrsqrt.pop %v933
          %v951 = vmul.f32 %v950, %v933
          %v952 = vmul.f32 %v951, %v950
          %v953 = vmul.f32 0.5, %v952
          %v954 = vsub.f32 1.5, %v953
          %v955 = vmul.f32 %v950, %v954
          %vm956 = vweird.f32 %v933
          %vm957 = vweird.f32 %v950
          %vm958 = vmor %vm956, %vm957
          %v959 = vsel %vm958, %v950, %v955
          %v960 = vrsqrt.pop %v934
          %v961 = vmul.f32 %v960, %v934
          %v962 = vmul.f32 %v961, %v960
          %v963 = vmul.f32 0.5, %v962
          %v964 = vsub.f32 1.5, %v963
          %v965 = vmul.f32 %v960, %v964
          %vm966 = vweird.f32 %v934
          %vm967 = vweird.f32 %v960
          %vm968 = vmor %vm966, %vm967
          %v969 = vsel %vm968, %v960, %v965
          %v970 = vrsqrt.pop %v935
          %v971 = vmul.f32 %v970, %v935
          %v972 = vmul.f32 %v971, %v970
          %v973 = vmul.f32 0.5, %v972
          %v974 = vsub.f32 1.5, %v973
          %v975 = vmul.f32 %v970, %v974
          %vm976 = vweird.f32 %v935
          %vm977 = vweird.f32 %v970
          %vm978 = vmor %vm976, %vm977
          %v979 = vsel %vm978, %v970, %v975
          %v980 = vrsqrt.pop %v936
          %v981 = vmul.f32 %v980, %v936
          %v982 = vmul.f32 %v981, %v980
          %v983 = vmul.f32 0.5, %v982
          %v984 = vsub.f32 1.5, %v983
          %v985 = vmul.f32 %v980, %v984
          %vm986 = vweird.f32 %v936
          %vm987 = vweird.f32 %v980
          %vm988 = vmor %vm986, %vm987
          %v989 = vsel %vm988, %v980, %v985
          %v990 = vrsqrt.pop %v937
          %v991 = vmul.f32 %v990, %v937
          %v992 = vmul.f32 %v991, %v990
          %v993 = vmul.f32 0.5, %v992
          %v994 = vsub.f32 1.5, %v993
          %v995 = vmul.f32 %v990, %v994
          %vm996 = vweird.f32 %v937
          %vm997 = vweird.f32 %v990
          %vm998 = vmor %vm996, %vm997
          %v999 = vsel %vm998, %v990, %v995
          %v1000 = vrsqrt.pop %v938
          %v1001 = vmul.f32 %v1000, %v938
          %v1002 = vmul.f32 %v1001, %v1000
          %v1003 = vmul.f32 0.5, %v1002
          %v1004 = vsub.f32 1.5, %v1003
          %v1005 = vmul.f32 %v1000, %v1004
          %vm1006 = vweird.f32 %v938
          %vm1007 = vweird.f32 %v1000
          %vm1008 = vmor %vm1006, %vm1007
          %v1009 = vsel %vm1008, %v1000, %v1005
          %v1010 = vrsqrt.pop %v939
          %v1011 = vmul.f32 %v1010, %v939
          %v1012 = vmul.f32 %v1011, %v1010
          %v1013 = vmul.f32 0.5, %v1012
          %v1014 = vsub.f32 1.5, %v1013
          %v1015 = vmul.f32 %v1010, %v1014
          %vm1016 = vweird.f32 %v939
          %vm1017 = vweird.f32 %v1010
          %vm1018 = vmor %vm1016, %vm1017
          %v1019 = vsel %vm1018, %v1010, %v1015
          %v1020 = vmul.f32 %v924, %v949
          %v1021 = vmul.f32 %v925, %v959
          %v1022 = vmul.f32 %v926, %v969
          %v1023 = vmul.f32 %v927, %v979
          %v1024 = vmul.f32 %v928, %v989
          %v1025 = vmul.f32 %v929, %v999
          %v1026 = vmul.f32 %v930, %v1009
          %v1027 = vmul.f32 %v931, %v1019
          %v1029 = vperm.slane %v752, 0
          %v1031 = vmul.f32 %v1020, %v1029
          %v1032 = vmul.f32 %v1021, %v1029
          %v1033 = vmul.f32 %v1022, %v1029
          %v1034 = vmul.f32 %v1023, %v1029
          %v1035 = vmul.f32 %v1024, %v1029
          %v1036 = vmul.f32 %v1025, %v1029
          %v1037 = vmul.f32 %v1026, %v1029
          %v1038 = vmul.f32 %v1027, %v1029
          %v1040 = vperm.slane %v753, 0
          %v1042 = vadd.f32 %v1031, %v1040
          %v1043 = vadd.f32 %v1032, %v1040
          %v1044 = vadd.f32 %v1033, %v1040
          %v1045 = vadd.f32 %v1034, %v1040
          %v1046 = vadd.f32 %v1035, %v1040
          %v1047 = vadd.f32 %v1036, %v1040
          %v1048 = vadd.f32 %v1037, %v1040
          %v1049 = vadd.f32 %v1038, %v1040
          %1050 = vst [vmem:[#allocation2] sm:$0xff] %v1042
          %1051 = vst [vmem:[#allocation2 + $0x8] sm:$0xff] %v1043
          %1052 = vst [vmem:[#allocation2 + $0x10] sm:$0xff] %v1044
          %1053 = vst [vmem:[#allocation2 + $0x18] sm:$0xff] %v1045
          %1054 = vst [vmem:[#allocation2 + $0x20] sm:$0xff] %v1046
          %1055 = vst [vmem:[#allocation2 + $0x28] sm:$0xff] %v1047
          %1056 = vst [vmem:[#allocation2 + $0x30] sm:$0xff] %v1048
          %1057 = vst [vmem:[#allocation2 + $0x38] sm:$0xff] %v1049
        $region88: #{tpu_custom_call.1} parent=67 // pred_fallthru
          _
        %p1058 = scmp.gt.s32.totalorder %s46, 0
        // Predicated region
        $region89: #{tpu_custom_call.1} parent=67 // pred_check
          %p1059 = pneg %p1058
        $region90: #{tpu_custom_call.1} parent=67 // pred_check_branch
          %1061 = sbr.rel (%p1059) target = $region92
        $region91: #{tpu_custom_call.1} parent=67 // pred_region
          %v1062 = vld [vmem:[%s750] sm:$0xff]
          %v1063 = vld [vmem:[%s750 + $0x8] sm:$0xff]
          %v1064 = vld [vmem:[%s750 + $0x10] sm:$0xff]
          %v1065 = vld [vmem:[%s750 + $0x18] sm:$0xff]
          %v1066 = vld [vmem:[%s750 + $0x20] sm:$0xff]
          %v1067 = vld [vmem:[%s750 + $0x28] sm:$0xff]
          %v1068 = vld [vmem:[%s750 + $0x30] sm:$0xff]
          %v1069 = vld [vmem:[%s750 + $0x38] sm:$0xff]
          %v1070 = vld [vmem:[%s598] sm:$0xff]
          %v1071 = vld [vmem:[%s598 + $0x8] sm:$0xff]
          %v1072 = vld [vmem:[%s598 + $0x10] sm:$0xff]
          %v1073 = vld [vmem:[%s598 + $0x18] sm:$0xff]
          %v1075 = vperm.slane %v751, 0
          %vm1077 = vcmask 261120
          %v1079 = vsel %vm1077, %v1062, 0
          %v1082 = vsel %vm1077, %v1063, 0
          %v1085 = vsel %vm1077, %v1064, 0
          %v1088 = vsel %vm1077, %v1065, 0
          %v1091 = vsel %vm1077, %v1066, 0
          %v1094 = vsel %vm1077, %v1067, 0
          %v1097 = vsel %vm1077, %v1068, 0
          %v1100 = vsel %vm1077, %v1069, 0
          %1102 = vmatpush.msra.mxu0 0.0
          %1103 = vmatpush.msra.mxu0 0.0
          %1104 = vmatpush.msra.mxu0 0.0
          %1105 = vmatpush.msra.mxu0 0.0
          %1106 = vmatpush.msra.mxu0 0.0
          %1107 = vmatpush.msra.mxu0 0.0
          %1108 = vmatpush.msra.mxu0 0.0
          %1109 = vmatpush.msra.mxu0 0.0
          %1110 = vmatpush.msra.mxu0 0.0
          %1111 = vmatpush.msra.mxu0 0.0
          %1112 = vmatpush.msra.mxu0 0.0
          %1113 = vmatpush.msra.mxu0 0.0
          %1114 = vmatpush.msra.mxu0 %v1073
          %1115 = vmatpush.msra.mxu0 %v1072
          %1116 = vmatpush.msra.mxu0 %v1071
          %1117 = vmatpush.msra.mxu0 %v1070
          %1118 = vmatmul.f32.gmra.mxu0 %v1079
          %v1119 = vpop.f32.mrf.mxu0
          %v1120 = vadd.f32 %v1075, %v1119
          %1121 = vmatmul.f32.gmra.mxu0 %v1082
          %v1122 = vpop.f32.mrf.mxu0
          %v1123 = vadd.f32 %v1075, %v1122
          %1124 = vmatmul.f32.gmra.mxu0 %v1085
          %v1125 = vpop.f32.mrf.mxu0
          %v1126 = vadd.f32 %v1075, %v1125
          %1127 = vmatmul.f32.gmra.mxu0 %v1088
          %v1128 = vpop.f32.mrf.mxu0
          %v1129 = vadd.f32 %v1075, %v1128
          %1130 = vmatmul.f32.gmra.mxu0 %v1091
          %v1131 = vpop.f32.mrf.mxu0
          %v1132 = vadd.f32 %v1075, %v1131
          %1133 = vmatmul.f32.gmra.mxu0 %v1094
          %v1134 = vpop.f32.mrf.mxu0
          %v1135 = vadd.f32 %v1075, %v1134
          %1136 = vmatmul.f32.gmra.mxu0 %v1097
          %v1137 = vpop.f32.mrf.mxu0
          %v1138 = vadd.f32 %v1075, %v1137
          %1139 = vmatmul.f32.gmra.mxu0 %v1100
          %v1140 = vpop.f32.mrf.mxu0
          %v1141 = vadd.f32 %v1075, %v1140
          %1142 = vdwg.mxu0
          %1143 = vadd.xlane.f32.xlu0 %v1120
          %v1144 = vpop.xlane.xlu0 %1143
          %1145 = vadd.xlane.f32.xlu0 %v1123
          %v1146 = vpop.xlane.xlu0 %1145
          %1147 = vadd.xlane.f32.xlu0 %v1126
          %v1148 = vpop.xlane.xlu0 %1147
          %1149 = vadd.xlane.f32.xlu0 %v1129
          %v1150 = vpop.xlane.xlu0 %1149
          %1151 = vadd.xlane.f32.xlu0 %v1132
          %v1152 = vpop.xlane.xlu0 %1151
          %1153 = vadd.xlane.f32.xlu0 %v1135
          %v1154 = vpop.xlane.xlu0 %1153
          %1155 = vadd.xlane.f32.xlu0 %v1138
          %v1156 = vpop.xlane.xlu0 %1155
          %1157 = vadd.xlane.f32.xlu0 %v1141
          %v1158 = vpop.xlane.xlu0 %1157
          %v1159 = vrcp.pop 128.0
          %v1160 = vmul.f32 128.0, %v1159
          %v1161 = vsub.f32 1.0, %v1160
          %v1162 = vmul.f32 %v1159, %v1161
          %v1163 = vadd.f32 %v1159, %v1162
          %vm1164 = vweird.f32 %v1159
          %v1165 = vsel %vm1164, %v1159, %v1163
          %v1166 = vmul.f32 %v1144, %v1165
          %v1167 = vmul.f32 %v1146, %v1165
          %v1168 = vmul.f32 %v1148, %v1165
          %v1169 = vmul.f32 %v1150, %v1165
          %v1170 = vmul.f32 %v1152, %v1165
          %v1171 = vmul.f32 %v1154, %v1165
          %v1172 = vmul.f32 %v1156, %v1165
          %v1173 = vmul.f32 %v1158, %v1165
          %v1174 = vmul.f32 %v1120, %v1120
          %v1175 = vmul.f32 %v1123, %v1123
          %v1176 = vmul.f32 %v1126, %v1126
          %v1177 = vmul.f32 %v1129, %v1129
          %v1178 = vmul.f32 %v1132, %v1132
          %v1179 = vmul.f32 %v1135, %v1135
          %v1180 = vmul.f32 %v1138, %v1138
          %v1181 = vmul.f32 %v1141, %v1141
          %1182 = vadd.xlane.f32.xlu0 %v1174
          %v1183 = vpop.xlane.xlu0 %1182
          %1184 = vadd.xlane.f32.xlu0 %v1175
          %v1185 = vpop.xlane.xlu0 %1184
          %1186 = vadd.xlane.f32.xlu0 %v1176
          %v1187 = vpop.xlane.xlu0 %1186
          %1188 = vadd.xlane.f32.xlu0 %v1177
          %v1189 = vpop.xlane.xlu0 %1188
          %1190 = vadd.xlane.f32.xlu0 %v1178
          %v1191 = vpop.xlane.xlu0 %1190
          %1192 = vadd.xlane.f32.xlu0 %v1179
          %v1193 = vpop.xlane.xlu0 %1192
          %1194 = vadd.xlane.f32.xlu0 %v1180
          %v1195 = vpop.xlane.xlu0 %1194
          %1196 = vadd.xlane.f32.xlu0 %v1181
          %v1197 = vpop.xlane.xlu0 %1196
          %v1198 = vmul.f32 %v1183, %v1165
          %v1199 = vmul.f32 %v1185, %v1165
          %v1200 = vmul.f32 %v1187, %v1165
          %v1201 = vmul.f32 %v1189, %v1165
          %v1202 = vmul.f32 %v1191, %v1165
          %v1203 = vmul.f32 %v1193, %v1165
          %v1204 = vmul.f32 %v1195, %v1165
          %v1205 = vmul.f32 %v1197, %v1165
          %v1206 = vmul.f32 %v1166, %v1166
          %v1207 = vmul.f32 %v1167, %v1167
          %v1208 = vmul.f32 %v1168, %v1168
          %v1209 = vmul.f32 %v1169, %v1169
          %v1210 = vmul.f32 %v1170, %v1170
          %v1211 = vmul.f32 %v1171, %v1171
          %v1212 = vmul.f32 %v1172, %v1172
          %v1213 = vmul.f32 %v1173, %v1173
          %v1214 = vsub.f32 %v1198, %v1206
          %v1215 = vsub.f32 %v1199, %v1207
          %v1216 = vsub.f32 %v1200, %v1208
          %v1217 = vsub.f32 %v1201, %v1209
          %v1218 = vsub.f32 %v1202, %v1210
          %v1219 = vsub.f32 %v1203, %v1211
          %v1220 = vsub.f32 %v1204, %v1212
          %v1221 = vsub.f32 %v1205, %v1213
          %v1222 = vmax.f32 %v1214, 0.0
          %v1223 = vmax.f32 %v1215, 0.0
          %v1224 = vmax.f32 %v1216, 0.0
          %v1225 = vmax.f32 %v1217, 0.0
          %v1226 = vmax.f32 %v1218, 0.0
          %v1227 = vmax.f32 %v1219, 0.0
          %v1228 = vmax.f32 %v1220, 0.0
          %v1229 = vmax.f32 %v1221, 0.0
          %v1230 = vsub.f32 %v1120, %v1166
          %v1231 = vsub.f32 %v1123, %v1167
          %v1232 = vsub.f32 %v1126, %v1168
          %v1233 = vsub.f32 %v1129, %v1169
          %v1234 = vsub.f32 %v1132, %v1170
          %v1235 = vsub.f32 %v1135, %v1171
          %v1236 = vsub.f32 %v1138, %v1172
          %v1237 = vsub.f32 %v1141, %v1173
          %v1238 = vadd.f32 %v1222, 1e-05
          %v1239 = vadd.f32 %v1223, 1e-05
          %v1240 = vadd.f32 %v1224, 1e-05
          %v1241 = vadd.f32 %v1225, 1e-05
          %v1242 = vadd.f32 %v1226, 1e-05
          %v1243 = vadd.f32 %v1227, 1e-05
          %v1244 = vadd.f32 %v1228, 1e-05
          %v1245 = vadd.f32 %v1229, 1e-05
          %v1246 = vrsqrt.pop %v1238
          %v1247 = vmul.f32 %v1246, %v1238
          %v1248 = vmul.f32 %v1247, %v1246
          %v1249 = vmul.f32 0.5, %v1248
          %v1250 = vsub.f32 1.5, %v1249
          %v1251 = vmul.f32 %v1246, %v1250
          %vm1252 = vweird.f32 %v1238
          %vm1253 = vweird.f32 %v1246
          %vm1254 = vmor %vm1252, %vm1253
          %v1255 = vsel %vm1254, %v1246, %v1251
          %v1256 = vrsqrt.pop %v1239
          %v1257 = vmul.f32 %v1256, %v1239
          %v1258 = vmul.f32 %v1257, %v1256
          %v1259 = vmul.f32 0.5, %v1258
          %v1260 = vsub.f32 1.5, %v1259
          %v1261 = vmul.f32 %v1256, %v1260
          %vm1262 = vweird.f32 %v1239
          %vm1263 = vweird.f32 %v1256
          %vm1264 = vmor %vm1262, %vm1263
          %v1265 = vsel %vm1264, %v1256, %v1261
          %v1266 = vrsqrt.pop %v1240
          %v1267 = vmul.f32 %v1266, %v1240
          %v1268 = vmul.f32 %v1267, %v1266
          %v1269 = vmul.f32 0.5, %v1268
          %v1270 = vsub.f32 1.5, %v1269
          %v1271 = vmul.f32 %v1266, %v1270
          %vm1272 = vweird.f32 %v1240
          %vm1273 = vweird.f32 %v1266
          %vm1274 = vmor %vm1272, %vm1273
          %v1275 = vsel %vm1274, %v1266, %v1271
          %v1276 = vrsqrt.pop %v1241
          %v1277 = vmul.f32 %v1276, %v1241
          %v1278 = vmul.f32 %v1277, %v1276
          %v1279 = vmul.f32 0.5, %v1278
          %v1280 = vsub.f32 1.5, %v1279
          %v1281 = vmul.f32 %v1276, %v1280
          %vm1282 = vweird.f32 %v1241
          %vm1283 = vweird.f32 %v1276
          %vm1284 = vmor %vm1282, %vm1283
          %v1285 = vsel %vm1284, %v1276, %v1281
          %v1286 = vrsqrt.pop %v1242
          %v1287 = vmul.f32 %v1286, %v1242
          %v1288 = vmul.f32 %v1287, %v1286
          %v1289 = vmul.f32 0.5, %v1288
          %v1290 = vsub.f32 1.5, %v1289
          %v1291 = vmul.f32 %v1286, %v1290
          %vm1292 = vweird.f32 %v1242
          %vm1293 = vweird.f32 %v1286
          %vm1294 = vmor %vm1292, %vm1293
          %v1295 = vsel %vm1294, %v1286, %v1291
          %v1296 = vrsqrt.pop %v1243
          %v1297 = vmul.f32 %v1296, %v1243
          %v1298 = vmul.f32 %v1297, %v1296
          %v1299 = vmul.f32 0.5, %v1298
          %v1300 = vsub.f32 1.5, %v1299
          %v1301 = vmul.f32 %v1296, %v1300
          %vm1302 = vweird.f32 %v1243
          %vm1303 = vweird.f32 %v1296
          %vm1304 = vmor %vm1302, %vm1303
          %v1305 = vsel %vm1304, %v1296, %v1301
          %v1306 = vrsqrt.pop %v1244
          %v1307 = vmul.f32 %v1306, %v1244
          %v1308 = vmul.f32 %v1307, %v1306
          %v1309 = vmul.f32 0.5, %v1308
          %v1310 = vsub.f32 1.5, %v1309
          %v1311 = vmul.f32 %v1306, %v1310
          %vm1312 = vweird.f32 %v1244
          %vm1313 = vweird.f32 %v1306
          %vm1314 = vmor %vm1312, %vm1313
          %v1315 = vsel %vm1314, %v1306, %v1311
          %v1316 = vrsqrt.pop %v1245
          %v1317 = vmul.f32 %v1316, %v1245
          %v1318 = vmul.f32 %v1317, %v1316
          %v1319 = vmul.f32 0.5, %v1318
          %v1320 = vsub.f32 1.5, %v1319
          %v1321 = vmul.f32 %v1316, %v1320
          %vm1322 = vweird.f32 %v1245
          %vm1323 = vweird.f32 %v1316
          %vm1324 = vmor %vm1322, %vm1323
          %v1325 = vsel %vm1324, %v1316, %v1321
          %v1326 = vmul.f32 %v1230, %v1255
          %v1327 = vmul.f32 %v1231, %v1265
          %v1328 = vmul.f32 %v1232, %v1275
          %v1329 = vmul.f32 %v1233, %v1285
          %v1330 = vmul.f32 %v1234, %v1295
          %v1331 = vmul.f32 %v1235, %v1305
          %v1332 = vmul.f32 %v1236, %v1315
          %v1333 = vmul.f32 %v1237, %v1325
          %v1335 = vperm.slane %v752, 0
          %v1337 = vmul.f32 %v1326, %v1335
          %v1338 = vmul.f32 %v1327, %v1335
          %v1339 = vmul.f32 %v1328, %v1335
          %v1340 = vmul.f32 %v1329, %v1335
          %v1341 = vmul.f32 %v1330, %v1335
          %v1342 = vmul.f32 %v1331, %v1335
          %v1343 = vmul.f32 %v1332, %v1335
          %v1344 = vmul.f32 %v1333, %v1335
          %v1346 = vperm.slane %v753, 0
          %v1348 = vadd.f32 %v1337, %v1346
          %v1349 = vadd.f32 %v1338, %v1346
          %v1350 = vadd.f32 %v1339, %v1346
          %v1351 = vadd.f32 %v1340, %v1346
          %v1352 = vadd.f32 %v1341, %v1346
          %v1353 = vadd.f32 %v1342, %v1346
          %v1354 = vadd.f32 %v1343, %v1346
          %v1355 = vadd.f32 %v1344, %v1346
          %1356 = vst [vmem:[#allocation2] sm:$0xff] %v1348
          %1357 = vst [vmem:[#allocation2 + $0x8] sm:$0xff] %v1349
          %1358 = vst [vmem:[#allocation2 + $0x10] sm:$0xff] %v1350
          %1359 = vst [vmem:[#allocation2 + $0x18] sm:$0xff] %v1351
          %1360 = vst [vmem:[#allocation2 + $0x20] sm:$0xff] %v1352
          %1361 = vst [vmem:[#allocation2 + $0x28] sm:$0xff] %v1353
          %1362 = vst [vmem:[#allocation2 + $0x30] sm:$0xff] %v1354
          %1363 = vst [vmem:[#allocation2 + $0x38] sm:$0xff] %v1355
        $region92: #{tpu_custom_call.1} parent=67 // pred_fallthru
          _
        %v1364 = vld [vmem:[%s736] sm:$0xff]
        %v1365 = vld [vmem:[%s736 + $0x8] sm:$0xff]
        %v1366 = vld [vmem:[%s736 + $0x10] sm:$0xff]
        %v1367 = vld [vmem:[%s736 + $0x18] sm:$0xff]
        %v1368 = vld [vmem:[%s739] sm:$0x1]
        %v1369 = vld [vmem:[%s616] sm:$0x1]
        %v1370 = vld [vmem:[%s742] sm:$0x1]
        %v1371 = vld [vmem:[%s625] sm:$0x1]
        %v1372 = vld [vmem:[%s745] sm:$0x1]
        %v1373 = vlaneseq
        %v1374 = vand.u32 %v1373, 127
        %vm1375 = vcmp.ge.s32.totalorder %v1374, 64
        %vm1376 = vcmp.lt.s32.totalorder %v1374, 96
        %vm1377 = vmand %vm1375, %vm1376
        %v1379 = vperm.slane %v1368, 0
        %vm1381 = vcmask 261120
        %v1383 = vsel %vm1381, 0.0, 0
        %1385 = vmatpush.msra.mxu0 0.0
        %1386 = vmatpush.msra.mxu0 0.0
        %1387 = vmatpush.msra.mxu0 0.0
        %1388 = vmatpush.msra.mxu0 0.0
        %1389 = vmatpush.msra.mxu0 0.0
        %1390 = vmatpush.msra.mxu0 0.0
        %1391 = vmatpush.msra.mxu0 0.0
        %1392 = vmatpush.msra.mxu0 0.0
        %1393 = vmatpush.msra.mxu0 0.0
        %1394 = vmatpush.msra.mxu0 0.0
        %1395 = vmatpush.msra.mxu0 0.0
        %1396 = vmatpush.msra.mxu0 0.0
        %1397 = vmatpush.msra.mxu0 %v1367
        %1398 = vmatpush.msra.mxu0 %v1366
        %1399 = vmatpush.msra.mxu0 %v1365
        %1400 = vmatpush.msra.mxu0 %v1364
        %1401 = vmatmul.f32.gmra.mxu0 %v1383
        %v1402 = vpop.f32.mrf.mxu0
        %v1403 = vadd.f32 %v1379, %v1402
        %1404 = vdwg.mxu0
        %v1405 = vld [vmem:[#allocation2] sm:$0xff]
        %1406 = vadd.xlane.f32.xlu0 %v1403
        %v1407 = vpop.xlane.xlu0 %1406
        %v1408 = vrcp.pop 128.0
        %v1409 = vmul.f32 128.0, %v1408
        %v1410 = vsub.f32 1.0, %v1409
        %v1411 = vmul.f32 %v1408, %v1410
        %v1412 = vadd.f32 %v1408, %v1411
        %vm1413 = vweird.f32 %v1408
        %v1414 = vsel %vm1413, %v1408, %v1412
        %v1415 = vmul.f32 %v1407, %v1414
        %v1416 = vmul.f32 %v1403, %v1403
        %1417 = vadd.xlane.f32.xlu0 %v1416
        %v1418 = vpop.xlane.xlu0 %1417
        %v1419 = vmul.f32 %v1418, %v1414
        %v1420 = vmul.f32 %v1415, %v1415
        %v1421 = vsub.f32 %v1419, %v1420
        %v1422 = vmax.f32 %v1421, 0.0
        %v1423 = vsub.f32 %v1403, %v1415
        %v1424 = vadd.f32 %v1422, 1e-05
        %v1425 = vrsqrt.pop %v1424
        %v1426 = vmul.f32 %v1425, %v1424
        %v1427 = vmul.f32 %v1426, %v1425
        %v1428 = vmul.f32 0.5, %v1427
        %v1429 = vsub.f32 1.5, %v1428
        %v1430 = vmul.f32 %v1425, %v1429
        %vm1431 = vweird.f32 %v1424
        %vm1432 = vweird.f32 %v1425
        %vm1433 = vmor %vm1431, %vm1432
        %v1434 = vsel %vm1433, %v1425, %v1430
        %v1435 = vmul.f32 %v1423, %v1434
        %v1437 = vperm.slane %v1369, 0
        %v1439 = vmul.f32 %v1435, %v1437
        %v1441 = vperm.slane %v1370, 0
        %v1443 = vadd.f32 %v1439, %v1441
        %v1444 = vadd.f32 %v1405, %v1443
        %v1445 = vtanh.pop %v1444
        %v1446 = vxor.u32 %v1444, 2147483648
        %v1447 = vmul.f32 %v1446, 1.442695
        %v1448 = vpow.pop %v1447
        %v1449 = vadd.f32 %v1448, 1.0
        %v1450 = vrcp.pop %v1449
        %v1451 = vmul.f32 %v1449, %v1450
        %v1452 = vsub.f32 1.0, %v1451
        %v1453 = vmul.f32 %v1450, %v1452
        %v1454 = vadd.f32 %v1450, %v1453
        %vm1455 = vweird.f32 %v1449
        %vm1456 = vweird.f32 %v1450
        %vm1457 = vmor %vm1455, %vm1456
        %v1458 = vsel %vm1457, %v1450, %v1454
        %v1459 = vand.u32 2147483647, %v1449
        %vm1460 = vcmp.eq.f32.partialorder %v1459, 8.507059e+37
        %v1461 = vand.u32 %v1449, 2147483648
        %v1462 = vor.u32 1.1754944e-38, %v1461
        %v1463 = vsel %vm1460, %v1462, %v1458
        %v1464 = vmul.f32 1.0, %v1463
        %v1465 = vsel %vm1377, %v1445, %v1464
        %v1466 = vmul.f32 %v1465, 0.0
        %1468 = vrot.lane.b32.xlu0 %v1465, 64
        %v1469 = vpop.permute.xlu0 %1468
        %v1471 = vmul.f32 %v1465, %v1469
        %1473 = vrot.lane.b32.xlu0 %v1471, 32
        %v1474 = vpop.permute.xlu0 %1473
        %v1476 = vadd.f32 %v1466, %v1474
        %v1477 = vtanh.pop %v1476
        %1479 = vrot.lane.b32.xlu0 %v1477, 96
        %v1480 = vpop.permute.xlu0 %1479
        %v1482 = vsel %vm1381, %v1480, 0.0
        %1483 = vadd.xlane.f32.xlu0 %v1482
        %v1484 = vpop.xlane.xlu0 %1483
        %v1485 = vrcp.pop 32.0
        %v1486 = vmul.f32 32.0, %v1485
        %v1487 = vsub.f32 1.0, %v1486
        %v1488 = vmul.f32 %v1485, %v1487
        %v1489 = vadd.f32 %v1485, %v1488
        %vm1490 = vweird.f32 %v1485
        %v1491 = vsel %vm1490, %v1485, %v1489
        %v1492 = vmul.f32 %v1484, %v1491
        %v1493 = vmul.f32 %v1477, %v1477
        %1495 = vrot.lane.b32.xlu0 %v1493, 96
        %v1496 = vpop.permute.xlu0 %1495
        %v1498 = vsel %vm1381, %v1496, 0.0
        %1499 = vadd.xlane.f32.xlu0 %v1498
        %v1500 = vpop.xlane.xlu0 %1499
        %v1501 = vmul.f32 %v1500, %v1491
        %v1502 = vmul.f32 %v1492, %v1492
        %v1503 = vsub.f32 %v1501, %v1502
        %v1504 = vmax.f32 %v1503, 0.0
        %v1505 = vsub.f32 %v1477, %v1492
        %v1506 = vadd.f32 %v1504, 1e-05
        %v1507 = vrsqrt.pop %v1506
        %v1508 = vmul.f32 %v1507, %v1506
        %v1509 = vmul.f32 %v1508, %v1507
        %v1510 = vmul.f32 0.5, %v1509
        %v1511 = vsub.f32 1.5, %v1510
        %v1512 = vmul.f32 %v1507, %v1511
        %vm1513 = vweird.f32 %v1506
        %vm1514 = vweird.f32 %v1507
        %vm1515 = vmor %vm1513, %vm1514
        %v1516 = vsel %vm1515, %v1507, %v1512
        %v1517 = vmul.f32 %v1505, %v1516
        %v1519 = vperm.slane %v1371, 0
        %1520 = vrot.lane.b32.xlu0 %v1519, 32
        %v1521 = vpop.permute.xlu0 %1520
        %v1523 = vmul.f32 %v1517, %v1521
        %v1525 = vperm.slane %v1372, 0
        %1526 = vrot.lane.b32.xlu0 %v1525, 32
        %v1527 = vpop.permute.xlu0 %1526
        %v1529 = vadd.f32 %v1523, %v1527
        %1531 = vrot.lane.b32.xlu0 %v1529, 64
        %v1532 = vpop.permute.xlu0 %1531
        %v1534 = vmul.f32 %v1465, %v1532
        %1536 = vrot.lane.b32.xlu0 %v1534, 32
        %v1537 = vpop.permute.xlu0 %1536
        %1539 = vst.msk [vmem:[%s750] sm:$0xff] %vm1381, %v1537
        %v1540 = vsel %vm1381, %v1537, 0
        %1542 = vmatpush.msra.mxu0 0.0
        %1543 = vmatpush.msra.mxu0 0.0
        %1544 = vmatpush.msra.mxu0 0.0
        %1545 = vmatpush.msra.mxu0 0.0
        %1546 = vmatpush.msra.mxu0 0.0
        %1547 = vmatpush.msra.mxu0 0.0
        %1548 = vmatpush.msra.mxu0 0.0
        %1549 = vmatpush.msra.mxu0 0.0
        %1550 = vmatpush.msra.mxu0 0.0
        %1551 = vmatpush.msra.mxu0 0.0
        %1552 = vmatpush.msra.mxu0 0.0
        %1553 = vmatpush.msra.mxu0 0.0
        %1554 = vmatpush.msra.mxu0 %v1367
        %1555 = vmatpush.msra.mxu0 %v1366
        %1556 = vmatpush.msra.mxu0 %v1365
        %1557 = vmatpush.msra.mxu0 %v1364
        %1558 = vmatmul.f32.gmra.mxu0 %v1540
        %v1559 = vpop.f32.mrf.mxu0
        %v1560 = vadd.f32 %v1379, %v1559
        %1561 = vdwg.mxu0
        %s1562 = scalar_lea.vmem [#allocation2], 8
        %v1563 = vld [vmem:[%s1562] sm:$0xff]
        %1564 = vadd.xlane.f32.xlu0 %v1560
        %v1565 = vpop.xlane.xlu0 %1564
        %v1566 = vmul.f32 %v1565, %v1414
        %v1567 = vmul.f32 %v1560, %v1560
        %1568 = vadd.xlane.f32.xlu0 %v1567
        %v1569 = vpop.xlane.xlu0 %1568
        %v1570 = vmul.f32 %v1569, %v1414
        %v1571 = vmul.f32 %v1566, %v1566
        %v1572 = vsub.f32 %v1570, %v1571
        %v1573 = vmax.f32 %v1572, 0.0
        %v1574 = vsub.f32 %v1560, %v1566
        %v1575 = vadd.f32 %v1573, 1e-05
        %v1576 = vrsqrt.pop %v1575
        %v1577 = vmul.f32 %v1576, %v1575
        %v1578 = vmul.f32 %v1577, %v1576
        %v1579 = vmul.f32 0.5, %v1578
        %v1580 = vsub.f32 1.5, %v1579
        %v1581 = vmul.f32 %v1576, %v1580
        %vm1582 = vweird.f32 %v1575
        %vm1583 = vweird.f32 %v1576
        %vm1584 = vmor %vm1582, %vm1583
        %v1585 = vsel %vm1584, %v1576, %v1581
        %v1586 = vmul.f32 %v1574, %v1585
        %v1587 = vmul.f32 %v1586, %v1437
        %v1588 = vadd.f32 %v1587, %v1441
        %v1589 = vadd.f32 %v1563, %v1588
        %v1590 = vtanh.pop %v1589
        %v1591 = vxor.u32 %v1589, 2147483648
        %v1592 = vmul.f32 %v1591, 1.442695
        %v1593 = vpow.pop %v1592
        %v1594 = vadd.f32 %v1593, 1.0
        %v1595 = vrcp.pop %v1594
        %v1596 = vmul.f32 %v1594, %v1595
        %v1597 = vsub.f32 1.0, %v1596
        %v1598 = vmul.f32 %v1595, %v1597
        %v1599 = vadd.f32 %v1595, %v1598
        %vm1600 = vweird.f32 %v1594
        %vm1601 = vweird.f32 %v1595
        %vm1602 = vmor %vm1600, %vm1601
        %v1603 = vsel %vm1602, %v1595, %v1599
        %v1604 = vand.u32 2147483647, %v1594
        %vm1605 = vcmp.eq.f32.partialorder %v1604, 8.507059e+37
        %v1606 = vand.u32 %v1594, 2147483648
        %v1607 = vor.u32 1.1754944e-38, %v1606
        %v1608 = vsel %vm1605, %v1607, %v1603
        %v1609 = vmul.f32 1.0, %v1608
        %v1610 = vsel %vm1377, %v1590, %v1609
        %v1611 = vmul.f32 %v1610, %v1476
        %1613 = vrot.lane.b32.xlu0 %v1610, 64
        %v1614 = vpop.permute.xlu0 %1613
        %v1616 = vmul.f32 %v1610, %v1614
        %1618 = vrot.lane.b32.xlu0 %v1616, 32
        %v1619 = vpop.permute.xlu0 %1618
        %v1621 = vadd.f32 %v1611, %v1619
        %v1622 = vtanh.pop %v1621
        %1624 = vrot.lane.b32.xlu0 %v1622, 96
        %v1625 = vpop.permute.xlu0 %1624
        %v1627 = vsel %vm1381, %v1625, 0.0
        %1628 = vadd.xlane.f32.xlu0 %v1627
        %v1629 = vpop.xlane.xlu0 %1628
        %v1630 = vmul.f32 %v1629, %v1491
        %v1631 = vmul.f32 %v1622, %v1622
        %1633 = vrot.lane.b32.xlu0 %v1631, 96
        %v1634 = vpop.permute.xlu0 %1633
        %v1636 = vsel %vm1381, %v1634, 0.0
        %1637 = vadd.xlane.f32.xlu0 %v1636
        %v1638 = vpop.xlane.xlu0 %1637
        %v1639 = vmul.f32 %v1638, %v1491
        %v1640 = vmul.f32 %v1630, %v1630
        %v1641 = vsub.f32 %v1639, %v1640
        %v1642 = vmax.f32 %v1641, 0.0
        %v1643 = vsub.f32 %v1622, %v1630
        %v1644 = vadd.f32 %v1642, 1e-05
        %v1645 = vrsqrt.pop %v1644
        %v1646 = vmul.f32 %v1645, %v1644
        %v1647 = vmul.f32 %v1646, %v1645
        %v1648 = vmul.f32 0.5, %v1647
        %v1649 = vsub.f32 1.5, %v1648
        %v1650 = vmul.f32 %v1645, %v1649
        %vm1651 = vweird.f32 %v1644
        %vm1652 = vweird.f32 %v1645
        %vm1653 = vmor %vm1651, %vm1652
        %v1654 = vsel %vm1653, %v1645, %v1650
        %v1655 = vmul.f32 %v1643, %v1654
        %v1656 = vmul.f32 %v1655, %v1521
        %v1657 = vadd.f32 %v1656, %v1527
        %1659 = vrot.lane.b32.xlu0 %v1657, 64
        %v1660 = vpop.permute.xlu0 %1659
        %v1662 = vmul.f32 %v1610, %v1660
        %1664 = vrot.lane.b32.xlu0 %v1662, 32
        %v1665 = vpop.permute.xlu0 %1664
        %s1667 = scalar_lea.vmem %s750, 8
        %1668 = vst.msk [vmem:[%s1667] sm:$0xff] %vm1381, %v1665
        %v1669 = vsel %vm1381, %v1665, 0
        %1671 = vmatpush.msra.mxu0 0.0
        %1672 = vmatpush.msra.mxu0 0.0
        %1673 = vmatpush.msra.mxu0 0.0
        %1674 = vmatpush.msra.mxu0 0.0
        %1675 = vmatpush.msra.mxu0 0.0
        %1676 = vmatpush.msra.mxu0 0.0
        %1677 = vmatpush.msra.mxu0 0.0
        %1678 = vmatpush.msra.mxu0 0.0
        %1679 = vmatpush.msra.mxu0 0.0
        %1680 = vmatpush.msra.mxu0 0.0
        %1681 = vmatpush.msra.mxu0 0.0
        %1682 = vmatpush.msra.mxu0 0.0
        %1683 = vmatpush.msra.mxu0 %v1367
        %1684 = vmatpush.msra.mxu0 %v1366
        %1685 = vmatpush.msra.mxu0 %v1365
        %1686 = vmatpush.msra.mxu0 %v1364
        %1687 = vmatmul.f32.gmra.mxu0 %v1669
        %v1688 = vpop.f32.mrf.mxu0
        %v1689 = vadd.f32 %v1379, %v1688
        %1690 = vdwg.mxu0
        %s1691 = scalar_lea.vmem [#allocation2], 16
        %v1692 = vld [vmem:[%s1691] sm:$0xff]
        %1693 = vadd.xlane.f32.xlu0 %v1689
        %v1694 = vpop.xlane.xlu0 %1693
        %v1695 = vmul.f32 %v1694, %v1414
        %v1696 = vmul.f32 %v1689, %v1689
        %1697 = vadd.xlane.f32.xlu0 %v1696
        %v1698 = vpop.xlane.xlu0 %1697
        %v1699 = vmul.f32 %v1698, %v1414
        %v1700 = vmul.f32 %v1695, %v1695
        %v1701 = vsub.f32 %v1699, %v1700
        %v1702 = vmax.f32 %v1701, 0.0
        %v1703 = vsub.f32 %v1689, %v1695
        %v1704 = vadd.f32 %v1702, 1e-05
        %v1705 = vrsqrt.pop %v1704
        %v1706 = vmul.f32 %v1705, %v1704
        %v1707 = vmul.f32 %v1706, %v1705
        %v1708 = vmul.f32 0.5, %v1707
        %v1709 = vsub.f32 1.5, %v1708
        %v1710 = vmul.f32 %v1705, %v1709
        %vm1711 = vweird.f32 %v1704
        %vm1712 = vweird.f32 %v1705
        %vm1713 = vmor %vm1711, %vm1712
        %v1714 = vsel %vm1713, %v1705, %v1710
        %v1715 = vmul.f32 %v1703, %v1714
        %v1716 = vmul.f32 %v1715, %v1437
        %v1717 = vadd.f32 %v1716, %v1441
        %v1718 = vadd.f32 %v1692, %v1717
        %v1719 = vtanh.pop %v1718
        %v1720 = vxor.u32 %v1718, 2147483648
        %v1721 = vmul.f32 %v1720, 1.442695
        %v1722 = vpow.pop %v1721
        %v1723 = vadd.f32 %v1722, 1.0
        %v1724 = vrcp.pop %v1723
        %v1725 = vmul.f32 %v1723, %v1724
        %v1726 = vsub.f32 1.0, %v1725
        %v1727 = vmul.f32 %v1724, %v1726
        %v1728 = vadd.f32 %v1724, %v1727
        %vm1729 = vweird.f32 %v1723
        %vm1730 = vweird.f32 %v1724
        %vm1731 = vmor %vm1729, %vm1730
        %v1732 = vsel %vm1731, %v1724, %v1728
        %v1733 = vand.u32 2147483647, %v1723
        %vm1734 = vcmp.eq.f32.partialorder %v1733, 8.507059e+37
        %v1735 = vand.u32 %v1723, 2147483648
        %v1736 = vor.u32 1.1754944e-38, %v1735
        %v1737 = vsel %vm1734, %v1736, %v1732
        %v1738 = vmul.f32 1.0, %v1737
        %v1739 = vsel %vm1377, %v1719, %v1738
        %v1740 = vmul.f32 %v1739, %v1621
        %1742 = vrot.lane.b32.xlu0 %v1739, 64
        %v1743 = vpop.permute.xlu0 %1742
        %v1745 = vmul.f32 %v1739, %v1743
        %1747 = vrot.lane.b32.xlu0 %v1745, 32
        %v1748 = vpop.permute.xlu0 %1747
        %v1750 = vadd.f32 %v1740, %v1748
        %v1751 = vtanh.pop %v1750
        %1753 = vrot.lane.b32.xlu0 %v1751, 96
        %v1754 = vpop.permute.xlu0 %1753
        %v1756 = vsel %vm1381, %v1754, 0.0
        %1757 = vadd.xlane.f32.xlu0 %v1756
        %v1758 = vpop.xlane.xlu0 %1757
        %v1759 = vmul.f32 %v1758, %v1491
        %v1760 = vmul.f32 %v1751, %v1751
        %1762 = vrot.lane.b32.xlu0 %v1760, 96
        %v1763 = vpop.permute.xlu0 %1762
        %v1765 = vsel %vm1381, %v1763, 0.0
        %1766 = vadd.xlane.f32.xlu0 %v1765
        %v1767 = vpop.xlane.xlu0 %1766
        %v1768 = vmul.f32 %v1767, %v1491
        %v1769 = vmul.f32 %v1759, %v1759
        %v1770 = vsub.f32 %v1768, %v1769
        %v1771 = vmax.f32 %v1770, 0.0
        %v1772 = vsub.f32 %v1751, %v1759
        %v1773 = vadd.f32 %v1771, 1e-05
        %v1774 = vrsqrt.pop %v1773
        %v1775 = vmul.f32 %v1774, %v1773
        %v1776 = vmul.f32 %v1775, %v1774
        %v1777 = vmul.f32 0.5, %v1776
        %v1778 = vsub.f32 1.5, %v1777
        %v1779 = vmul.f32 %v1774, %v1778
        %vm1780 = vweird.f32 %v1773
        %vm1781 = vweird.f32 %v1774
        %vm1782 = vmor %vm1780, %vm1781
        %v1783 = vsel %vm1782, %v1774, %v1779
        %v1784 = vmul.f32 %v1772, %v1783
        %v1785 = vmul.f32 %v1784, %v1521
        %v1786 = vadd.f32 %v1785, %v1527
        %1788 = vrot.lane.b32.xlu0 %v1786, 64
        %v1789 = vpop.permute.xlu0 %1788
        %v1791 = vmul.f32 %v1739, %v1789
        %1793 = vrot.lane.b32.xlu0 %v1791, 32
        %v1794 = vpop.permute.xlu0 %1793
        %s1796 = scalar_lea.vmem %s750, 16
        %1797 = vst.msk [vmem:[%s1796] sm:$0xff] %vm1381, %v1794
        %v1798 = vsel %vm1381, %v1794, 0
        %1800 = vmatpush.msra.mxu0 0.0
        %1801 = vmatpush.msra.mxu0 0.0
        %1802 = vmatpush.msra.mxu0 0.0
        %1803 = vmatpush.msra.mxu0 0.0
        %1804 = vmatpush.msra.mxu0 0.0
        %1805 = vmatpush.msra.mxu0 0.0
        %1806 = vmatpush.msra.mxu0 0.0
        %1807 = vmatpush.msra.mxu0 0.0
        %1808 = vmatpush.msra.mxu0 0.0
        %1809 = vmatpush.msra.mxu0 0.0
        %1810 = vmatpush.msra.mxu0 0.0
        %1811 = vmatpush.msra.mxu0 0.0
        %1812 = vmatpush.msra.mxu0 %v1367
        %1813 = vmatpush.msra.mxu0 %v1366
        %1814 = vmatpush.msra.mxu0 %v1365
        %1815 = vmatpush.msra.mxu0 %v1364
        %1816 = vmatmul.f32.gmra.mxu0 %v1798
        %v1817 = vpop.f32.mrf.mxu0
        %v1818 = vadd.f32 %v1379, %v1817
        %1819 = vdwg.mxu0
        %s1820 = scalar_lea.vmem [#allocation2], 24
        %v1821 = vld [vmem:[%s1820] sm:$0xff]
        %1822 = vadd.xlane.f32.xlu0 %v1818
        %v1823 = vpop.xlane.xlu0 %1822
        %v1824 = vmul.f32 %v1823, %v1414
        %v1825 = vmul.f32 %v1818, %v1818
        %1826 = vadd.xlane.f32.xlu0 %v1825
        %v1827 = vpop.xlane.xlu0 %1826
        %v1828 = vmul.f32 %v1827, %v1414
        %v1829 = vmul.f32 %v1824, %v1824
        %v1830 = vsub.f32 %v1828, %v1829
        %v1831 = vmax.f32 %v1830, 0.0
        %v1832 = vsub.f32 %v1818, %v1824
        %v1833 = vadd.f32 %v1831, 1e-05
        %v1834 = vrsqrt.pop %v1833
        %v1835 = vmul.f32 %v1834, %v1833
        %v1836 = vmul.f32 %v1835, %v1834
        %v1837 = vmul.f32 0.5, %v1836
        %v1838 = vsub.f32 1.5, %v1837
        %v1839 = vmul.f32 %v1834, %v1838
        %vm1840 = vweird.f32 %v1833
        %vm1841 = vweird.f32 %v1834
        %vm1842 = vmor %vm1840, %vm1841
        %v1843 = vsel %vm1842, %v1834, %v1839
        %v1844 = vmul.f32 %v1832, %v1843
        %v1845 = vmul.f32 %v1844, %v1437
        %v1846 = vadd.f32 %v1845, %v1441
        %v1847 = vadd.f32 %v1821, %v1846
        %v1848 = vtanh.pop %v1847
        %v1849 = vxor.u32 %v1847, 2147483648
        %v1850 = vmul.f32 %v1849, 1.442695
        %v1851 = vpow.pop %v1850
        %v1852 = vadd.f32 %v1851, 1.0
        %v1853 = vrcp.pop %v1852
        %v1854 = vmul.f32 %v1852, %v1853
        %v1855 = vsub.f32 1.0, %v1854
        %v1856 = vmul.f32 %v1853, %v1855
        %v1857 = vadd.f32 %v1853, %v1856
        %vm1858 = vweird.f32 %v1852
        %vm1859 = vweird.f32 %v1853
        %vm1860 = vmor %vm1858, %vm1859
        %v1861 = vsel %vm1860, %v1853, %v1857
        %v1862 = vand.u32 2147483647, %v1852
        %vm1863 = vcmp.eq.f32.partialorder %v1862, 8.507059e+37
        %v1864 = vand.u32 %v1852, 2147483648
        %v1865 = vor.u32 1.1754944e-38, %v1864
        %v1866 = vsel %vm1863, %v1865, %v1861
        %v1867 = vmul.f32 1.0, %v1866
        %v1868 = vsel %vm1377, %v1848, %v1867
        %v1869 = vmul.f32 %v1868, %v1750
        %1871 = vrot.lane.b32.xlu0 %v1868, 64
        %v1872 = vpop.permute.xlu0 %1871
        %v1874 = vmul.f32 %v1868, %v1872
        %1876 = vrot.lane.b32.xlu0 %v1874, 32
        %v1877 = vpop.permute.xlu0 %1876
        %v1879 = vadd.f32 %v1869, %v1877
        %v1880 = vtanh.pop %v1879
        %1882 = vrot.lane.b32.xlu0 %v1880, 96
        %v1883 = vpop.permute.xlu0 %1882
        %v1885 = vsel %vm1381, %v1883, 0.0
        %1886 = vadd.xlane.f32.xlu0 %v1885
        %v1887 = vpop.xlane.xlu0 %1886
        %v1888 = vmul.f32 %v1887, %v1491
        %v1889 = vmul.f32 %v1880, %v1880
        %1891 = vrot.lane.b32.xlu0 %v1889, 96
        %v1892 = vpop.permute.xlu0 %1891
        %v1894 = vsel %vm1381, %v1892, 0.0
        %1895 = vadd.xlane.f32.xlu0 %v1894
        %v1896 = vpop.xlane.xlu0 %1895
        %v1897 = vmul.f32 %v1896, %v1491
        %v1898 = vmul.f32 %v1888, %v1888
        %v1899 = vsub.f32 %v1897, %v1898
        %v1900 = vmax.f32 %v1899, 0.0
        %v1901 = vsub.f32 %v1880, %v1888
        %v1902 = vadd.f32 %v1900, 1e-05
        %v1903 = vrsqrt.pop %v1902
        %v1904 = vmul.f32 %v1903, %v1902
        %v1905 = vmul.f32 %v1904, %v1903
        %v1906 = vmul.f32 0.5, %v1905
        %v1907 = vsub.f32 1.5, %v1906
        %v1908 = vmul.f32 %v1903, %v1907
        %vm1909 = vweird.f32 %v1902
        %vm1910 = vweird.f32 %v1903
        %vm1911 = vmor %vm1909, %vm1910
        %v1912 = vsel %vm1911, %v1903, %v1908
        %v1913 = vmul.f32 %v1901, %v1912
        %v1914 = vmul.f32 %v1913, %v1521
        %v1915 = vadd.f32 %v1914, %v1527
        %1917 = vrot.lane.b32.xlu0 %v1915, 64
        %v1918 = vpop.permute.xlu0 %1917
        %v1920 = vmul.f32 %v1868, %v1918
        %1922 = vrot.lane.b32.xlu0 %v1920, 32
        %v1923 = vpop.permute.xlu0 %1922
        %s1925 = scalar_lea.vmem %s750, 24
        %1926 = vst.msk [vmem:[%s1925] sm:$0xff] %vm1381, %v1923
        %v1927 = vsel %vm1381, %v1923, 0
        %1929 = vmatpush.msra.mxu0 0.0
        %1930 = vmatpush.msra.mxu0 0.0
        %1931 = vmatpush.msra.mxu0 0.0
        %1932 = vmatpush.msra.mxu0 0.0
        %1933 = vmatpush.msra.mxu0 0.0
        %1934 = vmatpush.msra.mxu0 0.0
        %1935 = vmatpush.msra.mxu0 0.0
        %1936 = vmatpush.msra.mxu0 0.0
        %1937 = vmatpush.msra.mxu0 0.0
        %1938 = vmatpush.msra.mxu0 0.0
        %1939 = vmatpush.msra.mxu0 0.0
        %1940 = vmatpush.msra.mxu0 0.0
        %1941 = vmatpush.msra.mxu0 %v1367
        %1942 = vmatpush.msra.mxu0 %v1366
        %1943 = vmatpush.msra.mxu0 %v1365
        %1944 = vmatpush.msra.mxu0 %v1364
        %1945 = vmatmul.f32.gmra.mxu0 %v1927
        %v1946 = vpop.f32.mrf.mxu0
        %v1947 = vadd.f32 %v1379, %v1946
        %1948 = vdwg.mxu0
        %s1949 = scalar_lea.vmem [#allocation2], 32
        %v1950 = vld [vmem:[%s1949] sm:$0xff]
        %1951 = vadd.xlane.f32.xlu0 %v1947
        %v1952 = vpop.xlane.xlu0 %1951
        %v1953 = vmul.f32 %v1952, %v1414
        %v1954 = vmul.f32 %v1947, %v1947
        %1955 = vadd.xlane.f32.xlu0 %v1954
        %v1956 = vpop.xlane.xlu0 %1955
        %v1957 = vmul.f32 %v1956, %v1414
        %v1958 = vmul.f32 %v1953, %v1953
        %v1959 = vsub.f32 %v1957, %v1958
        %v1960 = vmax.f32 %v1959, 0.0
        %v1961 = vsub.f32 %v1947, %v1953
        %v1962 = vadd.f32 %v1960, 1e-05
        %v1963 = vrsqrt.pop %v1962
        %v1964 = vmul.f32 %v1963, %v1962
        %v1965 = vmul.f32 %v1964, %v1963
        %v1966 = vmul.f32 0.5, %v1965
        %v1967 = vsub.f32 1.5, %v1966
        %v1968 = vmul.f32 %v1963, %v1967
        %vm1969 = vweird.f32 %v1962
        %vm1970 = vweird.f32 %v1963
        %vm1971 = vmor %vm1969, %vm1970
        %v1972 = vsel %vm1971, %v1963, %v1968
        %v1973 = vmul.f32 %v1961, %v1972
        %v1974 = vmul.f32 %v1973, %v1437
        %v1975 = vadd.f32 %v1974, %v1441
        %v1976 = vadd.f32 %v1950, %v1975
        %v1977 = vtanh.pop %v1976
        %v1978 = vxor.u32 %v1976, 2147483648
        %v1979 = vmul.f32 %v1978, 1.442695
        %v1980 = vpow.pop %v1979
        %v1981 = vadd.f32 %v1980, 1.0
        %v1982 = vrcp.pop %v1981
        %v1983 = vmul.f32 %v1981, %v1982
        %v1984 = vsub.f32 1.0, %v1983
        %v1985 = vmul.f32 %v1982, %v1984
        %v1986 = vadd.f32 %v1982, %v1985
        %vm1987 = vweird.f32 %v1981
        %vm1988 = vweird.f32 %v1982
        %vm1989 = vmor %vm1987, %vm1988
        %v1990 = vsel %vm1989, %v1982, %v1986
        %v1991 = vand.u32 2147483647, %v1981
        %vm1992 = vcmp.eq.f32.partialorder %v1991, 8.507059e+37
        %v1993 = vand.u32 %v1981, 2147483648
        %v1994 = vor.u32 1.1754944e-38, %v1993
        %v1995 = vsel %vm1992, %v1994, %v1990
        %v1996 = vmul.f32 1.0, %v1995
        %v1997 = vsel %vm1377, %v1977, %v1996
        %v1998 = vmul.f32 %v1997, %v1879
        %2000 = vrot.lane.b32.xlu0 %v1997, 64
        %v2001 = vpop.permute.xlu0 %2000
        %v2003 = vmul.f32 %v1997, %v2001
        %2005 = vrot.lane.b32.xlu0 %v2003, 32
        %v2006 = vpop.permute.xlu0 %2005
        %v2008 = vadd.f32 %v1998, %v2006
        %v2009 = vtanh.pop %v2008
        %2011 = vrot.lane.b32.xlu0 %v2009, 96
        %v2012 = vpop.permute.xlu0 %2011
        %v2014 = vsel %vm1381, %v2012, 0.0
        %2015 = vadd.xlane.f32.xlu0 %v2014
        %v2016 = vpop.xlane.xlu0 %2015
        %v2017 = vmul.f32 %v2016, %v1491
        %v2018 = vmul.f32 %v2009, %v2009
        %2020 = vrot.lane.b32.xlu0 %v2018, 96
        %v2021 = vpop.permute.xlu0 %2020
        %v2023 = vsel %vm1381, %v2021, 0.0
        %2024 = vadd.xlane.f32.xlu0 %v2023
        %v2025 = vpop.xlane.xlu0 %2024
        %v2026 = vmul.f32 %v2025, %v1491
        %v2027 = vmul.f32 %v2017, %v2017
        %v2028 = vsub.f32 %v2026, %v2027
        %v2029 = vmax.f32 %v2028, 0.0
        %v2030 = vsub.f32 %v2009, %v2017
        %v2031 = vadd.f32 %v2029, 1e-05
        %v2032 = vrsqrt.pop %v2031
        %v2033 = vmul.f32 %v2032, %v2031
        %v2034 = vmul.f32 %v2033, %v2032
        %v2035 = vmul.f32 0.5, %v2034
        %v2036 = vsub.f32 1.5, %v2035
        %v2037 = vmul.f32 %v2032, %v2036
        %vm2038 = vweird.f32 %v2031
        %vm2039 = vweird.f32 %v2032
        %vm2040 = vmor %vm2038, %vm2039
        %v2041 = vsel %vm2040, %v2032, %v2037
        %v2042 = vmul.f32 %v2030, %v2041
        %v2043 = vmul.f32 %v2042, %v1521
        %v2044 = vadd.f32 %v2043, %v1527
        %2046 = vrot.lane.b32.xlu0 %v2044, 64
        %v2047 = vpop.permute.xlu0 %2046
        %v2049 = vmul.f32 %v1997, %v2047
        %2051 = vrot.lane.b32.xlu0 %v2049, 32
        %v2052 = vpop.permute.xlu0 %2051
        %s2054 = scalar_lea.vmem %s750, 32
        %2055 = vst.msk [vmem:[%s2054] sm:$0xff] %vm1381, %v2052
        %v2056 = vsel %vm1381, %v2052, 0
        %2058 = vmatpush.msra.mxu0 0.0
        %2059 = vmatpush.msra.mxu0 0.0
        %2060 = vmatpush.msra.mxu0 0.0
        %2061 = vmatpush.msra.mxu0 0.0
        %2062 = vmatpush.msra.mxu0 0.0
        %2063 = vmatpush.msra.mxu0 0.0
        %2064 = vmatpush.msra.mxu0 0.0
        %2065 = vmatpush.msra.mxu0 0.0
        %2066 = vmatpush.msra.mxu0 0.0
        %2067 = vmatpush.msra.mxu0 0.0
        %2068 = vmatpush.msra.mxu0 0.0
        %2069 = vmatpush.msra.mxu0 0.0
        %2070 = vmatpush.msra.mxu0 %v1367
        %2071 = vmatpush.msra.mxu0 %v1366
        %2072 = vmatpush.msra.mxu0 %v1365
        %2073 = vmatpush.msra.mxu0 %v1364
        %2074 = vmatmul.f32.gmra.mxu0 %v2056
        %v2075 = vpop.f32.mrf.mxu0
        %v2076 = vadd.f32 %v1379, %v2075
        %2077 = vdwg.mxu0
        %s2078 = scalar_lea.vmem [#allocation2], 40
        %v2079 = vld [vmem:[%s2078] sm:$0xff]
        %2080 = vadd.xlane.f32.xlu0 %v2076
        %v2081 = vpop.xlane.xlu0 %2080
        %v2082 = vmul.f32 %v2081, %v1414
        %v2083 = vmul.f32 %v2076, %v2076
        %2084 = vadd.xlane.f32.xlu0 %v2083
        %v2085 = vpop.xlane.xlu0 %2084
        %v2086 = vmul.f32 %v2085, %v1414
        %v2087 = vmul.f32 %v2082, %v2082
        %v2088 = vsub.f32 %v2086, %v2087
        %v2089 = vmax.f32 %v2088, 0.0
        %v2090 = vsub.f32 %v2076, %v2082
        %v2091 = vadd.f32 %v2089, 1e-05
        %v2092 = vrsqrt.pop %v2091
        %v2093 = vmul.f32 %v2092, %v2091
        %v2094 = vmul.f32 %v2093, %v2092
        %v2095 = vmul.f32 0.5, %v2094
        %v2096 = vsub.f32 1.5, %v2095
        %v2097 = vmul.f32 %v2092, %v2096
        %vm2098 = vweird.f32 %v2091
        %vm2099 = vweird.f32 %v2092
        %vm2100 = vmor %vm2098, %vm2099
        %v2101 = vsel %vm2100, %v2092, %v2097
        %v2102 = vmul.f32 %v2090, %v2101
        %v2103 = vmul.f32 %v2102, %v1437
        %v2104 = vadd.f32 %v2103, %v1441
        %v2105 = vadd.f32 %v2079, %v2104
        %v2106 = vtanh.pop %v2105
        %v2107 = vxor.u32 %v2105, 2147483648
        %v2108 = vmul.f32 %v2107, 1.442695
        %v2109 = vpow.pop %v2108
        %v2110 = vadd.f32 %v2109, 1.0
        %v2111 = vrcp.pop %v2110
        %v2112 = vmul.f32 %v2110, %v2111
        %v2113 = vsub.f32 1.0, %v2112
        %v2114 = vmul.f32 %v2111, %v2113
        %v2115 = vadd.f32 %v2111, %v2114
        %vm2116 = vweird.f32 %v2110
        %vm2117 = vweird.f32 %v2111
        %vm2118 = vmor %vm2116, %vm2117
        %v2119 = vsel %vm2118, %v2111, %v2115
        %v2120 = vand.u32 2147483647, %v2110
        %vm2121 = vcmp.eq.f32.partialorder %v2120, 8.507059e+37
        %v2122 = vand.u32 %v2110, 2147483648
        %v2123 = vor.u32 1.1754944e-38, %v2122
        %v2124 = vsel %vm2121, %v2123, %v2119
        %v2125 = vmul.f32 1.0, %v2124
        %v2126 = vsel %vm1377, %v2106, %v2125
        %v2127 = vmul.f32 %v2126, %v2008
        %2129 = vrot.lane.b32.xlu0 %v2126, 64
        %v2130 = vpop.permute.xlu0 %2129
        %v2132 = vmul.f32 %v2126, %v2130
        %2134 = vrot.lane.b32.xlu0 %v2132, 32
        %v2135 = vpop.permute.xlu0 %2134
        %v2137 = vadd.f32 %v2127, %v2135
        %v2138 = vtanh.pop %v2137
        %2140 = vrot.lane.b32.xlu0 %v2138, 96
        %v2141 = vpop.permute.xlu0 %2140
        %v2143 = vsel %vm1381, %v2141, 0.0
        %2144 = vadd.xlane.f32.xlu0 %v2143
        %v2145 = vpop.xlane.xlu0 %2144
        %v2146 = vmul.f32 %v2145, %v1491
        %v2147 = vmul.f32 %v2138, %v2138
        %2149 = vrot.lane.b32.xlu0 %v2147, 96
        %v2150 = vpop.permute.xlu0 %2149
        %v2152 = vsel %vm1381, %v2150, 0.0
        %2153 = vadd.xlane.f32.xlu0 %v2152
        %v2154 = vpop.xlane.xlu0 %2153
        %v2155 = vmul.f32 %v2154, %v1491
        %v2156 = vmul.f32 %v2146, %v2146
        %v2157 = vsub.f32 %v2155, %v2156
        %v2158 = vmax.f32 %v2157, 0.0
        %v2159 = vsub.f32 %v2138, %v2146
        %v2160 = vadd.f32 %v2158, 1e-05
        %v2161 = vrsqrt.pop %v2160
        %v2162 = vmul.f32 %v2161, %v2160
        %v2163 = vmul.f32 %v2162, %v2161
        %v2164 = vmul.f32 0.5, %v2163
        %v2165 = vsub.f32 1.5, %v2164
        %v2166 = vmul.f32 %v2161, %v2165
        %vm2167 = vweird.f32 %v2160
        %vm2168 = vweird.f32 %v2161
        %vm2169 = vmor %vm2167, %vm2168
        %v2170 = vsel %vm2169, %v2161, %v2166
        %v2171 = vmul.f32 %v2159, %v2170
        %v2172 = vmul.f32 %v2171, %v1521
        %v2173 = vadd.f32 %v2172, %v1527
        %2175 = vrot.lane.b32.xlu0 %v2173, 64
        %v2176 = vpop.permute.xlu0 %2175
        %v2178 = vmul.f32 %v2126, %v2176
        %2180 = vrot.lane.b32.xlu0 %v2178, 32
        %v2181 = vpop.permute.xlu0 %2180
        %s2183 = scalar_lea.vmem %s750, 40
        %2184 = vst.msk [vmem:[%s2183] sm:$0xff] %vm1381, %v2181
        %v2185 = vsel %vm1381, %v2181, 0
        %2187 = vmatpush.msra.mxu0 0.0
        %2188 = vmatpush.msra.mxu0 0.0
        %2189 = vmatpush.msra.mxu0 0.0
        %2190 = vmatpush.msra.mxu0 0.0
        %2191 = vmatpush.msra.mxu0 0.0
        %2192 = vmatpush.msra.mxu0 0.0
        %2193 = vmatpush.msra.mxu0 0.0
        %2194 = vmatpush.msra.mxu0 0.0
        %2195 = vmatpush.msra.mxu0 0.0
        %2196 = vmatpush.msra.mxu0 0.0
        %2197 = vmatpush.msra.mxu0 0.0
        %2198 = vmatpush.msra.mxu0 0.0
        %2199 = vmatpush.msra.mxu0 %v1367
        %2200 = vmatpush.msra.mxu0 %v1366
        %2201 = vmatpush.msra.mxu0 %v1365
        %2202 = vmatpush.msra.mxu0 %v1364
        %2203 = vmatmul.f32.gmra.mxu0 %v2185
        %v2204 = vpop.f32.mrf.mxu0
        %v2205 = vadd.f32 %v1379, %v2204
        %2206 = vdwg.mxu0
        %s2207 = scalar_lea.vmem [#allocation2], 48
        %v2208 = vld [vmem:[%s2207] sm:$0xff]
        %2209 = vadd.xlane.f32.xlu0 %v2205
        %v2210 = vpop.xlane.xlu0 %2209
        %v2211 = vmul.f32 %v2210, %v1414
        %v2212 = vmul.f32 %v2205, %v2205
        %2213 = vadd.xlane.f32.xlu0 %v2212
        %v2214 = vpop.xlane.xlu0 %2213
        %v2215 = vmul.f32 %v2214, %v1414
        %v2216 = vmul.f32 %v2211, %v2211
        %v2217 = vsub.f32 %v2215, %v2216
        %v2218 = vmax.f32 %v2217, 0.0
        %v2219 = vsub.f32 %v2205, %v2211
        %v2220 = vadd.f32 %v2218, 1e-05
        %v2221 = vrsqrt.pop %v2220
        %v2222 = vmul.f32 %v2221, %v2220
        %v2223 = vmul.f32 %v2222, %v2221
        %v2224 = vmul.f32 0.5, %v2223
        %v2225 = vsub.f32 1.5, %v2224
        %v2226 = vmul.f32 %v2221, %v2225
        %vm2227 = vweird.f32 %v2220
        %vm2228 = vweird.f32 %v2221
        %vm2229 = vmor %vm2227, %vm2228
        %v2230 = vsel %vm2229, %v2221, %v2226
        %v2231 = vmul.f32 %v2219, %v2230
        %v2232 = vmul.f32 %v2231, %v1437
        %v2233 = vadd.f32 %v2232, %v1441
        %v2234 = vadd.f32 %v2208, %v2233
        %v2235 = vtanh.pop %v2234
        %v2236 = vxor.u32 %v2234, 2147483648
        %v2237 = vmul.f32 %v2236, 1.442695
        %v2238 = vpow.pop %v2237
        %v2239 = vadd.f32 %v2238, 1.0
        %v2240 = vrcp.pop %v2239
        %v2241 = vmul.f32 %v2239, %v2240
        %v2242 = vsub.f32 1.0, %v2241
        %v2243 = vmul.f32 %v2240, %v2242
        %v2244 = vadd.f32 %v2240, %v2243
        %vm2245 = vweird.f32 %v2239
        %vm2246 = vweird.f32 %v2240
        %vm2247 = vmor %vm2245, %vm2246
        %v2248 = vsel %vm2247, %v2240, %v2244
        %v2249 = vand.u32 2147483647, %v2239
        %vm2250 = vcmp.eq.f32.partialorder %v2249, 8.507059e+37
        %v2251 = vand.u32 %v2239, 2147483648
        %v2252 = vor.u32 1.1754944e-38, %v2251
        %v2253 = vsel %vm2250, %v2252, %v2248
        %v2254 = vmul.f32 1.0, %v2253
        %v2255 = vsel %vm1377, %v2235, %v2254
        %v2256 = vmul.f32 %v2255, %v2137
        %2258 = vrot.lane.b32.xlu0 %v2255, 64
        %v2259 = vpop.permute.xlu0 %2258
        %v2261 = vmul.f32 %v2255, %v2259
        %2263 = vrot.lane.b32.xlu0 %v2261, 32
        %v2264 = vpop.permute.xlu0 %2263
        %v2266 = vadd.f32 %v2256, %v2264
        %v2267 = vtanh.pop %v2266
        %2269 = vrot.lane.b32.xlu0 %v2267, 96
        %v2270 = vpop.permute.xlu0 %2269
        %v2272 = vsel %vm1381, %v2270, 0.0
        %2273 = vadd.xlane.f32.xlu0 %v2272
        %v2274 = vpop.xlane.xlu0 %2273
        %v2275 = vmul.f32 %v2274, %v1491
        %v2276 = vmul.f32 %v2267, %v2267
        %2278 = vrot.lane.b32.xlu0 %v2276, 96
        %v2279 = vpop.permute.xlu0 %2278
        %v2281 = vsel %vm1381, %v2279, 0.0
        %2282 = vadd.xlane.f32.xlu0 %v2281
        %v2283 = vpop.xlane.xlu0 %2282
        %v2284 = vmul.f32 %v2283, %v1491
        %v2285 = vmul.f32 %v2275, %v2275
        %v2286 = vsub.f32 %v2284, %v2285
        %v2287 = vmax.f32 %v2286, 0.0
        %v2288 = vsub.f32 %v2267, %v2275
        %v2289 = vadd.f32 %v2287, 1e-05
        %v2290 = vrsqrt.pop %v2289
        %v2291 = vmul.f32 %v2290, %v2289
        %v2292 = vmul.f32 %v2291, %v2290
        %v2293 = vmul.f32 0.5, %v2292
        %v2294 = vsub.f32 1.5, %v2293
        %v2295 = vmul.f32 %v2290, %v2294
        %vm2296 = vweird.f32 %v2289
        %vm2297 = vweird.f32 %v2290
        %vm2298 = vmor %vm2296, %vm2297
        %v2299 = vsel %vm2298, %v2290, %v2295
        %v2300 = vmul.f32 %v2288, %v2299
        %v2301 = vmul.f32 %v2300, %v1521
        %v2302 = vadd.f32 %v2301, %v1527
        %2304 = vrot.lane.b32.xlu0 %v2302, 64
        %v2305 = vpop.permute.xlu0 %2304
        %v2307 = vmul.f32 %v2255, %v2305
        %2309 = vrot.lane.b32.xlu0 %v2307, 32
        %v2310 = vpop.permute.xlu0 %2309
        %s2312 = scalar_lea.vmem %s750, 48
        %2313 = vst.msk [vmem:[%s2312] sm:$0xff] %vm1381, %v2310
        %v2314 = vsel %vm1381, %v2310, 0
        %2316 = vmatpush.msra.mxu0 0.0
        %2317 = vmatpush.msra.mxu0 0.0
        %2318 = vmatpush.msra.mxu0 0.0
        %2319 = vmatpush.msra.mxu0 0.0
        %2320 = vmatpush.msra.mxu0 0.0
        %2321 = vmatpush.msra.mxu0 0.0
        %2322 = vmatpush.msra.mxu0 0.0
        %2323 = vmatpush.msra.mxu0 0.0
        %2324 = vmatpush.msra.mxu0 0.0
        %2325 = vmatpush.msra.mxu0 0.0
        %2326 = vmatpush.msra.mxu0 0.0
        %2327 = vmatpush.msra.mxu0 0.0
        %2328 = vmatpush.msra.mxu0 %v1367
        %2329 = vmatpush.msra.mxu0 %v1366
        %2330 = vmatpush.msra.mxu0 %v1365
        %2331 = vmatpush.msra.mxu0 %v1364
        %2332 = vmatmul.f32.gmra.mxu0 %v2314
        %v2333 = vpop.f32.mrf.mxu0
        %v2334 = vadd.f32 %v1379, %v2333
        %2335 = vdwg.mxu0
        %s2336 = scalar_lea.vmem [#allocation2], 56
        %v2337 = vld [vmem:[%s2336] sm:$0xff]
        %2338 = vadd.xlane.f32.xlu0 %v2334
        %v2339 = vpop.xlane.xlu0 %2338
        %v2340 = vmul.f32 %v2339, %v1414
        %v2341 = vmul.f32 %v2334, %v2334
        %2342 = vadd.xlane.f32.xlu0 %v2341
        %v2343 = vpop.xlane.xlu0 %2342
        %v2344 = vmul.f32 %v2343, %v1414
        %v2345 = vmul.f32 %v2340, %v2340
        %v2346 = vsub.f32 %v2344, %v2345
        %v2347 = vmax.f32 %v2346, 0.0
        %v2348 = vsub.f32 %v2334, %v2340
        %v2349 = vadd.f32 %v2347, 1e-05
        %v2350 = vrsqrt.pop %v2349
        %v2351 = vmul.f32 %v2350, %v2349
        %v2352 = vmul.f32 %v2351, %v2350
        %v2353 = vmul.f32 0.5, %v2352
        %v2354 = vsub.f32 1.5, %v2353
        %v2355 = vmul.f32 %v2350, %v2354
        %vm2356 = vweird.f32 %v2349
        %vm2357 = vweird.f32 %v2350
        %vm2358 = vmor %vm2356, %vm2357
        %v2359 = vsel %vm2358, %v2350, %v2355
        %v2360 = vmul.f32 %v2348, %v2359
        %v2361 = vmul.f32 %v2360, %v1437
        %v2362 = vadd.f32 %v2361, %v1441
        %v2363 = vadd.f32 %v2337, %v2362
        %v2364 = vtanh.pop %v2363
        %v2365 = vxor.u32 %v2363, 2147483648
        %v2366 = vmul.f32 %v2365, 1.442695
        %v2367 = vpow.pop %v2366
        %v2368 = vadd.f32 %v2367, 1.0
        %v2369 = vrcp.pop %v2368
        %v2370 = vmul.f32 %v2368, %v2369
        %v2371 = vsub.f32 1.0, %v2370
        %v2372 = vmul.f32 %v2369, %v2371
        %v2373 = vadd.f32 %v2369, %v2372
        %vm2374 = vweird.f32 %v2368
        %vm2375 = vweird.f32 %v2369
        %vm2376 = vmor %vm2374, %vm2375
        %v2377 = vsel %vm2376, %v2369, %v2373
        %v2378 = vand.u32 2147483647, %v2368
        %vm2379 = vcmp.eq.f32.partialorder %v2378, 8.507059e+37
        %v2380 = vand.u32 %v2368, 2147483648
        %v2381 = vor.u32 1.1754944e-38, %v2380
        %v2382 = vsel %vm2379, %v2381, %v2377
        %v2383 = vmul.f32 1.0, %v2382
        %v2384 = vsel %vm1377, %v2364, %v2383
        %v2385 = vmul.f32 %v2384, %v2266
        %2387 = vrot.lane.b32.xlu0 %v2384, 64
        %v2388 = vpop.permute.xlu0 %2387
        %v2390 = vmul.f32 %v2384, %v2388
        %2392 = vrot.lane.b32.xlu0 %v2390, 32
        %v2393 = vpop.permute.xlu0 %2392
        %v2395 = vadd.f32 %v2385, %v2393
        %v2396 = vtanh.pop %v2395
        %2398 = vrot.lane.b32.xlu0 %v2396, 96
        %v2399 = vpop.permute.xlu0 %2398
        %v2401 = vsel %vm1381, %v2399, 0.0
        %2402 = vadd.xlane.f32.xlu0 %v2401
        %v2403 = vpop.xlane.xlu0 %2402
        %v2404 = vmul.f32 %v2403, %v1491
        %v2405 = vmul.f32 %v2396, %v2396
        %2407 = vrot.lane.b32.xlu0 %v2405, 96
        %v2408 = vpop.permute.xlu0 %2407
        %v2410 = vsel %vm1381, %v2408, 0.0
        %2411 = vadd.xlane.f32.xlu0 %v2410
        %v2412 = vpop.xlane.xlu0 %2411
        %v2413 = vmul.f32 %v2412, %v1491
        %v2414 = vmul.f32 %v2404, %v2404
        %v2415 = vsub.f32 %v2413, %v2414
        %v2416 = vmax.f32 %v2415, 0.0
        %v2417 = vsub.f32 %v2396, %v2404
        %v2418 = vadd.f32 %v2416, 1e-05
        %v2419 = vrsqrt.pop %v2418
        %v2420 = vmul.f32 %v2419, %v2418
        %v2421 = vmul.f32 %v2420, %v2419
        %v2422 = vmul.f32 0.5, %v2421
        %v2423 = vsub.f32 1.5, %v2422
        %v2424 = vmul.f32 %v2419, %v2423
        %vm2425 = vweird.f32 %v2418
        %vm2426 = vweird.f32 %v2419
        %vm2427 = vmor %vm2425, %vm2426
        %v2428 = vsel %vm2427, %v2419, %v2424
        %v2429 = vmul.f32 %v2417, %v2428
        %v2430 = vmul.f32 %v2429, %v1521
        %v2431 = vadd.f32 %v2430, %v1527
        %2433 = vrot.lane.b32.xlu0 %v2431, 64
        %v2434 = vpop.permute.xlu0 %2433
        %v2436 = vmul.f32 %v2384, %v2434
        %2438 = vrot.lane.b32.xlu0 %v2436, 32
        %v2439 = vpop.permute.xlu0 %2438
        %s2441 = scalar_lea.vmem %s750, 56
        %2442 = vst.msk [vmem:[%s2441] sm:$0xff] %vm1381, %v2439
        %2443 = vst.msk [vmem:[%s710] sm:$0xff] %vm1381, %v2439
        %2445 = vrot.lane.b32.xlu0 %v2395, 96
        %v2446 = vpop.permute.xlu0 %2445
        %2448 = vst.msk [vmem:[%s717] sm:$0xff] %vm1381, %v2446
        %p2449 = scmp.lt.s32.totalorder %s45, 0
        %s2450 = scalar_select %p2449, %s45, 0
        %s2451 = smul.addr %s2450, 8
        %s2452 = smul.addr %s2451, 8
        %s2453 = scalar_lea.vmem %s12, %s2452
        %s2454 = sand.u32 %s402, 1
        %s2455 = scalar_lea.sflag [#allocation5], %s2454
        %s2456 = sand.u32 %s402, 1
        %s2457 = smul.addr %s2456, 8
        %s2458 = scalar_lea.vmem [#allocation11], %s2457
        %s2459 = sand.u32 %s430, 1
        %s2460 = scalar_lea.sflag [#allocation13], %s2459
        %s2461 = sand.u32 %s430, 1
        %s2462 = smul.addr %s2461, 8
        %s2463 = scalar_lea.vmem [#allocation12], %s2462
        // Predicated region
        $region93: #{tpu_custom_call.1} parent=67 // pred_check
          %p2464 = pneg %p384
        $region94: #{tpu_custom_call.1} parent=67 // pred_check_branch
          %2466 = sbr.rel (%p2464) target = $region96
        $region95: #{tpu_custom_call.1} parent=67 // pred_region
          _
        $region96: #{tpu_custom_call.1} parent=67 // pred_fallthru
          _
        // Predicated region
        $region97: #{tpu_custom_call.1} parent=67 // pred_check
          %p2467 = pneg %p412
        $region98: #{tpu_custom_call.1} parent=67 // pred_check_branch
          %2469 = sbr.rel (%p2467) target = $region100
        $region99: #{tpu_custom_call.1} parent=67 // pred_region
          %2471 = vsyncadd %s2455, 0
          %s2472 = sadd.s32 %s45, %s46
          %s2473 = smul.addr %s2472, 8
          %s2474 = scalar_lea.hbm %s13, %s2473
          %s2476 = sshll.u32 %s2458, 4
          %s2477 = int_to_ptr.vmem [resolvable:$true] %s2476
          %s2478 = sshll.u32 %s2474, 4
          %s2479 = int_to_ptr.hbm [resolvable:$true] %s2478
          %2481 = dma.vmem_to_hbm [thread:$0]  %s2477, 128, %s2479, %s2455
        $region100: #{tpu_custom_call.1} parent=67 // pred_fallthru
          _
        // Predicated region
        $region101: #{tpu_custom_call.1} parent=67 // pred_check
          %p2482 = pneg %p440
        $region102: #{tpu_custom_call.1} parent=67 // pred_check_branch
          %2484 = sbr.rel (%p2482) target = $region104
        $region103: #{tpu_custom_call.1} parent=67 // pred_region
          %2486 = vsyncadd %s2460, 0
          %s2487 = sadd.s32 %s45, %s46
          %s2488 = smul.addr %s2487, 8
          %s2489 = scalar_lea.hbm %s14, %s2488
          %s2491 = sshll.u32 %s2463, 4
          %s2492 = int_to_ptr.vmem [resolvable:$true] %s2491
          %s2493 = sshll.u32 %s2489, 4
          %s2494 = int_to_ptr.hbm [resolvable:$true] %s2493
          %2496 = dma.vmem_to_hbm [thread:$0]  %s2492, 128, %s2494, %s2460
        $region104: #{tpu_custom_call.1} parent=67 // pred_fallthru
          _
        // Predicated region
        $region105: #{tpu_custom_call.1} parent=67 // pred_check
          %p2497 = pneg %p384
        $region106: #{tpu_custom_call.1} parent=67 // pred_check_branch
          %2499 = sbr.rel (%p2497) target = $region108
        $region107: #{tpu_custom_call.1} parent=67 // pred_region
          %p2500 = scmp.lt.s32.totalorder %s45, 0
          %s2501 = scalar_select %p2500, %s45, 0
          %s2502 = smul.addr %s2501, 8
          %s2503 = smul.addr %s2502, 8
          %s2504 = scalar_lea.vmem %s12, %s2503
        $region108: #{tpu_custom_call.1} parent=67 // pred_fallthru
          _
      $region68: #{tpu_custom_call.1} parent=5 // pred_fallthru
        _
      %p2505 = scmp.le.s32.totalorder 2, %s36
      // Predicated region
      $region109: #{tpu_custom_call.1} parent=5 // pred_check
        %p2506 = pneg %p2505
      $region110: #{tpu_custom_call.1} parent=5 // pred_check_branch
        %2508 = sbr.rel (%p2506) target = $region112
      $region111: #{tpu_custom_call.1} parent=5 // pred_region
        %s2509 = ssub.s32 %s36, 2
        // Predicated region
        $region113: #{tpu_custom_call.1} parent=111 // pred_check
          %p2510 = pneg %p418
        $region114: #{tpu_custom_call.1} parent=111 // pred_check_branch
          %2512 = sbr.rel (%p2510) target = $region116
        $region115: #{tpu_custom_call.1} parent=111 // pred_region
          %s2513 = sand.u32 %s403, 1
          %s2514 = scalar_lea.sflag [#allocation5], %s2513
          %s2515 = sand.u32 %s403, 1
          %s2516 = smul.addr %s2515, 8
          %s2517 = scalar_lea.vmem [#allocation11], %s2516
          %2519 = dma.done %s2514, 128
        $region116: #{tpu_custom_call.1} parent=111 // pred_fallthru
          _
        // Predicated region
        $region117: #{tpu_custom_call.1} parent=111 // pred_check
          %p2520 = pneg %p446
        $region118: #{tpu_custom_call.1} parent=111 // pred_check_branch
          %2522 = sbr.rel (%p2520) target = $region120
        $region119: #{tpu_custom_call.1} parent=111 // pred_region
          %s2523 = sand.u32 %s431, 1
          %s2524 = scalar_lea.sflag [#allocation13], %s2523
          %s2525 = sand.u32 %s431, 1
          %s2526 = smul.addr %s2525, 8
          %s2527 = scalar_lea.vmem [#allocation12], %s2526
          %2529 = dma.done %s2524, 128
        $region120: #{tpu_custom_call.1} parent=111 // pred_fallthru
          _
      $region112: #{tpu_custom_call.1} parent=5 // pred_fallthru
        _
    $region6: #{tpu_custom_call.1} parent=1 // loop_footer
      %s40 = sadd.s32 1, %s36
    $region7: #{tpu_custom_call.1} parent=1 // loop_footer_branch
      %35 = sbr.rel target = $region3
    $region8: #{tpu_custom_call.1} parent=1 // loop_exit
      _
    %2530 = vsyncpa [#allocation4], 1
    %s2531 = scalar_lea.sflag [#allocation4], 1
    %2532 = vsyncpa %s2531, 1
    %2533 = vsyncpa [#allocation7], 1
    %s2534 = scalar_lea.sflag [#allocation7], 1
    %2535 = vsyncpa %s2534, 1
    %2536 = vsyncpa [#allocation10], 1
    %s2537 = scalar_lea.sflag [#allocation10], 1
    %2538 = vsyncpa %s2537, 1
    %2539 = vsyncpa [#allocation5], 1
    %s2540 = scalar_lea.sflag [#allocation5], 1
    %2541 = vsyncpa %s2540, 1
    %2542 = vsyncpa [#allocation13], 1
    %s2543 = scalar_lea.sflag [#allocation13], 1
    %2544 = vsyncpa %s2543, 1

</llo_original>
